<compile_context>
chip_gen: v7x
topology: tpu7x:2x2x1
jax: 0.10.0
libtpu: 0.0.40
codegen_flags: <defaults>
</compile_context>

<pallas_src>
import functools

import jax
import jax.numpy as jnp
from jax import lax
from jax.experimental import pallas as pl
from jax.experimental.pallas import tpu as pltpu

LANE = 128
SUBLANE = 8


def _round_up(x, m):
    return (x + m - 1) // m * m


def _onehot_bf16(cmp):
    # exact 0/1 one-hot as a bf16 MXU operand
    return jnp.where(cmp, 1.0, 0.0).astype(jnp.bfloat16)


# ------------------------ fully fused GCNNet kernel --------------------------

def _gcnnet_kernel(h0_ref, src_ref, dst_ref, bcol_ref, brow_ref,
                   nodew_ref, bns_ref, bnb_ref, enorm_ref, snorm_ref,
                   wg_ref, bg_ref, wm_ref, bm_ref,
                   eemb_ref, eps_ref,
                   w1_ref, b1_ref, w2_ref, b2_ref,
                   vw1_ref, vb1_ref, vw2_ref, vb2_ref,
                   o_ref,
                   h_scr, vn_scr, srcoh_scr, adj_scr, ngoh_scr, pooloh_scr,
                   *, num_layers, NP, EP, GP):
    l = pl.program_id(0)
    bf16 = jnp.bfloat16
    f32 = jnp.float32

    @pl.when(l == 0)
    def _():
        h_scr[...] = h0_ref[...]
        vn_scr[...] = jnp.zeros_like(vn_scr)   # virtualnode embedding init to 0
        # Layer-invariant scatter/gather one-hots: built once, cached in VMEM.
        srcoh_scr[...] = _onehot_bf16(
            src_ref[...] == lax.broadcasted_iota(jnp.int32, (EP, NP), 1))
        adj_scr[...] = _onehot_bf16(
            lax.broadcasted_iota(jnp.int32, (NP, EP), 0) == dst_ref[...])
        ngoh_scr[...] = _onehot_bf16(
            bcol_ref[...] == lax.broadcasted_iota(jnp.int32, (NP, GP), 1))
        pooloh_scr[...] = _onehot_bf16(
            lax.broadcasted_iota(jnp.int32, (GP, NP), 0) == brow_ref[...])

    # h += virtualnode_embedding[batch]  (tiny (NP,GP)@(GP,DP) one-hot matmul)
    h = h_scr[...] + jnp.dot(ngoh_scr[...], vn_scr[...].astype(bf16),
                             preferred_element_type=f32)
    h_bf = h.astype(bf16)   # hoisted: reused by edge gather and vn pooling

    # GIN aggregate: agg[i] = sum_{e: dst(e)==i} relu(h[src(e)] + edge_emb[e])
    x_src = jnp.dot(srcoh_scr[...], h_bf, preferred_element_type=f32)
    msg = jnp.maximum(x_src + eemb_ref[...].astype(f32), 0.0)
    agg = jnp.dot(adj_scr[...], msg.astype(bf16), preferred_element_type=f32)

    combined = (1.0 + eps_ref[...]) * h + agg

    # conv MLP: Linear -> BN(folded) -> ReLU -> Linear -> outer BN(folded)
    t = jnp.maximum(
        jnp.dot(combined.astype(bf16), w1_ref[...],
                preferred_element_type=f32) + b1_ref[...], 0.0)
    h_new = jnp.dot(t.astype(bf16), w2_ref[...],
                    preferred_element_type=f32) + b2_ref[...]

    @pl.when(l < num_layers - 1)
    def _():
        # virtual-node update uses the pre-conv (post-vn-add) node features
        pooled = jnp.dot(pooloh_scr[...], h_bf, preferred_element_type=f32)
        vn_tmp = pooled + vn_scr[...]
        u = jnp.maximum(
            jnp.dot(vn_tmp.astype(bf16), vw1_ref[...],
                    preferred_element_type=f32) + vb1_ref[...], 0.0)
        vn_scr[...] = jnp.maximum(
            jnp.dot(u.astype(bf16), vw2_ref[...],
                    preferred_element_type=f32) + vb2_ref[...], 0.0)
        # ReLU (+ identity dropout) on the conv output except at the last layer
        h_scr[...] = jnp.maximum(h_new, 0.0)

    @pl.when(l == num_layers - 1)
    def _():
        # ---------------- fused GCN head ----------------
        # xo = node_weight * node_embedding ; eval BatchNorm1d (bno)
        x = h_new * nodew_ref[...]
        x = x * bns_ref[...] + bnb_ref[...]
        # GCNConv: x @ W, symmetric-normalized aggregation (+ self loops) + bias
        xw = jnp.dot(x.astype(bf16), wg_ref[...], preferred_element_type=f32)
        msg_h = jnp.dot(srcoh_scr[...], xw.astype(bf16),
                        preferred_element_type=f32) * enorm_ref[...]
        agg_h = jnp.dot(adj_scr[...], msg_h.astype(bf16),
                        preferred_element_type=f32)
        xo = jnp.maximum(agg_h + snorm_ref[...] * xw + bg_ref[...], 0.0)
        # global_add_pool -> head MLP: Linear -> BN(folded) -> ReLU (dropout=id)
        pooled_h = jnp.dot(pooloh_scr[...], xo.astype(bf16),
                           preferred_element_type=f32)
        o_ref[...] = jnp.maximum(
            jnp.dot(pooled_h.astype(bf16), wm_ref[...],
                    preferred_element_type=f32) + bm_ref[...], 0.0)


def gcnnet_fused(h0, src_col, dst_row, batch_col, batch_row,
                 nodew_col, bns, bnb, enorm_col, snorm_col,
                 wg, bg, wm, bm,
                 eemb, eps, cw1, cb1, cw2, cb2, vw1, vb1, vw2, vb2,
                 *, num_layers, NP, EP, GP, DP, HP, OP):
    const = lambda shape: pl.BlockSpec(shape, lambda l: (0,) * len(shape))
    per_layer = lambda shape: pl.BlockSpec(
        (None,) + shape, lambda l: (l,) + (0,) * len(shape))

    grid_spec = pltpu.PrefetchScalarGridSpec(
        num_scalar_prefetch=0,
        grid=(num_layers,),
        in_specs=[
            const((NP, DP)),        # h0 (atom-encoded node features)
            const((EP, 1)),         # edge src ids (column)
            const((1, EP)),         # edge dst ids (row)
            const((NP, 1)),         # batch ids (column)
            const((1, NP)),         # batch ids (row)
            const((NP, 1)),         # node_weight_o
            const((1, DP)),         # bno scale (eval BN)
            const((1, DP)),         # bno bias
            const((EP, 1)),         # GCN edge norm
            const((NP, 1)),         # GCN self-loop norm
            const((DP, DP)),        # GCN weight (bf16)
            const((1, DP)),         # GCN bias
            const((DP, OP)),        # head MLP weight (bf16, BN folded)
            const((1, OP)),         # head MLP bias
            per_layer((EP, DP)),    # per-layer bond embeddings (bf16)
            per_layer((1, DP)),     # eps (lane-replicated)
            per_layer((DP, HP)),    # conv w1 (bf16)
            per_layer((1, HP)),     # conv b1 (BN folded)
            per_layer((HP, DP)),    # conv w2 (bf16)
            per_layer((1, DP)),     # conv b2 (outer BN folded)
            per_layer((DP, HP)),    # vn w1 (bf16)
            per_layer((1, HP)),     # vn b1
            per_layer((HP, DP)),    # vn w2 (bf16)
            per_layer((1, DP)),     # vn b2
        ],
        out_specs=pl.BlockSpec((GP, OP), lambda l: (0, 0)),
        scratch_shapes=[
            pltpu.VMEM((NP, DP), jnp.float32),     # h (resident across layers)
            pltpu.VMEM((GP, DP), jnp.float32),     # virtual-node state
            pltpu.VMEM((EP, NP), jnp.bfloat16),    # cached src one-hot
            pltpu.VMEM((NP, EP), jnp.bfloat16),    # cached dst (adj) one-hot
            pltpu.VMEM((NP, GP), jnp.bfloat16),    # cached node->graph one-hot
            pltpu.VMEM((GP, NP), jnp.bfloat16),    # cached graph-pool one-hot
        ],
    )
    kernel = functools.partial(_gcnnet_kernel, num_layers=num_layers,
                               NP=NP, EP=EP, GP=GP)
    return pl.pallas_call(
        kernel,
        out_shape=jax.ShapeDtypeStruct((GP, OP), jnp.float32),
        grid_spec=grid_spec,
        compiler_params=pltpu.CompilerParams(
            dimension_semantics=("arbitrary",),    # layers are sequential
            vmem_limit_bytes=32 * 1024 * 1024),
    )(h0, src_col, dst_row, batch_col, batch_row,
      nodew_col, bns, bnb, enorm_col, snorm_col,
      wg, bg, wm, bm,
      eemb, eps, cw1, cb1, cw2, cb2, vw1, vb1, vw2, vb2)


# --------------------------- parameter construction --------------------------

def init_params(key, num_layers, emb_dim, atom_vocabs, bond_vocabs,
                *, DP=LANE, HP=LANE, OP=LANE):
    D, H, O2 = emb_dim, 2 * emb_dim, 2 * emb_dim
    s_bn = (1.0 + 1e-5) ** -0.5   # eval BN: running_mean=0, running_var=1
    b_bn = 1e-4                   # GCNNet.__init__ sets every BN bias to 0.0001

    keys = iter(jax.random.split(key, 128))

    def dense(fan_in, fan_out):
        w = 0.1 * jax.random.normal(next(keys), (fan_in, fan_out), jnp.float32)
        b = 0.05 * jax.random.normal(next(keys), (fan_out,), jnp.float32)
        return w, b

    def pad_linear(w, b, rows, cols):
        wp = jnp.zeros((rows, cols), jnp.float32).at[:w.shape[0], :w.shape[1]].set(w)
        bp = jnp.zeros((1, cols), jnp.float32).at[0, :b.shape[0]].set(b)
        return wp.astype(jnp.bfloat16), bp

    def fold_bn_pad(w, b, rows, cols):
        # Linear followed by eval-mode BatchNorm1d -> fold BN into the Linear.
        return pad_linear(w * s_bn, b * s_bn + b_bn, rows, cols)

    params = {"atom_tables": [], "bond_tables": []}
    for v in atom_vocabs:
        params["atom_tables"].append(
            0.1 * jax.random.normal(next(keys), (v, D), jnp.float32))
    for _ in range(num_layers):
        params["bond_tables"].append(
            [0.1 * jax.random.normal(next(keys), (v, D), jnp.float32)
             for v in bond_vocabs])

    cw1, cb1, cw2, cb2 = [], [], [], []
    for _ in range(num_layers):
        w1, b1 = dense(D, H)
        w2, b2 = dense(H, D)
        w1p, b1p = fold_bn_pad(w1, b1, DP, HP)   # conv.mlp inner BN(2D)
        w2p, b2p = fold_bn_pad(w2, b2, HP, DP)   # outer batch_norms[layer] BN(D)
        cw1.append(w1p); cb1.append(b1p); cw2.append(w2p); cb2.append(b2p)
    params["conv_w1"] = jnp.stack(cw1); params["conv_b1"] = jnp.stack(cb1)
    params["conv_w2"] = jnp.stack(cw2); params["conv_b2"] = jnp.stack(cb2)

    vw1, vb1, vw2, vb2 = [], [], [], []
    for layer in range(num_layers):
        if layer < num_layers - 1:
            w1, b1 = dense(D, H)
            w2, b2 = dense(H, D)
            w1p, b1p = fold_bn_pad(w1, b1, DP, HP)   # vn MLP BN(2D)
            w2p, b2p = fold_bn_pad(w2, b2, HP, DP)   # vn MLP BN(D)
        else:   # dummy slot (never used: kernel skips vn update at last layer)
            w1p = jnp.zeros((DP, HP), jnp.bfloat16)
            b1p = jnp.zeros((1, HP), jnp.float32)
            w2p = jnp.zeros((HP, DP), jnp.bfloat16)
            b2p = jnp.zeros((1, DP), jnp.float32)
        vw1.append(w1p); vb1.append(b1p); vw2.append(w2p); vb2.append(b2p)
    params["vn_w1"] = jnp.stack(vw1); params["vn_b1"] = jnp.stack(vb1)
    params["vn_w2"] = jnp.stack(vw2); params["vn_b2"] = jnp.stack(vb2)

    params["eps"] = jnp.zeros((num_layers, 1, DP), jnp.float32)  # GIN eps init 0

    # GCN head: bno (eval BN, per channel), GCNConv weight/bias, head MLP
    params["bno_scale"] = jnp.zeros((1, DP), jnp.float32).at[0, :D].set(s_bn)
    params["bno_bias"] = jnp.zeros((1, DP), jnp.float32).at[0, :D].set(b_bn)
    wg, bg = dense(D, D)
    params["gcn_w"], params["gcn_b"] = pad_linear(wg, bg, DP, DP)
    wm, bm = dense(D, O2)
    params["mlp_w"], params["mlp_b"] = fold_bn_pad(wm, bm, DP, OP)  # BN(2*hidden)

    params["dims"] = dict(L=num_layers, D=D, DP=DP, HP=HP, OP=OP, O2=O2)
    return params


# ---------------------------------- forward ----------------------------------

def gcnnet_forward(params, x_cat, edge_index, edge_attr, batch,
                   edge_weight_o, node_weight_o, num_graphs):
    dims = params["dims"]
    L, D, DP, HP, OP, O2 = (dims["L"], dims["D"], dims["DP"], dims["HP"],
                            dims["OP"], dims["O2"])
    N = x_cat.shape[0]
    E = edge_index.shape[1]
    NP = _round_up(N, LANE)
    EP = _round_up(E, LANE)
    GP = _round_up(num_graphs, SUBLANE)   # graphs only need sublane alignment

    # ---- XLA glue: AtomEncoder / per-layer BondEncoder embedding sums ----
    h0 = jnp.zeros((N, D), jnp.float32)
    for i, tab in enumerate(params["atom_tables"]):
        h0 = h0 + jnp.take(tab, x_cat[:, i], axis=0)
    h0p = jnp.zeros((NP, DP), jnp.float32).at[:N, :D].set(h0)

    eemb = []
    for layer in range(L):
        e = jnp.zeros((E, D), jnp.float32)
        for i, tab in enumerate(params["bond_tables"][layer]):
            e = e + jnp.take(tab, edge_attr[:, i], axis=0)
        eemb.append(jnp.zeros((EP, DP), jnp.float32).at[:E, :D].set(e))
    eemb = jnp.stack(eemb).astype(jnp.bfloat16)   # (L, EP, DP) streamed in bf16

    # ---- index vectors (padded slots -> -1 so they match nothing) ----
    src = edge_index[0].astype(jnp.int32)
    dst = edge_index[1].astype(jnp.int32)
    bat = batch.astype(jnp.int32)
    src_col = jnp.full((EP, 1), -1, jnp.int32).at[:E, 0].set(src)
    dst_row = jnp.full((1, EP), -1, jnp.int32).at[0, :E].set(dst)
    batch_col = jnp.full((NP, 1), -1, jnp.int32).at[:N, 0].set(bat)
    batch_row = jnp.full((1, NP), -1, jnp.int32).at[0, :N].set(bat)

    # ---- GCN head glue: symmetric normalization with self loops (fill=1) ----
    # (matches the gfn-style GCNConv.norm: deg scattered by the row/src index)
    ew = edge_weight_o.astype(jnp.float32)
    deg = jax.ops.segment_sum(ew, src, num_segments=N) + 1.0
    dinv = lax.rsqrt(deg)
    enorm = dinv[src] * ew * dinv[dst]
    enorm_col = jnp.zeros((EP, 1), jnp.float32).at[:E, 0].set(enorm)
    snorm_col = jnp.zeros((NP, 1), jnp.float32).at[:N, 0].set(dinv * dinv)
    nodew_col = jnp.zeros((NP, 1), jnp.float32).at[:N, 0].set(
        node_weight_o.astype(jnp.float32))

    # ---- single fused pallas_call: GIN-virtual-node backbone + GCN head ----
    out = gcnnet_fused(
        h0p, src_col, dst_row, batch_col, batch_row,
        nodew_col, params["bno_scale"], params["bno_bias"],
        enorm_col, snorm_col,
        params["gcn_w"], params["gcn_b"], params["mlp_w"], params["mlp_b"],
        eemb, params["eps"],
        params["conv_w1"], params["conv_b1"], params["conv_w2"], params["conv_b2"],
        params["vn_w1"], params["vn_b1"], params["vn_w2"], params["vn_b2"],
        num_layers=L, NP=NP, EP=EP, GP=GP, DP=DP, HP=HP, OP=OP)

    return out[:num_graphs, :O2]                # [num_graphs, 2*hidden]


# ----------------------------------- main ------------------------------------

if __name__ == "__main__":
    num_layers = 3
    emb_dim = 32            # hidden
    num_nodes = 24
    num_edges = 48
    num_graphs = 2
    atom_vocabs = [10, 7]
    bond_vocabs = [5, 4]

    key = jax.random.PRNGKey(0)
    k_par, k_x, k_ea, k_src, k_dst, k_ew, k_nw = jax.random.split(key, 7)

    params = init_params(k_par, num_layers, emb_dim, atom_vocabs, bond_vocabs)

    x_cat = jnp.stack(
        [jax.random.randint(jax.random.fold_in(k_x, i), (num_nodes,), 0, v)
         for i, v in enumerate(atom_vocabs)], axis=1).astype(jnp.int32)
    edge_attr = jnp.stack(
        [jax.random.randint(jax.random.fold_in(k_ea, i), (num_edges,), 0, v)
         for i, v in enumerate(bond_vocabs)], axis=1).astype(jnp.int32)
    edge_index = jnp.stack(
        [jax.random.randint(k_src, (num_edges,), 0, num_nodes),
         jax.random.randint(k_dst, (num_edges,), 0, num_nodes)], axis=0
    ).astype(jnp.int32)
    batch = jnp.concatenate(
        [jnp.zeros((num_nodes // 2,), jnp.int32),
         jnp.ones((num_nodes - num_nodes // 2,), jnp.int32)])
    edge_weight_o = jax.random.uniform(k_ew, (num_edges,), jnp.float32, 0.5, 1.5)
    node_weight_o = jax.random.uniform(k_nw, (num_nodes,), jnp.float32, 0.5, 1.5)

    out = gcnnet_forward(params, x_cat, edge_index, edge_attr, batch,
                         edge_weight_o, node_weight_o, num_graphs)
    out = jax.block_until_ready(out)
    assert out.shape == (num_graphs, 2 * emb_dim) and out.dtype == jnp.float32
    assert bool(jnp.all(jnp.isfinite(out)))
    print("KERNEL_OK")
</pallas_src>

<mosaic_0001>
module attributes {stable_mosaic.version = 11 : i64} {
  func.func @_gcnnet_kernel(%arg0: i32, %arg1: memref<128x128xf32, #tpu.memory_space<vmem>>, %arg2: memref<128x1xi32, #tpu.memory_space<vmem>>, %arg3: memref<1x128xi32, #tpu.memory_space<vmem>>, %arg4: memref<128x1xi32, #tpu.memory_space<vmem>>, %arg5: memref<1x128xi32, #tpu.memory_space<vmem>>, %arg6: memref<128x1xf32, #tpu.memory_space<vmem>>, %arg7: memref<1x128xf32, #tpu.memory_space<vmem>>, %arg8: memref<1x128xf32, #tpu.memory_space<vmem>>, %arg9: memref<128x1xf32, #tpu.memory_space<vmem>>, %arg10: memref<128x1xf32, #tpu.memory_space<vmem>>, %arg11: memref<128x128xbf16, #tpu.memory_space<vmem>>, %arg12: memref<1x128xf32, #tpu.memory_space<vmem>>, %arg13: memref<128x128xbf16, #tpu.memory_space<vmem>>, %arg14: memref<1x128xf32, #tpu.memory_space<vmem>>, %arg15: memref<1x128x128xbf16, #tpu.memory_space<vmem>>, %arg16: memref<1x1x128xf32, #tpu.memory_space<vmem>>, %arg17: memref<1x128x128xbf16, #tpu.memory_space<vmem>>, %arg18: memref<1x1x128xf32, #tpu.memory_space<vmem>>, %arg19: memref<1x128x128xbf16, #tpu.memory_space<vmem>>, %arg20: memref<1x1x128xf32, #tpu.memory_space<vmem>>, %arg21: memref<1x128x128xbf16, #tpu.memory_space<vmem>>, %arg22: memref<1x1x128xf32, #tpu.memory_space<vmem>>, %arg23: memref<1x128x128xbf16, #tpu.memory_space<vmem>>, %arg24: memref<1x1x128xf32, #tpu.memory_space<vmem>>, %arg25: memref<8x128xf32, #tpu.memory_space<vmem>>, %arg26: memref<128x128xf32, #tpu.memory_space<vmem>>, %arg27: memref<8x128xf32, #tpu.memory_space<vmem>>, %arg28: memref<128x128xbf16, #tpu.memory_space<vmem>>, %arg29: memref<128x128xbf16, #tpu.memory_space<vmem>>, %arg30: memref<128x8xbf16, #tpu.memory_space<vmem>>, %arg31: memref<8x128xbf16, #tpu.memory_space<vmem>>) attributes {dimension_semantics = [#tpu.dimension_semantics<arbitrary>], iteration_bounds = array<i64: 3>, scalar_prefetch = 0 : i64, scratch_operands = 6 : i64, tpu.core_type = #tpu.core_type<tc>, window_params = [{pipeline_mode = #tpu.pipeline_mode<synchronous>, transform_indices = @transform_0, window_bounds = array<i64: 128, 128>}, {pipeline_mode = #tpu.pipeline_mode<synchronous>, transform_indices = @transform_1, window_bounds = array<i64: 128, 1>}, {pipeline_mode = #tpu.pipeline_mode<synchronous>, transform_indices = @transform_2, window_bounds = array<i64: 1, 128>}, {pipeline_mode = #tpu.pipeline_mode<synchronous>, transform_indices = @transform_3, window_bounds = array<i64: 128, 1>}, {pipeline_mode = #tpu.pipeline_mode<synchronous>, transform_indices = @transform_4, window_bounds = array<i64: 1, 128>}, {pipeline_mode = #tpu.pipeline_mode<synchronous>, transform_indices = @transform_5, window_bounds = array<i64: 128, 1>}, {pipeline_mode = #tpu.pipeline_mode<synchronous>, transform_indices = @transform_6, window_bounds = array<i64: 1, 128>}, {pipeline_mode = #tpu.pipeline_mode<synchronous>, transform_indices = @transform_7, window_bounds = array<i64: 1, 128>}, {pipeline_mode = #tpu.pipeline_mode<synchronous>, transform_indices = @transform_8, window_bounds = array<i64: 128, 1>}, {pipeline_mode = #tpu.pipeline_mode<synchronous>, transform_indices = @transform_9, window_bounds = array<i64: 128, 1>}, {pipeline_mode = #tpu.pipeline_mode<synchronous>, transform_indices = @transform_10, window_bounds = array<i64: 128, 128>}, {pipeline_mode = #tpu.pipeline_mode<synchronous>, transform_indices = @transform_11, window_bounds = array<i64: 1, 128>}, {pipeline_mode = #tpu.pipeline_mode<synchronous>, transform_indices = @transform_12, window_bounds = array<i64: 128, 128>}, {pipeline_mode = #tpu.pipeline_mode<synchronous>, transform_indices = @transform_13, window_bounds = array<i64: 1, 128>}, {transform_indices = @transform_14, window_bounds = array<i64: 1, 128, 128>}, {transform_indices = @transform_15, window_bounds = array<i64: 1, 1, 128>}, {transform_indices = @transform_16, window_bounds = array<i64: 1, 128, 128>}, {transform_indices = @transform_17, window_bounds = array<i64: 1, 1, 128>}, {transform_indices = @transform_18, window_bounds = array<i64: 1, 128, 128>}, {transform_indices = @transform_19, window_bounds = array<i64: 1, 1, 128>}, {transform_indices = @transform_20, window_bounds = array<i64: 1, 128, 128>}, {transform_indices = @transform_21, window_bounds = array<i64: 1, 1, 128>}, {transform_indices = @transform_22, window_bounds = array<i64: 1, 128, 128>}, {transform_indices = @transform_23, window_bounds = array<i64: 1, 1, 128>}, {pipeline_mode = #tpu.pipeline_mode<synchronous>, transform_indices = @transform_24, window_bounds = array<i64: 8, 128>}]} {
    %c0_i32 = arith.constant 0 : i32
    %0 = arith.cmpi eq, %arg0, %c0_i32 : i32
    %1 = arith.extui %0 : i1 to i32
    %c0_i32_0 = arith.constant 0 : i32
    %2 = arith.cmpi ne, %1, %c0_i32_0 : i32
    scf.if %2 {
      %c0_38 = arith.constant 0 : index
      %c0_39 = arith.constant 0 : index
      %52 = vector.load %arg1[%c0_38, %c0_39] : memref<128x128xf32, #tpu.memory_space<vmem>>, vector<128x128xf32>
      %c0_40 = arith.constant 0 : index
      %c0_41 = arith.constant 0 : index
      %53 = vector.load %arg26[%c0_40, %c0_41] : memref<128x128xf32, #tpu.memory_space<vmem>>, vector<128x128xf32>
      tpu.vector_store %arg26[%c0_40, %c0_41], %52 {strides = array<i32>} : memref<128x128xf32, #tpu.memory_space<vmem>>, vector<128x128xf32>,
      %cst_42 = arith.constant 0.000000e+00 : f32
      %54 = vector.broadcast %cst_42 : f32 to vector<8x128xf32>
      %c0_43 = arith.constant 0 : index
      %c0_44 = arith.constant 0 : index
      %55 = vector.load %arg27[%c0_43, %c0_44] : memref<8x128xf32, #tpu.memory_space<vmem>>, vector<8x128xf32>
      tpu.vector_store %arg27[%c0_43, %c0_44], %54 {strides = array<i32>} : memref<8x128xf32, #tpu.memory_space<vmem>>, vector<8x128xf32>,
      %c0_45 = arith.constant 0 : index
      %c0_46 = arith.constant 0 : index
      %56 = vector.load %arg2[%c0_45, %c0_46] : memref<128x1xi32, #tpu.memory_space<vmem>>, vector<128x1xi32>
      %57 = tpu.iota {dimensions = array<i32: 1>} : vector<128x128xi32>
      %58 = vector.broadcast %56 : vector<128x1xi32> to vector<128x128xi32>
      %59 = arith.cmpi eq, %58, %57 : vector<128x128xi32>
      %cst_47 = arith.constant 1.000000e+00 : f32
      %cst_48 = arith.constant 0.000000e+00 : f32
      %60 = vector.broadcast %cst_47 : f32 to vector<128x128xf32>
      %61 = vector.broadcast %cst_48 : f32 to vector<128x128xf32>
      %62 = arith.select %59, %60, %61 : vector<128x128xi1>, vector<128x128xf32>
      %63 = arith.truncf %62 : vector<128x128xf32> to vector<128x128xbf16>
      %c0_49 = arith.constant 0 : index
      %c0_50 = arith.constant 0 : index
      %64 = vector.load %arg28[%c0_49, %c0_50] : memref<128x128xbf16, #tpu.memory_space<vmem>>, vector<128x128xbf16>
      tpu.vector_store %arg28[%c0_49, %c0_50], %63 {strides = array<i32>} : memref<128x128xbf16, #tpu.memory_space<vmem>>, vector<128x128xbf16>,
      %65 = tpu.iota {dimensions = array<i32: 0>} : vector<128x128xi32>
      %c0_51 = arith.constant 0 : index
      %c0_52 = arith.constant 0 : index
      %66 = vector.load %arg3[%c0_51, %c0_52] : memref<1x128xi32, #tpu.memory_space<vmem>>, vector<1x128xi32>
      %67 = vector.broadcast %66 : vector<1x128xi32> to vector<128x128xi32>
      %68 = arith.cmpi eq, %65, %67 : vector<128x128xi32>
      %cst_53 = arith.constant 1.000000e+00 : f32
      %cst_54 = arith.constant 0.000000e+00 : f32
      %69 = vector.broadcast %cst_53 : f32 to vector<128x128xf32>
      %70 = vector.broadcast %cst_54 : f32 to vector<128x128xf32>
      %71 = arith.select %68, %69, %70 : vector<128x128xi1>, vector<128x128xf32>
      %72 = arith.truncf %71 : vector<128x128xf32> to vector<128x128xbf16>
      %c0_55 = arith.constant 0 : index
      %c0_56 = arith.constant 0 : index
      %73 = vector.load %arg29[%c0_55, %c0_56] : memref<128x128xbf16, #tpu.memory_space<vmem>>, vector<128x128xbf16>
      tpu.vector_store %arg29[%c0_55, %c0_56], %72 {strides = array<i32>} : memref<128x128xbf16, #tpu.memory_space<vmem>>, vector<128x128xbf16>,
      %c0_57 = arith.constant 0 : index
      %c0_58 = arith.constant 0 : index
      %74 = vector.load %arg4[%c0_57, %c0_58] : memref<128x1xi32, #tpu.memory_space<vmem>>, vector<128x1xi32>
      %75 = tpu.iota {dimensions = array<i32: 1>} : vector<128x8xi32>
      %76 = vector.broadcast %74 : vector<128x1xi32> to vector<128x8xi32>
      %77 = arith.cmpi eq, %76, %75 : vector<128x8xi32>
      %cst_59 = arith.constant 1.000000e+00 : f32
      %cst_60 = arith.constant 0.000000e+00 : f32
      %78 = vector.broadcast %cst_59 : f32 to vector<128x8xf32>
      %79 = vector.broadcast %cst_60 : f32 to vector<128x8xf32>
      %80 = arith.select %77, %78, %79 : vector<128x8xi1>, vector<128x8xf32>
      %81 = arith.truncf %80 : vector<128x8xf32> to vector<128x8xbf16>
      %c0_61 = arith.constant 0 : index
      %c0_62 = arith.constant 0 : index
      %82 = vector.load %arg30[%c0_61, %c0_62] : memref<128x8xbf16, #tpu.memory_space<vmem>>, vector<128x8xbf16>
      tpu.vector_store %arg30[%c0_61, %c0_62], %81 {strides = array<i32>} : memref<128x8xbf16, #tpu.memory_space<vmem>>, vector<128x8xbf16>,
      %83 = tpu.iota {dimensions = array<i32: 0>} : vector<8x128xi32>
      %c0_63 = arith.constant 0 : index
      %c0_64 = arith.constant 0 : index
      %84 = vector.load %arg5[%c0_63, %c0_64] : memref<1x128xi32, #tpu.memory_space<vmem>>, vector<1x128xi32>
      %85 = vector.broadcast %84 : vector<1x128xi32> to vector<8x128xi32>
      %86 = arith.cmpi eq, %83, %85 : vector<8x128xi32>
      %cst_65 = arith.constant 1.000000e+00 : f32
      %cst_66 = arith.constant 0.000000e+00 : f32
      %87 = vector.broadcast %cst_65 : f32 to vector<8x128xf32>
      %88 = vector.broadcast %cst_66 : f32 to vector<8x128xf32>
      %89 = arith.select %86, %87, %88 : vector<8x128xi1>, vector<8x128xf32>
      %90 = arith.truncf %89 : vector<8x128xf32> to vector<8x128xbf16>
      %c0_67 = arith.constant 0 : index
      %c0_68 = arith.constant 0 : index
      %91 = vector.load %arg31[%c0_67, %c0_68] : memref<8x128xbf16, #tpu.memory_space<vmem>>, vector<8x128xbf16>
      tpu.vector_store %arg31[%c0_67, %c0_68], %90 {strides = array<i32>} : memref<8x128xbf16, #tpu.memory_space<vmem>>, vector<8x128xbf16>,
    } else {
    }
    %c0 = arith.constant 0 : index
    %c0_1 = arith.constant 0 : index
    %3 = vector.load %arg26[%c0, %c0_1] : memref<128x128xf32, #tpu.memory_space<vmem>>, vector<128x128xf32>
    %c0_2 = arith.constant 0 : index
    %c0_3 = arith.constant 0 : index
    %4 = vector.load %arg30[%c0_2, %c0_3] : memref<128x8xbf16, #tpu.memory_space<vmem>>, vector<128x8xbf16>
    %c0_4 = arith.constant 0 : index
    %c0_5 = arith.constant 0 : index
    %5 = vector.load %arg27[%c0_4, %c0_5] : memref<8x128xf32, #tpu.memory_space<vmem>>, vector<8x128xf32>
    %6 = arith.truncf %5 : vector<8x128xf32> to vector<8x128xbf16>
    %cst = arith.constant dense<0.000000e+00> : vector<128x128xf32>
    %7 = tpu.matmul %4, %6, %cst {dimension_numbers = #tpu.dot_dimension_numbers<[1], [0], [0], [1], [0, 0, 1, 1], [], []>} : vector<128x8xbf16>, vector<8x128xbf16>, vector<128x128xf32> -> vector<128x128xf32>
    %8 = arith.addf %3, %7 : vector<128x128xf32>
    %9 = arith.truncf %8 : vector<128x128xf32> to vector<128x128xbf16>
    %c0_6 = arith.constant 0 : index
    %c0_7 = arith.constant 0 : index
    %10 = vector.load %arg28[%c0_6, %c0_7] : memref<128x128xbf16, #tpu.memory_space<vmem>>, vector<128x128xbf16>
    %cst_8 = arith.constant dense<0.000000e+00> : vector<128x128xf32>
    %11 = tpu.matmul %10, %9, %cst_8 {dimension_numbers = #tpu.dot_dimension_numbers<[1], [0], [0], [1], [0, 0, 1, 1], [], []>} : vector<128x128xbf16>, vector<128x128xbf16>, vector<128x128xf32> -> vector<128x128xf32>
    %c0_9 = arith.constant 0 : index
    %c0_10 = arith.constant 0 : index
    %c0_11 = arith.constant 0 : index
    %12 = vector.load %arg15[%c0_9, %c0_10, %c0_11] : memref<1x128x128xbf16, #tpu.memory_space<vmem>>, vector<1x128x128xbf16>
    %13 = vector.shape_cast %12 : vector<1x128x128xbf16> to vector<128x128xbf16>
    %14 = arith.extf %13 : vector<128x128xbf16> to vector<128x128xf32>
    %15 = arith.addf %11, %14 : vector<128x128xf32>
    %cst_12 = arith.constant 0.000000e+00 : f32
    %16 = vector.broadcast %cst_12 : f32 to vector<128x128xf32>
    %17 = arith.maximumf %15, %16 : vector<128x128xf32>
    %c0_13 = arith.constant 0 : index
    %c0_14 = arith.constant 0 : index
    %18 = vector.load %arg29[%c0_13, %c0_14] : memref<128x128xbf16, #tpu.memory_space<vmem>>, vector<128x128xbf16>
    %19 = arith.truncf %17 : vector<128x128xf32> to vector<128x128xbf16>
    %cst_15 = arith.constant dense<0.000000e+00> : vector<128x128xf32>
    %20 = tpu.matmul %18, %19, %cst_15 {dimension_numbers = #tpu.dot_dimension_numbers<[1], [0], [0], [1], [0, 0, 1, 1], [], []>} : vector<128x128xbf16>, vector<128x128xbf16>, vector<128x128xf32> -> vector<128x128xf32>
    %c0_16 = arith.constant 0 : index
    %c0_17 = arith.constant 0 : index
    %c0_18 = arith.constant 0 : index
    %21 = vector.load %arg16[%c0_16, %c0_17, %c0_18] : memref<1x1x128xf32, #tpu.memory_space<vmem>>, vector<1x1x128xf32>
    %22 = vector.shape_cast %21 : vector<1x1x128xf32> to vector<1x128xf32>
    %cst_19 = arith.constant 1.000000e+00 : f32
    %23 = vector.broadcast %cst_19 : f32 to vector<1x128xf32>
    %24 = arith.addf %23, %22 : vector<1x128xf32>
    %25 = vector.broadcast %24 : vector<1x128xf32> to vector<128x128xf32>
    %26 = arith.mulf %25, %8 : vector<128x128xf32>
    %27 = arith.addf %26, %20 : vector<128x128xf32>
    %28 = arith.truncf %27 : vector<128x128xf32> to vector<128x128xbf16>
    %c0_20 = arith.constant 0 : index
    %c0_21 = arith.constant 0 : index
    %c0_22 = arith.constant 0 : index
    %29 = vector.load %arg17[%c0_20, %c0_21, %c0_22] : memref<1x128x128xbf16, #tpu.memory_space<vmem>>, vector<1x128x128xbf16>
    %30 = vector.shape_cast %29 : vector<1x128x128xbf16> to vector<128x128xbf16>
    %cst_23 = arith.constant dense<0.000000e+00> : vector<128x128xf32>
    %31 = tpu.matmul %28, %30, %cst_23 {dimension_numbers = #tpu.dot_dimension_numbers<[1], [0], [0], [1], [0, 0, 1, 1], [], []>} : vector<128x128xbf16>, vector<128x128xbf16>, vector<128x128xf32> -> vector<128x128xf32>
    %c0_24 = arith.constant 0 : index
    %c0_25 = arith.constant 0 : index
    %c0_26 = arith.constant 0 : index
    %32 = vector.load %arg18[%c0_24, %c0_25, %c0_26] : memref<1x1x128xf32, #tpu.memory_space<vmem>>, vector<1x1x128xf32>
    %33 = vector.shape_cast %32 : vector<1x1x128xf32> to vector<1x128xf32>
    %34 = vector.broadcast %33 : vector<1x128xf32> to vector<128x128xf32>
    %35 = arith.addf %31, %34 : vector<128x128xf32>
    %cst_27 = arith.constant 0.000000e+00 : f32
    %36 = vector.broadcast %cst_27 : f32 to vector<128x128xf32>
    %37 = arith.maximumf %35, %36 : vector<128x128xf32>
    %38 = arith.truncf %37 : vector<128x128xf32> to vector<128x128xbf16>
    %c0_28 = arith.constant 0 : index
    %c0_29 = arith.constant 0 : index
    %c0_30 = arith.constant 0 : index
    %39 = vector.load %arg19[%c0_28, %c0_29, %c0_30] : memref<1x128x128xbf16, #tpu.memory_space<vmem>>, vector<1x128x128xbf16>
    %40 = vector.shape_cast %39 : vector<1x128x128xbf16> to vector<128x128xbf16>
    %cst_31 = arith.constant dense<0.000000e+00> : vector<128x128xf32>
    %41 = tpu.matmul %38, %40, %cst_31 {dimension_numbers = #tpu.dot_dimension_numbers<[1], [0], [0], [1], [0, 0, 1, 1], [], []>} : vector<128x128xbf16>, vector<128x128xbf16>, vector<128x128xf32> -> vector<128x128xf32>
    %c0_32 = arith.constant 0 : index
    %c0_33 = arith.constant 0 : index
    %c0_34 = arith.constant 0 : index
    %42 = vector.load %arg20[%c0_32, %c0_33, %c0_34] : memref<1x1x128xf32, #tpu.memory_space<vmem>>, vector<1x1x128xf32>
    %43 = vector.shape_cast %42 : vector<1x1x128xf32> to vector<1x128xf32>
    %44 = vector.broadcast %43 : vector<1x128xf32> to vector<128x128xf32>
    %45 = arith.addf %41, %44 : vector<128x128xf32>
    %c2_i32 = arith.constant 2 : i32
    %46 = arith.cmpi slt, %arg0, %c2_i32 : i32
    %47 = arith.extui %46 : i1 to i32
    %c0_i32_35 = arith.constant 0 : i32
    %48 = arith.cmpi ne, %47, %c0_i32_35 : i32
    scf.if %48 {
      %c0_38 = arith.constant 0 : index
      %c0_39 = arith.constant 0 : index
      %52 = vector.load %arg31[%c0_38, %c0_39] : memref<8x128xbf16, #tpu.memory_space<vmem>>, vector<8x128xbf16>
      %cst_40 = arith.constant dense<0.000000e+00> : vector<8x128xf32>
      %53 = tpu.matmul %52, %9, %cst_40 {dimension_numbers = #tpu.dot_dimension_numbers<[1], [0], [0], [1], [0, 0, 1, 1], [], []>} : vector<8x128xbf16>, vector<128x128xbf16>, vector<8x128xf32> -> vector<8x128xf32>
      %c0_41 = arith.constant 0 : index
      %c0_42 = arith.constant 0 : index
      %54 = vector.load %arg27[%c0_41, %c0_42] : memref<8x128xf32, #tpu.memory_space<vmem>>, vector<8x128xf32>
      %55 = arith.addf %53, %54 : vector<8x128xf32>
      %56 = arith.truncf %55 : vector<8x128xf32> to vector<8x128xbf16>
      %c0_43 = arith.constant 0 : index
      %c0_44 = arith.constant 0 : index
      %c0_45 = arith.constant 0 : index
      %57 = vector.load %arg21[%c0_43, %c0_44, %c0_45] : memref<1x128x128xbf16, #tpu.memory_space<vmem>>, vector<1x128x128xbf16>
      %58 = vector.shape_cast %57 : vector<1x128x128xbf16> to vector<128x128xbf16>
      %cst_46 = arith.constant dense<0.000000e+00> : vector<8x128xf32>
      %59 = tpu.matmul %56, %58, %cst_46 {dimension_numbers = #tpu.dot_dimension_numbers<[1], [0], [0], [1], [0, 0, 1, 1], [], []>} : vector<8x128xbf16>, vector<128x128xbf16>, vector<8x128xf32> -> vector<8x128xf32>
      %c0_47 = arith.constant 0 : index
      %c0_48 = arith.constant 0 : index
      %c0_49 = arith.constant 0 : index
      %60 = vector.load %arg22[%c0_47, %c0_48, %c0_49] : memref<1x1x128xf32, #tpu.memory_space<vmem>>, vector<1x1x128xf32>
      %61 = vector.shape_cast %60 : vector<1x1x128xf32> to vector<1x128xf32>
      %62 = vector.broadcast %61 : vector<1x128xf32> to vector<8x128xf32>
      %63 = arith.addf %59, %62 : vector<8x128xf32>
      %cst_50 = arith.constant 0.000000e+00 : f32
      %64 = vector.broadcast %cst_50 : f32 to vector<8x128xf32>
      %65 = arith.maximumf %63, %64 : vector<8x128xf32>
      %66 = arith.truncf %65 : vector<8x128xf32> to vector<8x128xbf16>
      %c0_51 = arith.constant 0 : index
      %c0_52 = arith.constant 0 : index
      %c0_53 = arith.constant 0 : index
      %67 = vector.load %arg23[%c0_51, %c0_52, %c0_53] : memref<1x128x128xbf16, #tpu.memory_space<vmem>>, vector<1x128x128xbf16>
      %68 = vector.shape_cast %67 : vector<1x128x128xbf16> to vector<128x128xbf16>
      %cst_54 = arith.constant dense<0.000000e+00> : vector<8x128xf32>
      %69 = tpu.matmul %66, %68, %cst_54 {dimension_numbers = #tpu.dot_dimension_numbers<[1], [0], [0], [1], [0, 0, 1, 1], [], []>} : vector<8x128xbf16>, vector<128x128xbf16>, vector<8x128xf32> -> vector<8x128xf32>
      %c0_55 = arith.constant 0 : index
      %c0_56 = arith.constant 0 : index
      %c0_57 = arith.constant 0 : index
      %70 = vector.load %arg24[%c0_55, %c0_56, %c0_57] : memref<1x1x128xf32, #tpu.memory_space<vmem>>, vector<1x1x128xf32>
      %71 = vector.shape_cast %70 : vector<1x1x128xf32> to vector<1x128xf32>
      %72 = vector.broadcast %71 : vector<1x128xf32> to vector<8x128xf32>
      %73 = arith.addf %69, %72 : vector<8x128xf32>
      %cst_58 = arith.constant 0.000000e+00 : f32
      %74 = vector.broadcast %cst_58 : f32 to vector<8x128xf32>
      %75 = arith.maximumf %73, %74 : vector<8x128xf32>
      %c0_59 = arith.constant 0 : index
      %c0_60 = arith.constant 0 : index
      %76 = vector.load %arg27[%c0_59, %c0_60] : memref<8x128xf32, #tpu.memory_space<vmem>>, vector<8x128xf32>
      tpu.vector_store %arg27[%c0_59, %c0_60], %75 {strides = array<i32>} : memref<8x128xf32, #tpu.memory_space<vmem>>, vector<8x128xf32>,
      %cst_61 = arith.constant 0.000000e+00 : f32
      %77 = vector.broadcast %cst_61 : f32 to vector<128x128xf32>
      %78 = arith.maximumf %45, %77 : vector<128x128xf32>
      %c0_62 = arith.constant 0 : index
      %c0_63 = arith.constant 0 : index
      %79 = vector.load %arg26[%c0_62, %c0_63] : memref<128x128xf32, #tpu.memory_space<vmem>>, vector<128x128xf32>
      tpu.vector_store %arg26[%c0_62, %c0_63], %78 {strides = array<i32>} : memref<128x128xf32, #tpu.memory_space<vmem>>, vector<128x128xf32>,
    } else {
    }
    %c2_i32_36 = arith.constant 2 : i32
    %49 = arith.cmpi eq, %arg0, %c2_i32_36 : i32
    %50 = arith.extui %49 : i1 to i32
    %c0_i32_37 = arith.constant 0 : i32
    %51 = arith.cmpi ne, %50, %c0_i32_37 : i32
    scf.if %51 {
      %c0_38 = arith.constant 0 : index
      %c0_39 = arith.constant 0 : index
      %52 = vector.load %arg6[%c0_38, %c0_39] : memref<128x1xf32, #tpu.memory_space<vmem>>, vector<128x1xf32>
      %53 = vector.broadcast %52 : vector<128x1xf32> to vector<128x128xf32>
      %54 = arith.mulf %45, %53 : vector<128x128xf32>
      %c0_40 = arith.constant 0 : index
      %c0_41 = arith.constant 0 : index
      %55 = vector.load %arg7[%c0_40, %c0_41] : memref<1x128xf32, #tpu.memory_space<vmem>>, vector<1x128xf32>
      %56 = vector.broadcast %55 : vector<1x128xf32> to vector<128x128xf32>
      %57 = arith.mulf %54, %56 : vector<128x128xf32>
      %c0_42 = arith.constant 0 : index
      %c0_43 = arith.constant 0 : index
      %58 = vector.load %arg8[%c0_42, %c0_43] : memref<1x128xf32, #tpu.memory_space<vmem>>, vector<1x128xf32>
      %59 = vector.broadcast %58 : vector<1x128xf32> to vector<128x128xf32>
      %60 = arith.addf %57, %59 : vector<128x128xf32>
      %61 = arith.truncf %60 : vector<128x128xf32> to vector<128x128xbf16>
      %c0_44 = arith.constant 0 : index
      %c0_45 = arith.constant 0 : index
      %62 = vector.load %arg11[%c0_44, %c0_45] : memref<128x128xbf16, #tpu.memory_space<vmem>>, vector<128x128xbf16>
      %cst_46 = arith.constant dense<0.000000e+00> : vector<128x128xf32>
      %63 = tpu.matmul %61, %62, %cst_46 {dimension_numbers = #tpu.dot_dimension_numbers<[1], [0], [0], [1], [0, 0, 1, 1], [], []>} : vector<128x128xbf16>, vector<128x128xbf16>, vector<128x128xf32> -> vector<128x128xf32>
      %c0_47 = arith.constant 0 : index
      %c0_48 = arith.constant 0 : index
      %64 = vector.load %arg28[%c0_47, %c0_48] : memref<128x128xbf16, #tpu.memory_space<vmem>>, vector<128x128xbf16>
      %65 = arith.truncf %63 : vector<128x128xf32> to vector<128x128xbf16>
      %cst_49 = arith.constant dense<0.000000e+00> : vector<128x128xf32>
      %66 = tpu.matmul %64, %65, %cst_49 {dimension_numbers = #tpu.dot_dimension_numbers<[1], [0], [0], [1], [0, 0, 1, 1], [], []>} : vector<128x128xbf16>, vector<128x128xbf16>, vector<128x128xf32> -> vector<128x128xf32>
      %c0_50 = arith.constant 0 : index
      %c0_51 = arith.constant 0 : index
      %67 = vector.load %arg9[%c0_50, %c0_51] : memref<128x1xf32, #tpu.memory_space<vmem>>, vector<128x1xf32>
      %68 = vector.broadcast %67 : vector<128x1xf32> to vector<128x128xf32>
      %69 = arith.mulf %66, %68 : vector<128x128xf32>
      %c0_52 = arith.constant 0 : index
      %c0_53 = arith.constant 0 : index
      %70 = vector.load %arg29[%c0_52, %c0_53] : memref<128x128xbf16, #tpu.memory_space<vmem>>, vector<128x128xbf16>
      %71 = arith.truncf %69 : vector<128x128xf32> to vector<128x128xbf16>
      %cst_54 = arith.constant dense<0.000000e+00> : vector<128x128xf32>
      %72 = tpu.matmul %70, %71, %cst_54 {dimension_numbers = #tpu.dot_dimension_numbers<[1], [0], [0], [1], [0, 0, 1, 1], [], []>} : vector<128x128xbf16>, vector<128x128xbf16>, vector<128x128xf32> -> vector<128x128xf32>
      %c0_55 = arith.constant 0 : index
      %c0_56 = arith.constant 0 : index
      %73 = vector.load %arg10[%c0_55, %c0_56] : memref<128x1xf32, #tpu.memory_space<vmem>>, vector<128x1xf32>
      %74 = vector.broadcast %73 : vector<128x1xf32> to vector<128x128xf32>
      %75 = arith.mulf %74, %63 : vector<128x128xf32>
      %76 = arith.addf %72, %75 : vector<128x128xf32>
      %c0_57 = arith.constant 0 : index
      %c0_58 = arith.constant 0 : index
      %77 = vector.load %arg12[%c0_57, %c0_58] : memref<1x128xf32, #tpu.memory_space<vmem>>, vector<1x128xf32>
      %78 = vector.broadcast %77 : vector<1x128xf32> to vector<128x128xf32>
      %79 = arith.addf %76, %78 : vector<128x128xf32>
      %cst_59 = arith.constant 0.000000e+00 : f32
      %80 = vector.broadcast %cst_59 : f32 to vector<128x128xf32>
      %81 = arith.maximumf %79, %80 : vector<128x128xf32>
      %c0_60 = arith.constant 0 : index
      %c0_61 = arith.constant 0 : index
      %82 = vector.load %arg31[%c0_60, %c0_61] : memref<8x128xbf16, #tpu.memory_space<vmem>>, vector<8x128xbf16>
      %83 = arith.truncf %81 : vector<128x128xf32> to vector<128x128xbf16>
      %cst_62 = arith.constant dense<0.000000e+00> : vector<8x128xf32>
      %84 = tpu.matmul %82, %83, %cst_62 {dimension_numbers = #tpu.dot_dimension_numbers<[1], [0], [0], [1], [0, 0, 1, 1], [], []>} : vector<8x128xbf16>, vector<128x128xbf16>, vector<8x128xf32> -> vector<8x128xf32>
      %85 = arith.truncf %84 : vector<8x128xf32> to vector<8x128xbf16>
      %c0_63 = arith.constant 0 : index
      %c0_64 = arith.constant 0 : index
      %86 = vector.load %arg13[%c0_63, %c0_64] : memref<128x128xbf16, #tpu.memory_space<vmem>>, vector<128x128xbf16>
      %cst_65 = arith.constant dense<0.000000e+00> : vector<8x128xf32>
      %87 = tpu.matmul %85, %86, %cst_65 {dimension_numbers = #tpu.dot_dimension_numbers<[1], [0], [0], [1], [0, 0, 1, 1], [], []>} : vector<8x128xbf16>, vector<128x128xbf16>, vector<8x128xf32> -> vector<8x128xf32>
      %c0_66 = arith.constant 0 : index
      %c0_67 = arith.constant 0 : index
      %88 = vector.load %arg14[%c0_66, %c0_67] : memref<1x128xf32, #tpu.memory_space<vmem>>, vector<1x128xf32>
      %89 = vector.broadcast %88 : vector<1x128xf32> to vector<8x128xf32>
      %90 = arith.addf %87, %89 : vector<8x128xf32>
      %cst_68 = arith.constant 0.000000e+00 : f32
      %91 = vector.broadcast %cst_68 : f32 to vector<8x128xf32>
      %92 = arith.maximumf %90, %91 : vector<8x128xf32>
      %c0_69 = arith.constant 0 : index
      %c0_70 = arith.constant 0 : index
      %93 = vector.load %arg25[%c0_69, %c0_70] : memref<8x128xf32, #tpu.memory_space<vmem>>, vector<8x128xf32>
      tpu.vector_store %arg25[%c0_69, %c0_70], %92 {strides = array<i32>} : memref<8x128xf32, #tpu.memory_space<vmem>>, vector<8x128xf32>,
    } else {
    }
    return
  }
  func.func @transform_0(%arg0: i32) -> (i32, i32) {
    %c0_i32 = arith.constant 0 : i32
    %c0_i32_0 = arith.constant 0 : i32
    %c0_i32_1 = arith.constant 0 : i32
    return %c0_i32, %c0_i32_0 : i32, i32
  }
  func.func @transform_1(%arg0: i32) -> (i32, i32) {
    %c0_i32 = arith.constant 0 : i32
    %c0_i32_0 = arith.constant 0 : i32
    %c0_i32_1 = arith.constant 0 : i32
    return %c0_i32, %c0_i32_0 : i32, i32
  }
  func.func @transform_2(%arg0: i32) -> (i32, i32) {
    %c0_i32 = arith.constant 0 : i32
    %c0_i32_0 = arith.constant 0 : i32
    %c0_i32_1 = arith.constant 0 : i32
    return %c0_i32, %c0_i32_0 : i32, i32
  }
  func.func @transform_3(%arg0: i32) -> (i32, i32) {
    %c0_i32 = arith.constant 0 : i32
    %c0_i32_0 = arith.constant 0 : i32
    %c0_i32_1 = arith.constant 0 : i32
    return %c0_i32, %c0_i32_0 : i32, i32
  }
  func.func @transform_4(%arg0: i32) -> (i32, i32) {
    %c0_i32 = arith.constant 0 : i32
    %c0_i32_0 = arith.constant 0 : i32
    %c0_i32_1 = arith.constant 0 : i32
    return %c0_i32, %c0_i32_0 : i32, i32
  }
  func.func @transform_5(%arg0: i32) -> (i32, i32) {
    %c0_i32 = arith.constant 0 : i32
    %c0_i32_0 = arith.constant 0 : i32
    %c0_i32_1 = arith.constant 0 : i32
    return %c0_i32, %c0_i32_0 : i32, i32
  }
  func.func @transform_6(%arg0: i32) -> (i32, i32) {
    %c0_i32 = arith.constant 0 : i32
    %c0_i32_0 = arith.constant 0 : i32
    %c0_i32_1 = arith.constant 0 : i32
    return %c0_i32, %c0_i32_0 : i32, i32
  }
  func.func @transform_7(%arg0: i32) -> (i32, i32) {
    %c0_i32 = arith.constant 0 : i32
    %c0_i32_0 = arith.constant 0 : i32
    %c0_i32_1 = arith.constant 0 : i32
    return %c0_i32, %c0_i32_0 : i32, i32
  }
  func.func @transform_8(%arg0: i32) -> (i32, i32) {
    %c0_i32 = arith.constant 0 : i32
    %c0_i32_0 = arith.constant 0 : i32
    %c0_i32_1 = arith.constant 0 : i32
    return %c0_i32, %c0_i32_0 : i32, i32
  }
  func.func @transform_9(%arg0: i32) -> (i32, i32) {
    %c0_i32 = arith.constant 0 : i32
    %c0_i32_0 = arith.constant 0 : i32
    %c0_i32_1 = arith.constant 0 : i32
    return %c0_i32, %c0_i32_0 : i32, i32
  }
  func.func @transform_10(%arg0: i32) -> (i32, i32) {
    %c0_i32 = arith.constant 0 : i32
    %c0_i32_0 = arith.constant 0 : i32
    %c0_i32_1 = arith.constant 0 : i32
    return %c0_i32, %c0_i32_0 : i32, i32
  }
  func.func @transform_11(%arg0: i32) -> (i32, i32) {
    %c0_i32 = arith.constant 0 : i32
    %c0_i32_0 = arith.constant 0 : i32
    %c0_i32_1 = arith.constant 0 : i32
    return %c0_i32, %c0_i32_0 : i32, i32
  }
  func.func @transform_12(%arg0: i32) -> (i32, i32) {
    %c0_i32 = arith.constant 0 : i32
    %c0_i32_0 = arith.constant 0 : i32
    %c0_i32_1 = arith.constant 0 : i32
    return %c0_i32, %c0_i32_0 : i32, i32
  }
  func.func @transform_13(%arg0: i32) -> (i32, i32) {
    %c0_i32 = arith.constant 0 : i32
    %c0_i32_0 = arith.constant 0 : i32
    %c0_i32_1 = arith.constant 0 : i32
    return %c0_i32, %c0_i32_0 : i32, i32
  }
  func.func @transform_14(%arg0: i32) -> (i32, i32, i32) {
    %c0_i32 = arith.constant 0 : i32
    %c0_i32_0 = arith.constant 0 : i32
    %c0_i32_1 = arith.constant 0 : i32
    return %arg0, %c0_i32, %c0_i32_0 : i32, i32, i32
  }
  func.func @transform_15(%arg0: i32) -> (i32, i32, i32) {
    %c0_i32 = arith.constant 0 : i32
    %c0_i32_0 = arith.constant 0 : i32
    %c0_i32_1 = arith.constant 0 : i32
    return %arg0, %c0_i32, %c0_i32_0 : i32, i32, i32
  }
  func.func @transform_16(%arg0: i32) -> (i32, i32, i32) {
    %c0_i32 = arith.constant 0 : i32
    %c0_i32_0 = arith.constant 0 : i32
    %c0_i32_1 = arith.constant 0 : i32
    return %arg0, %c0_i32, %c0_i32_0 : i32, i32, i32
  }
  func.func @transform_17(%arg0: i32) -> (i32, i32, i32) {
    %c0_i32 = arith.constant 0 : i32
    %c0_i32_0 = arith.constant 0 : i32
    %c0_i32_1 = arith.constant 0 : i32
    return %arg0, %c0_i32, %c0_i32_0 : i32, i32, i32
  }
  func.func @transform_18(%arg0: i32) -> (i32, i32, i32) {
    %c0_i32 = arith.constant 0 : i32
    %c0_i32_0 = arith.constant 0 : i32
    %c0_i32_1 = arith.constant 0 : i32
    return %arg0, %c0_i32, %c0_i32_0 : i32, i32, i32
  }
  func.func @transform_19(%arg0: i32) -> (i32, i32, i32) {
    %c0_i32 = arith.constant 0 : i32
    %c0_i32_0 = arith.constant 0 : i32
    %c0_i32_1 = arith.constant 0 : i32
    return %arg0, %c0_i32, %c0_i32_0 : i32, i32, i32
  }
  func.func @transform_20(%arg0: i32) -> (i32, i32, i32) {
    %c0_i32 = arith.constant 0 : i32
    %c0_i32_0 = arith.constant 0 : i32
    %c0_i32_1 = arith.constant 0 : i32
    return %arg0, %c0_i32, %c0_i32_0 : i32, i32, i32
  }
  func.func @transform_21(%arg0: i32) -> (i32, i32, i32) {
    %c0_i32 = arith.constant 0 : i32
    %c0_i32_0 = arith.constant 0 : i32
    %c0_i32_1 = arith.constant 0 : i32
    return %arg0, %c0_i32, %c0_i32_0 : i32, i32, i32
  }
  func.func @transform_22(%arg0: i32) -> (i32, i32, i32) {
    %c0_i32 = arith.constant 0 : i32
    %c0_i32_0 = arith.constant 0 : i32
    %c0_i32_1 = arith.constant 0 : i32
    return %arg0, %c0_i32, %c0_i32_0 : i32, i32, i32
  }
  func.func @transform_23(%arg0: i32) -> (i32, i32, i32) {
    %c0_i32 = arith.constant 0 : i32
    %c0_i32_0 = arith.constant 0 : i32
    %c0_i32_1 = arith.constant 0 : i32
    return %arg0, %c0_i32, %c0_i32_0 : i32, i32, i32
  }
  func.func @transform_24(%arg0: i32) -> (i32, i32) {
    %c0_i32 = arith.constant 0 : i32
    %c0_i32_0 = arith.constant 0 : i32
    %c0_i32_1 = arith.constant 0 : i32
    return %c0_i32, %c0_i32_0 : i32, i32
  }
}

</mosaic_0001>

<llo_original>
// kernel: tpu_custom_call.1
$region0: #{tpu_custom_call.1}
  #allocation0 [shape = 'u32[]', space=smem, size = 0x4, offset = 0x4, fixed_abs, tag = 'smem constant byte address 0x4 - core index']
  #allocation1 [shape = 'u32[144,128]{1,0:T(1,128)}', space=vmem, size = 0x12000, scoped, tag = 'internal scratch']
  #allocation2 [shape = 'f32[128,128]{1,0:T(8,128)}', space=vmem, size = 0x10000, scoped, tag = 'scratch operand']
  #allocation3 [shape = 'f32[8,128]{1,0:T(8,128)}', space=vmem, size = 0x1000, scoped, tag = 'scratch operand']
  #allocation4 [shape = 'bf16[128,128]{1,0:T(16,128)(2,1)}', space=vmem, size = 0x8000, scoped, tag = 'scratch operand']
  #allocation5 [shape = 'bf16[128,128]{1,0:T(16,128)(2,1)}', space=vmem, size = 0x8000, scoped, tag = 'scratch operand']
  #allocation6 [shape = 'bf16[128,8]{1,0:T(16,128)(2,1)}', space=vmem, size = 0x8000, scoped, tag = 'scratch operand']
  #allocation7 [shape = 'bf16[8,128]{1,0:T(8,128)(2,1)}', space=vmem, size = 0x800, scoped, tag = 'scratch operand']
  %s0 = inlined_call_operand.hbm [shape: f32[128,128], index: 0, kind: input, shape index: {}]
  %s1 = inlined_call_operand.vmem [shape: s32[128,1], index: 1, kind: input, shape index: {}]
  %s2 = inlined_call_operand.hbm [shape: s32[1,128], index: 2, kind: input, shape index: {}]
  %s3 = inlined_call_operand.vmem [shape: s32[128,1], index: 3, kind: input, shape index: {}]
  %s4 = inlined_call_operand.vmem [shape: s32[1,128], index: 4, kind: input, shape index: {}]
  %s5 = inlined_call_operand.vmem [shape: f32[128,1], index: 5, kind: input, shape index: {}]
  %s6 = inlined_call_operand.vmem [shape: f32[1,128], index: 6, kind: input, shape index: {}]
  %s7 = inlined_call_operand.vmem [shape: f32[1,128], index: 7, kind: input, shape index: {}]
  %s8 = inlined_call_operand.vmem [shape: f32[128,1], index: 8, kind: input, shape index: {}]
  %s9 = inlined_call_operand.vmem [shape: f32[128,1], index: 9, kind: input, shape index: {}]
  %s10 = inlined_call_operand.vmem [shape: bf16[128,128], index: 10, kind: input, shape index: {}]
  %s11 = inlined_call_operand.vmem [shape: f32[1,128], index: 11, kind: input, shape index: {}]
  %s12 = inlined_call_operand.hbm [shape: bf16[128,128], index: 12, kind: input, shape index: {}]
  %s13 = inlined_call_operand.vmem [shape: f32[1,128], index: 13, kind: input, shape index: {}]
  %s14 = inlined_call_operand.vmem [shape: bf16[3,128,128], index: 14, kind: input, shape index: {}]
  %s15 = inlined_call_operand.vmem [shape: f32[3,1,128], index: 15, kind: input, shape index: {}]
  %s16 = inlined_call_operand.vmem [shape: bf16[3,128,128], index: 16, kind: input, shape index: {}]
  %s17 = inlined_call_operand.vmem [shape: f32[3,1,128], index: 17, kind: input, shape index: {}]
  %s18 = inlined_call_operand.vmem [shape: bf16[3,128,128], index: 18, kind: input, shape index: {}]
  %s19 = inlined_call_operand.vmem [shape: f32[3,1,128], index: 19, kind: input, shape index: {}]
  %s20 = inlined_call_operand.hbm [shape: bf16[3,128,128], index: 20, kind: input, shape index: {}]
  %s21 = inlined_call_operand.vmem [shape: f32[3,1,128], index: 21, kind: input, shape index: {}]
  %s22 = inlined_call_operand.hbm [shape: bf16[3,128,128], index: 22, kind: input, shape index: {}]
  %s23 = inlined_call_operand.vmem [shape: f32[3,1,128], index: 23, kind: input, shape index: {}]
  %s24 = inlined_call_operand.hbm [shape: f32[8,128], index: 24, kind: output, shape index: {}]
  %s25 = sld [smem:[#allocation0]]
  $region161: #{tpu_custom_call.1} parent=0
    _
  %s27 = ssub.s32 1, %s25
  %s28 = scalar_select 0, %s27, %s25
  $region1: #{tpu_custom_call.1} parent=0
    #allocation8 [shape = 'u8[65536]{0}', space=vmem, size = 0x10000, scoped, tag = 'input window, operand 0, single buffered']
    #allocation9 [shape = 's32[2]{0}', space=sflag, size = 0x8, scoped, tag = 'scoped memory for tpu_custom_call.1']
    #allocation10 [shape = 's32[2]{0}', space=sflag, size = 0x8, scoped, tag = 'scoped memory for tpu_custom_call.1']
    #allocation11 [shape = 'u8[512]{0}', space=vmem, size = 0x400, scoped, tag = 'input window, operand 2, single buffered']
    #allocation12 [shape = 's32[1]{0}', space=sflag, size = 0x4, scoped, tag = 'scoped memory for tpu_custom_call.1']
    #allocation13 [shape = 'u8[32768]{0}', space=vmem, size = 0x8000, scoped, tag = 'input window, operand 12, single buffered']
    #allocation14 [shape = 'u8[65536]{0}', space=vmem, size = 0x10000, scoped, tag = 'input window, operand 20']
    #allocation15 [shape = 's32[2]{0}', space=sflag, size = 0x8, scoped, tag = 'scoped memory for tpu_custom_call.1']
    #allocation16 [shape = 'u8[65536]{0}', space=vmem, size = 0x10000, scoped, tag = 'input window, operand 22']
    #allocation17 [shape = 'u8[4096]{0}', space=vmem, size = 0x1000, scoped, tag = 'output window, operand 0, single buffered']
    %29 = vsyncpa [#allocation9], 0
    %30 = vsyncpa [#allocation12], 0
    %31 = vsyncpa [#allocation15], 0
    %s32 = scalar_lea.sflag [#allocation15], 1
    %33 = vsyncpa %s32, 0
    %34 = vsyncpa [#allocation10], 0
    loop: start=0, step=1, limit=5
    $region2: #{tpu_custom_call.1} parent=1 // loop_pre_header
      _
    $region3: #{tpu_custom_call.1} parent=1 // loop_header
      %s36 = sphi 0, %s40
      %p37 = scmp.ge.s32.totalorder %s36, 5
      %s44 = sphi 0, %s44
      %s46 = sphi 0, %s44
      %s47 = sphi 0, %s46
      %s61 = sphi 0, %s47
      %s65 = sphi 0, %s65
      %s67 = sphi 0, %s65
      %s68 = sphi 0, %s67
      %s82 = sphi 0, %s68
      %s86 = sphi 0, %s86
      %s88 = sphi 0, %s86
      %s89 = sphi 0, %s88
      %s103 = sphi 0, %s89
      %s107 = sphi 0, %s107
      %s109 = sphi 0, %s107
      %s110 = sphi 0, %s109
      %s124 = sphi 0, %s110
      %s128 = sphi 0, %s128
      %s130 = sphi 0, %s128
      %s131 = sphi 0, %s130
      %s145 = sphi 0, %s131
      %s149 = sphi 0, %s149
      %s151 = sphi 0, %s149
      %s152 = sphi 0, %s151
      %s166 = sphi 0, %s152
      %s170 = sphi 0, %s170
      %s172 = sphi 0, %s170
      %s173 = sphi 0, %s172
      %s187 = sphi 0, %s173
      %s191 = sphi 0, %s191
      %s193 = sphi 0, %s191
      %s194 = sphi 0, %s193
      %s208 = sphi 0, %s194
      %s212 = sphi 0, %s212
      %s214 = sphi 0, %s212
      %s215 = sphi 0, %s214
      %s229 = sphi 0, %s215
      %s233 = sphi 0, %s233
      %s235 = sphi 0, %s233
      %s236 = sphi 0, %s235
      %s250 = sphi 0, %s236
      %s254 = sphi 0, %s254
      %s256 = sphi 0, %s254
      %s257 = sphi 0, %s256
      %s271 = sphi 0, %s257
      %s275 = sphi 0, %s275
      %s277 = sphi 0, %s275
      %s278 = sphi 0, %s277
      %s292 = sphi 0, %s278
      %s296 = sphi 0, %s296
      %s298 = sphi 0, %s296
      %s299 = sphi 0, %s298
      %s313 = sphi 0, %s299
      %s317 = sphi 0, %s317
      %s319 = sphi 0, %s317
      %s320 = sphi 0, %s319
      %s334 = sphi 0, %s320
      %s340 = sphi 0, %s342
      %s343 = sphi 0, %s340
      %s344 = sphi 0, %s343
      %s360 = sphi 0, %s344
      %s366 = sphi 0, %s368
      %s369 = sphi 0, %s366
      %s370 = sphi 0, %s369
      %s386 = sphi 0, %s370
      %s392 = sphi 0, %s394
      %s395 = sphi 0, %s392
      %s396 = sphi 0, %s395
      %s412 = sphi 0, %s396
      %s418 = sphi 0, %s420
      %s421 = sphi 0, %s418
      %s422 = sphi 0, %s421
      %s438 = sphi 0, %s422
      %s444 = sphi 0, %s446
      %s447 = sphi 0, %s444
      %s448 = sphi 0, %s447
      %s464 = sphi 0, %s448
      %s470 = sphi 0, %s472
      %s473 = sphi 0, %s470
      %s474 = sphi 0, %s473
      %s490 = sphi 0, %s474
      %s496 = sphi 0, %s498
      %s499 = sphi 0, %s496
      %s500 = sphi 0, %s499
      %s516 = sphi 0, %s500
      %s522 = sphi 0, %s524
      %s525 = sphi 0, %s522
      %s526 = sphi 0, %s525
      %s542 = sphi 0, %s526
      %s548 = sphi 0, %s550
      %s551 = sphi 0, %s548
      %s552 = sphi 0, %s551
      %s568 = sphi 0, %s552
      %s574 = sphi 0, %s576
      %s577 = sphi 0, %s574
      %s578 = sphi 0, %s577
      %s594 = sphi 0, %s578
      %s598 = sphi 0, %s598
      %s600 = sphi 0, %s598
      %s601 = sphi 0, %s600
      %s615 = sphi 0, %s601
    $region4: #{tpu_custom_call.1} parent=1 // loop_header_branch
      %39 = sbr.rel (%p37) target = $region8
    $region5: #{tpu_custom_call.1} parent=1 // loop_body
      %s41 = ssub.s32 %s36, 1
      %s42 = ssub.s32 %s36, 2
      %s43 = sadd.s32 %s36, 1
      %s45 = sadd.s32 %s44, 1
      %p48 = scmp.eq.s32.totalorder %s36, 2
      %p49 = scmp.ne.s32.totalorder %s44, %s46
      %p50 = scmp.eq.s32.totalorder %s36, 0
      %p51 = por %p49, %p50
      %p52 = scmp.ne.s32.totalorder %s44, %s46
      %p53 = scmp.eq.s32.totalorder %s41, 2
      %p54 = por %p52, %p53
      %p55 = scmp.ne.s32.totalorder %s46, %s47
      %p56 = scmp.eq.s32.totalorder %s41, 0
      %p57 = por %p55, %p56
      %p58 = scmp.ne.s32.totalorder %s46, %s47
      %p59 = scmp.eq.s32.totalorder %s42, 2
      %p60 = por %p58, %p59
      %p62 = scmp.ne.s32.totalorder %s47, %s61
      %p63 = scmp.eq.s32.totalorder %s42, 0
      %p64 = por %p62, %p63
      %s66 = sadd.s32 %s65, 1
      %p69 = scmp.eq.s32.totalorder %s36, 2
      %p70 = scmp.ne.s32.totalorder %s65, %s67
      %p71 = scmp.eq.s32.totalorder %s36, 0
      %p72 = por %p70, %p71
      %p73 = scmp.ne.s32.totalorder %s65, %s67
      %p74 = scmp.eq.s32.totalorder %s41, 2
      %p75 = por %p73, %p74
      %p76 = scmp.ne.s32.totalorder %s67, %s68
      %p77 = scmp.eq.s32.totalorder %s41, 0
      %p78 = por %p76, %p77
      %p79 = scmp.ne.s32.totalorder %s67, %s68
      %p80 = scmp.eq.s32.totalorder %s42, 2
      %p81 = por %p79, %p80
      %p83 = scmp.ne.s32.totalorder %s68, %s82
      %p84 = scmp.eq.s32.totalorder %s42, 0
      %p85 = por %p83, %p84
      %s87 = sadd.s32 %s86, 1
      %p90 = scmp.eq.s32.totalorder %s36, 2
      %p91 = scmp.ne.s32.totalorder %s86, %s88
      %p92 = scmp.eq.s32.totalorder %s36, 0
      %p93 = por %p91, %p92
      %p94 = scmp.ne.s32.totalorder %s86, %s88
      %p95 = scmp.eq.s32.totalorder %s41, 2
      %p96 = por %p94, %p95
      %p97 = scmp.ne.s32.totalorder %s88, %s89
      %p98 = scmp.eq.s32.totalorder %s41, 0
      %p99 = por %p97, %p98
      %p100 = scmp.ne.s32.totalorder %s88, %s89
      %p101 = scmp.eq.s32.totalorder %s42, 2
      %p102 = por %p100, %p101
      %p104 = scmp.ne.s32.totalorder %s89, %s103
      %p105 = scmp.eq.s32.totalorder %s42, 0
      %p106 = por %p104, %p105
      %s108 = sadd.s32 %s107, 1
      %p111 = scmp.eq.s32.totalorder %s36, 2
      %p112 = scmp.ne.s32.totalorder %s107, %s109
      %p113 = scmp.eq.s32.totalorder %s36, 0
      %p114 = por %p112, %p113
      %p115 = scmp.ne.s32.totalorder %s107, %s109
      %p116 = scmp.eq.s32.totalorder %s41, 2
      %p117 = por %p115, %p116
      %p118 = scmp.ne.s32.totalorder %s109, %s110
      %p119 = scmp.eq.s32.totalorder %s41, 0
      %p120 = por %p118, %p119
      %p121 = scmp.ne.s32.totalorder %s109, %s110
      %p122 = scmp.eq.s32.totalorder %s42, 2
      %p123 = por %p121, %p122
      %p125 = scmp.ne.s32.totalorder %s110, %s124
      %p126 = scmp.eq.s32.totalorder %s42, 0
      %p127 = por %p125, %p126
      %s129 = sadd.s32 %s128, 1
      %p132 = scmp.eq.s32.totalorder %s36, 2
      %p133 = scmp.ne.s32.totalorder %s128, %s130
      %p134 = scmp.eq.s32.totalorder %s36, 0
      %p135 = por %p133, %p134
      %p136 = scmp.ne.s32.totalorder %s128, %s130
      %p137 = scmp.eq.s32.totalorder %s41, 2
      %p138 = por %p136, %p137
      %p139 = scmp.ne.s32.totalorder %s130, %s131
      %p140 = scmp.eq.s32.totalorder %s41, 0
      %p141 = por %p139, %p140
      %p142 = scmp.ne.s32.totalorder %s130, %s131
      %p143 = scmp.eq.s32.totalorder %s42, 2
      %p144 = por %p142, %p143
      %p146 = scmp.ne.s32.totalorder %s131, %s145
      %p147 = scmp.eq.s32.totalorder %s42, 0
      %p148 = por %p146, %p147
      %s150 = sadd.s32 %s149, 1
      %p153 = scmp.eq.s32.totalorder %s36, 2
      %p154 = scmp.ne.s32.totalorder %s149, %s151
      %p155 = scmp.eq.s32.totalorder %s36, 0
      %p156 = por %p154, %p155
      %p157 = scmp.ne.s32.totalorder %s149, %s151
      %p158 = scmp.eq.s32.totalorder %s41, 2
      %p159 = por %p157, %p158
      %p160 = scmp.ne.s32.totalorder %s151, %s152
      %p161 = scmp.eq.s32.totalorder %s41, 0
      %p162 = por %p160, %p161
      %p163 = scmp.ne.s32.totalorder %s151, %s152
      %p164 = scmp.eq.s32.totalorder %s42, 2
      %p165 = por %p163, %p164
      %p167 = scmp.ne.s32.totalorder %s152, %s166
      %p168 = scmp.eq.s32.totalorder %s42, 0
      %p169 = por %p167, %p168
      %s171 = sadd.s32 %s170, 1
      %p174 = scmp.eq.s32.totalorder %s36, 2
      %p175 = scmp.ne.s32.totalorder %s170, %s172
      %p176 = scmp.eq.s32.totalorder %s36, 0
      %p177 = por %p175, %p176
      %p178 = scmp.ne.s32.totalorder %s170, %s172
      %p179 = scmp.eq.s32.totalorder %s41, 2
      %p180 = por %p178, %p179
      %p181 = scmp.ne.s32.totalorder %s172, %s173
      %p182 = scmp.eq.s32.totalorder %s41, 0
      %p183 = por %p181, %p182
      %p184 = scmp.ne.s32.totalorder %s172, %s173
      %p185 = scmp.eq.s32.totalorder %s42, 2
      %p186 = por %p184, %p185
      %p188 = scmp.ne.s32.totalorder %s173, %s187
      %p189 = scmp.eq.s32.totalorder %s42, 0
      %p190 = por %p188, %p189
      %s192 = sadd.s32 %s191, 1
      %p195 = scmp.eq.s32.totalorder %s36, 2
      %p196 = scmp.ne.s32.totalorder %s191, %s193
      %p197 = scmp.eq.s32.totalorder %s36, 0
      %p198 = por %p196, %p197
      %p199 = scmp.ne.s32.totalorder %s191, %s193
      %p200 = scmp.eq.s32.totalorder %s41, 2
      %p201 = por %p199, %p200
      %p202 = scmp.ne.s32.totalorder %s193, %s194
      %p203 = scmp.eq.s32.totalorder %s41, 0
      %p204 = por %p202, %p203
      %p205 = scmp.ne.s32.totalorder %s193, %s194
      %p206 = scmp.eq.s32.totalorder %s42, 2
      %p207 = por %p205, %p206
      %p209 = scmp.ne.s32.totalorder %s194, %s208
      %p210 = scmp.eq.s32.totalorder %s42, 0
      %p211 = por %p209, %p210
      %s213 = sadd.s32 %s212, 1
      %p216 = scmp.eq.s32.totalorder %s36, 2
      %p217 = scmp.ne.s32.totalorder %s212, %s214
      %p218 = scmp.eq.s32.totalorder %s36, 0
      %p219 = por %p217, %p218
      %p220 = scmp.ne.s32.totalorder %s212, %s214
      %p221 = scmp.eq.s32.totalorder %s41, 2
      %p222 = por %p220, %p221
      %p223 = scmp.ne.s32.totalorder %s214, %s215
      %p224 = scmp.eq.s32.totalorder %s41, 0
      %p225 = por %p223, %p224
      %p226 = scmp.ne.s32.totalorder %s214, %s215
      %p227 = scmp.eq.s32.totalorder %s42, 2
      %p228 = por %p226, %p227
      %p230 = scmp.ne.s32.totalorder %s215, %s229
      %p231 = scmp.eq.s32.totalorder %s42, 0
      %p232 = por %p230, %p231
      %s234 = sadd.s32 %s233, 1
      %p237 = scmp.eq.s32.totalorder %s36, 2
      %p238 = scmp.ne.s32.totalorder %s233, %s235
      %p239 = scmp.eq.s32.totalorder %s36, 0
      %p240 = por %p238, %p239
      %p241 = scmp.ne.s32.totalorder %s233, %s235
      %p242 = scmp.eq.s32.totalorder %s41, 2
      %p243 = por %p241, %p242
      %p244 = scmp.ne.s32.totalorder %s235, %s236
      %p245 = scmp.eq.s32.totalorder %s41, 0
      %p246 = por %p244, %p245
      %p247 = scmp.ne.s32.totalorder %s235, %s236
      %p248 = scmp.eq.s32.totalorder %s42, 2
      %p249 = por %p247, %p248
      %p251 = scmp.ne.s32.totalorder %s236, %s250
      %p252 = scmp.eq.s32.totalorder %s42, 0
      %p253 = por %p251, %p252
      %s255 = sadd.s32 %s254, 1
      %p258 = scmp.eq.s32.totalorder %s36, 2
      %p259 = scmp.ne.s32.totalorder %s254, %s256
      %p260 = scmp.eq.s32.totalorder %s36, 0
      %p261 = por %p259, %p260
      %p262 = scmp.ne.s32.totalorder %s254, %s256
      %p263 = scmp.eq.s32.totalorder %s41, 2
      %p264 = por %p262, %p263
      %p265 = scmp.ne.s32.totalorder %s256, %s257
      %p266 = scmp.eq.s32.totalorder %s41, 0
      %p267 = por %p265, %p266
      %p268 = scmp.ne.s32.totalorder %s256, %s257
      %p269 = scmp.eq.s32.totalorder %s42, 2
      %p270 = por %p268, %p269
      %p272 = scmp.ne.s32.totalorder %s257, %s271
      %p273 = scmp.eq.s32.totalorder %s42, 0
      %p274 = por %p272, %p273
      %s276 = sadd.s32 %s275, 1
      %p279 = scmp.eq.s32.totalorder %s36, 2
      %p280 = scmp.ne.s32.totalorder %s275, %s277
      %p281 = scmp.eq.s32.totalorder %s36, 0
      %p282 = por %p280, %p281
      %p283 = scmp.ne.s32.totalorder %s275, %s277
      %p284 = scmp.eq.s32.totalorder %s41, 2
      %p285 = por %p283, %p284
      %p286 = scmp.ne.s32.totalorder %s277, %s278
      %p287 = scmp.eq.s32.totalorder %s41, 0
      %p288 = por %p286, %p287
      %p289 = scmp.ne.s32.totalorder %s277, %s278
      %p290 = scmp.eq.s32.totalorder %s42, 2
      %p291 = por %p289, %p290
      %p293 = scmp.ne.s32.totalorder %s278, %s292
      %p294 = scmp.eq.s32.totalorder %s42, 0
      %p295 = por %p293, %p294
      %s297 = sadd.s32 %s296, 1
      %p300 = scmp.eq.s32.totalorder %s36, 2
      %p301 = scmp.ne.s32.totalorder %s296, %s298
      %p302 = scmp.eq.s32.totalorder %s36, 0
      %p303 = por %p301, %p302
      %p304 = scmp.ne.s32.totalorder %s296, %s298
      %p305 = scmp.eq.s32.totalorder %s41, 2
      %p306 = por %p304, %p305
      %p307 = scmp.ne.s32.totalorder %s298, %s299
      %p308 = scmp.eq.s32.totalorder %s41, 0
      %p309 = por %p307, %p308
      %p310 = scmp.ne.s32.totalorder %s298, %s299
      %p311 = scmp.eq.s32.totalorder %s42, 2
      %p312 = por %p310, %p311
      %p314 = scmp.ne.s32.totalorder %s299, %s313
      %p315 = scmp.eq.s32.totalorder %s42, 0
      %p316 = por %p314, %p315
      %s318 = sadd.s32 %s317, 1
      %p321 = scmp.eq.s32.totalorder %s36, 2
      %p322 = scmp.ne.s32.totalorder %s317, %s319
      %p323 = scmp.eq.s32.totalorder %s36, 0
      %p324 = por %p322, %p323
      %p325 = scmp.ne.s32.totalorder %s317, %s319
      %p326 = scmp.eq.s32.totalorder %s41, 2
      %p327 = por %p325, %p326
      %p328 = scmp.ne.s32.totalorder %s319, %s320
      %p329 = scmp.eq.s32.totalorder %s41, 0
      %p330 = por %p328, %p329
      %p331 = scmp.ne.s32.totalorder %s319, %s320
      %p332 = scmp.eq.s32.totalorder %s42, 2
      %p333 = por %p331, %p332
      %p335 = scmp.ne.s32.totalorder %s320, %s334
      %p336 = scmp.eq.s32.totalorder %s42, 0
      %p337 = por %p335, %p336
      %s338 = ssub.s32 %s36, %s43
      %p339 = scmp.eq.s32.totalorder %s338, 0
      %s341 = sadd.s32 %s340, 1
      %s342 = scalar_select %p339, %s340, %s341
      %p345 = pneg %p339
      %p346 = scmp.eq.s32.totalorder %s36, 2
      %p347 = por %p345, %p346
      %p348 = scmp.ne.s32.totalorder %s340, %s343
      %p349 = scmp.eq.s32.totalorder %s36, 0
      %p350 = por %p348, %p349
      %p351 = scmp.ne.s32.totalorder %s340, %s343
      %p352 = scmp.eq.s32.totalorder %s41, 2
      %p353 = por %p351, %p352
      %p354 = scmp.ne.s32.totalorder %s343, %s344
      %p355 = scmp.eq.s32.totalorder %s41, 0
      %p356 = por %p354, %p355
      %p357 = scmp.ne.s32.totalorder %s343, %s344
      %p358 = scmp.eq.s32.totalorder %s42, 2
      %p359 = por %p357, %p358
      %p361 = scmp.ne.s32.totalorder %s344, %s360
      %p362 = scmp.eq.s32.totalorder %s42, 0
      %p363 = por %p361, %p362
      %s364 = ssub.s32 %s36, %s43
      %p365 = scmp.eq.s32.totalorder %s364, 0
      %s367 = sadd.s32 %s366, 1
      %s368 = scalar_select %p365, %s366, %s367
      %p371 = pneg %p365
      %p372 = scmp.eq.s32.totalorder %s36, 2
      %p373 = por %p371, %p372
      %p374 = scmp.ne.s32.totalorder %s366, %s369
      %p375 = scmp.eq.s32.totalorder %s36, 0
      %p376 = por %p374, %p375
      %p377 = scmp.ne.s32.totalorder %s366, %s369
      %p378 = scmp.eq.s32.totalorder %s41, 2
      %p379 = por %p377, %p378
      %p380 = scmp.ne.s32.totalorder %s369, %s370
      %p381 = scmp.eq.s32.totalorder %s41, 0
      %p382 = por %p380, %p381
      %p383 = scmp.ne.s32.totalorder %s369, %s370
      %p384 = scmp.eq.s32.totalorder %s42, 2
      %p385 = por %p383, %p384
      %p387 = scmp.ne.s32.totalorder %s370, %s386
      %p388 = scmp.eq.s32.totalorder %s42, 0
      %p389 = por %p387, %p388
      %s390 = ssub.s32 %s36, %s43
      %p391 = scmp.eq.s32.totalorder %s390, 0
      %s393 = sadd.s32 %s392, 1
      %s394 = scalar_select %p391, %s392, %s393
      %p397 = pneg %p391
      %p398 = scmp.eq.s32.totalorder %s36, 2
      %p399 = por %p397, %p398
      %p400 = scmp.ne.s32.totalorder %s392, %s395
      %p401 = scmp.eq.s32.totalorder %s36, 0
      %p402 = por %p400, %p401
      %p403 = scmp.ne.s32.totalorder %s392, %s395
      %p404 = scmp.eq.s32.totalorder %s41, 2
      %p405 = por %p403, %p404
      %p406 = scmp.ne.s32.totalorder %s395, %s396
      %p407 = scmp.eq.s32.totalorder %s41, 0
      %p408 = por %p406, %p407
      %p409 = scmp.ne.s32.totalorder %s395, %s396
      %p410 = scmp.eq.s32.totalorder %s42, 2
      %p411 = por %p409, %p410
      %p413 = scmp.ne.s32.totalorder %s396, %s412
      %p414 = scmp.eq.s32.totalorder %s42, 0
      %p415 = por %p413, %p414
      %s416 = ssub.s32 %s36, %s43
      %p417 = scmp.eq.s32.totalorder %s416, 0
      %s419 = sadd.s32 %s418, 1
      %s420 = scalar_select %p417, %s418, %s419
      %p423 = pneg %p417
      %p424 = scmp.eq.s32.totalorder %s36, 2
      %p425 = por %p423, %p424
      %p426 = scmp.ne.s32.totalorder %s418, %s421
      %p427 = scmp.eq.s32.totalorder %s36, 0
      %p428 = por %p426, %p427
      %p429 = scmp.ne.s32.totalorder %s418, %s421
      %p430 = scmp.eq.s32.totalorder %s41, 2
      %p431 = por %p429, %p430
      %p432 = scmp.ne.s32.totalorder %s421, %s422
      %p433 = scmp.eq.s32.totalorder %s41, 0
      %p434 = por %p432, %p433
      %p435 = scmp.ne.s32.totalorder %s421, %s422
      %p436 = scmp.eq.s32.totalorder %s42, 2
      %p437 = por %p435, %p436
      %p439 = scmp.ne.s32.totalorder %s422, %s438
      %p440 = scmp.eq.s32.totalorder %s42, 0
      %p441 = por %p439, %p440
      %s442 = ssub.s32 %s36, %s43
      %p443 = scmp.eq.s32.totalorder %s442, 0
      %s445 = sadd.s32 %s444, 1
      %s446 = scalar_select %p443, %s444, %s445
      %p449 = pneg %p443
      %p450 = scmp.eq.s32.totalorder %s36, 2
      %p451 = por %p449, %p450
      %p452 = scmp.ne.s32.totalorder %s444, %s447
      %p453 = scmp.eq.s32.totalorder %s36, 0
      %p454 = por %p452, %p453
      %p455 = scmp.ne.s32.totalorder %s444, %s447
      %p456 = scmp.eq.s32.totalorder %s41, 2
      %p457 = por %p455, %p456
      %p458 = scmp.ne.s32.totalorder %s447, %s448
      %p459 = scmp.eq.s32.totalorder %s41, 0
      %p460 = por %p458, %p459
      %p461 = scmp.ne.s32.totalorder %s447, %s448
      %p462 = scmp.eq.s32.totalorder %s42, 2
      %p463 = por %p461, %p462
      %p465 = scmp.ne.s32.totalorder %s448, %s464
      %p466 = scmp.eq.s32.totalorder %s42, 0
      %p467 = por %p465, %p466
      %s468 = ssub.s32 %s36, %s43
      %p469 = scmp.eq.s32.totalorder %s468, 0
      %s471 = sadd.s32 %s470, 1
      %s472 = scalar_select %p469, %s470, %s471
      %p475 = pneg %p469
      %p476 = scmp.eq.s32.totalorder %s36, 2
      %p477 = por %p475, %p476
      %p478 = scmp.ne.s32.totalorder %s470, %s473
      %p479 = scmp.eq.s32.totalorder %s36, 0
      %p480 = por %p478, %p479
      %p481 = scmp.ne.s32.totalorder %s470, %s473
      %p482 = scmp.eq.s32.totalorder %s41, 2
      %p483 = por %p481, %p482
      %p484 = scmp.ne.s32.totalorder %s473, %s474
      %p485 = scmp.eq.s32.totalorder %s41, 0
      %p486 = por %p484, %p485
      %p487 = scmp.ne.s32.totalorder %s473, %s474
      %p488 = scmp.eq.s32.totalorder %s42, 2
      %p489 = por %p487, %p488
      %p491 = scmp.ne.s32.totalorder %s474, %s490
      %p492 = scmp.eq.s32.totalorder %s42, 0
      %p493 = por %p491, %p492
      %s494 = ssub.s32 %s36, %s43
      %p495 = scmp.eq.s32.totalorder %s494, 0
      %s497 = sadd.s32 %s496, 1
      %s498 = scalar_select %p495, %s496, %s497
      %p501 = pneg %p495
      %p502 = scmp.eq.s32.totalorder %s36, 2
      %p503 = por %p501, %p502
      %p504 = scmp.ne.s32.totalorder %s496, %s499
      %p505 = scmp.eq.s32.totalorder %s36, 0
      %p506 = por %p504, %p505
      %p507 = scmp.ne.s32.totalorder %s496, %s499
      %p508 = scmp.eq.s32.totalorder %s41, 2
      %p509 = por %p507, %p508
      %p510 = scmp.ne.s32.totalorder %s499, %s500
      %p511 = scmp.eq.s32.totalorder %s41, 0
      %p512 = por %p510, %p511
      %p513 = scmp.ne.s32.totalorder %s499, %s500
      %p514 = scmp.eq.s32.totalorder %s42, 2
      %p515 = por %p513, %p514
      %p517 = scmp.ne.s32.totalorder %s500, %s516
      %p518 = scmp.eq.s32.totalorder %s42, 0
      %p519 = por %p517, %p518
      %s520 = ssub.s32 %s36, %s43
      %p521 = scmp.eq.s32.totalorder %s520, 0
      %s523 = sadd.s32 %s522, 1
      %s524 = scalar_select %p521, %s522, %s523
      %p527 = pneg %p521
      %p528 = scmp.eq.s32.totalorder %s36, 2
      %p529 = por %p527, %p528
      %p530 = scmp.ne.s32.totalorder %s522, %s525
      %p531 = scmp.eq.s32.totalorder %s36, 0
      %p532 = por %p530, %p531
      %p533 = scmp.ne.s32.totalorder %s522, %s525
      %p534 = scmp.eq.s32.totalorder %s41, 2
      %p535 = por %p533, %p534
      %p536 = scmp.ne.s32.totalorder %s525, %s526
      %p537 = scmp.eq.s32.totalorder %s41, 0
      %p538 = por %p536, %p537
      %p539 = scmp.ne.s32.totalorder %s525, %s526
      %p540 = scmp.eq.s32.totalorder %s42, 2
      %p541 = por %p539, %p540
      %p543 = scmp.ne.s32.totalorder %s526, %s542
      %p544 = scmp.eq.s32.totalorder %s42, 0
      %p545 = por %p543, %p544
      %s546 = ssub.s32 %s36, %s43
      %p547 = scmp.eq.s32.totalorder %s546, 0
      %s549 = sadd.s32 %s548, 1
      %s550 = scalar_select %p547, %s548, %s549
      %p553 = pneg %p547
      %p554 = scmp.eq.s32.totalorder %s36, 2
      %p555 = por %p553, %p554
      %p556 = scmp.ne.s32.totalorder %s548, %s551
      %p557 = scmp.eq.s32.totalorder %s36, 0
      %p558 = por %p556, %p557
      %p559 = scmp.ne.s32.totalorder %s548, %s551
      %p560 = scmp.eq.s32.totalorder %s41, 2
      %p561 = por %p559, %p560
      %p562 = scmp.ne.s32.totalorder %s551, %s552
      %p563 = scmp.eq.s32.totalorder %s41, 0
      %p564 = por %p562, %p563
      %p565 = scmp.ne.s32.totalorder %s551, %s552
      %p566 = scmp.eq.s32.totalorder %s42, 2
      %p567 = por %p565, %p566
      %p569 = scmp.ne.s32.totalorder %s552, %s568
      %p570 = scmp.eq.s32.totalorder %s42, 0
      %p571 = por %p569, %p570
      %s572 = ssub.s32 %s36, %s43
      %p573 = scmp.eq.s32.totalorder %s572, 0
      %s575 = sadd.s32 %s574, 1
      %s576 = scalar_select %p573, %s574, %s575
      %p579 = pneg %p573
      %p580 = scmp.eq.s32.totalorder %s36, 2
      %p581 = por %p579, %p580
      %p582 = scmp.ne.s32.totalorder %s574, %s577
      %p583 = scmp.eq.s32.totalorder %s36, 0
      %p584 = por %p582, %p583
      %p585 = scmp.ne.s32.totalorder %s574, %s577
      %p586 = scmp.eq.s32.totalorder %s41, 2
      %p587 = por %p585, %p586
      %p588 = scmp.ne.s32.totalorder %s577, %s578
      %p589 = scmp.eq.s32.totalorder %s41, 0
      %p590 = por %p588, %p589
      %p591 = scmp.ne.s32.totalorder %s577, %s578
      %p592 = scmp.eq.s32.totalorder %s42, 2
      %p593 = por %p591, %p592
      %p595 = scmp.ne.s32.totalorder %s578, %s594
      %p596 = scmp.eq.s32.totalorder %s42, 0
      %p597 = por %p595, %p596
      %s599 = sadd.s32 %s598, 1
      %p602 = scmp.eq.s32.totalorder %s36, 2
      %p603 = scmp.ne.s32.totalorder %s598, %s600
      %p604 = scmp.eq.s32.totalorder %s36, 0
      %p605 = por %p603, %p604
      %p606 = scmp.ne.s32.totalorder %s598, %s600
      %p607 = scmp.eq.s32.totalorder %s41, 2
      %p608 = por %p606, %p607
      %p609 = scmp.ne.s32.totalorder %s600, %s601
      %p610 = scmp.eq.s32.totalorder %s41, 0
      %p611 = por %p609, %p610
      %p612 = scmp.ne.s32.totalorder %s600, %s601
      %p613 = scmp.eq.s32.totalorder %s42, 2
      %p614 = por %p612, %p613
      %p616 = scmp.ne.s32.totalorder %s601, %s615
      %p617 = scmp.eq.s32.totalorder %s42, 0
      %p618 = por %p616, %p617
      %p619 = scmp.le.s32.totalorder 1, %s36
      %p620 = scmp.lt.s32.totalorder %s36, 4
      %p621 = pnand %p619, %p620
      %p622 = pneg %p621
      // Predicated region
      $region9: #{tpu_custom_call.1} parent=5 // pred_check
        _
      $region10: #{tpu_custom_call.1} parent=5 // pred_check_branch
        %624 = sbr.rel (%p621) target = $region12
      $region11: #{tpu_custom_call.1} parent=5 // pred_region
        %s625 = ssub.s32 %s36, 1
        // Predicated region
        $region13: #{tpu_custom_call.1} parent=11 // pred_check
          %p626 = pneg %p57
        $region14: #{tpu_custom_call.1} parent=11 // pred_check_branch
          %628 = sbr.rel (%p626) target = $region16
        $region15: #{tpu_custom_call.1} parent=11 // pred_region
          %s630 = ssub.s32 2048, 2048
          %631 = vsyncadd [#allocation9], %s630
          %s632 = sshll.u32 [#allocation8], 4
          %s633 = int_to_ptr.vmem [resolvable:$true] %s632
          %638 = dma.hbm_to_vmem [thread:$0]  %s0, 2048, %s633, [#allocation9], 128, 128, 8
        $region16: #{tpu_custom_call.1} parent=11 // pred_fallthru
          _
        // Predicated region
        $region17: #{tpu_custom_call.1} parent=11 // pred_check
          %p639 = pneg %p78
        $region18: #{tpu_custom_call.1} parent=11 // pred_check_branch
          %641 = sbr.rel (%p639) target = $region20
        $region19: #{tpu_custom_call.1} parent=11 // pred_region
          _
        $region20: #{tpu_custom_call.1} parent=11 // pred_fallthru
          _
        // Predicated region
        $region21: #{tpu_custom_call.1} parent=11 // pred_check
          %p642 = pneg %p99
        $region22: #{tpu_custom_call.1} parent=11 // pred_check_branch
          %644 = sbr.rel (%p642) target = $region24
        $region23: #{tpu_custom_call.1} parent=11 // pred_region
          %s646 = ssub.s32 16, 16
          %647 = vsyncadd [#allocation12], %s646
          %s649 = sshll.u32 [#allocation11], 4
          %s650 = int_to_ptr.vmem [resolvable:$true] %s649
          %652 = dma.hbm_to_vmem [thread:$0]  %s2, 16, %s650, [#allocation12]
        $region24: #{tpu_custom_call.1} parent=11 // pred_fallthru
          _
        // Predicated region
        $region25: #{tpu_custom_call.1} parent=11 // pred_check
          %p653 = pneg %p120
        $region26: #{tpu_custom_call.1} parent=11 // pred_check_branch
          %655 = sbr.rel (%p653) target = $region28
        $region27: #{tpu_custom_call.1} parent=11 // pred_region
          _
        $region28: #{tpu_custom_call.1} parent=11 // pred_fallthru
          _
        // Predicated region
        $region29: #{tpu_custom_call.1} parent=11 // pred_check
          %p656 = pneg %p141
        $region30: #{tpu_custom_call.1} parent=11 // pred_check_branch
          %658 = sbr.rel (%p656) target = $region32
        $region31: #{tpu_custom_call.1} parent=11 // pred_region
          _
        $region32: #{tpu_custom_call.1} parent=11 // pred_fallthru
          _
        // Predicated region
        $region33: #{tpu_custom_call.1} parent=11 // pred_check
          %p659 = pneg %p162
        $region34: #{tpu_custom_call.1} parent=11 // pred_check_branch
          %661 = sbr.rel (%p659) target = $region36
        $region35: #{tpu_custom_call.1} parent=11 // pred_region
          _
        $region36: #{tpu_custom_call.1} parent=11 // pred_fallthru
          _
        // Predicated region
        $region37: #{tpu_custom_call.1} parent=11 // pred_check
          %p662 = pneg %p183
        $region38: #{tpu_custom_call.1} parent=11 // pred_check_branch
          %664 = sbr.rel (%p662) target = $region40
        $region39: #{tpu_custom_call.1} parent=11 // pred_region
          _
        $region40: #{tpu_custom_call.1} parent=11 // pred_fallthru
          _
        // Predicated region
        $region41: #{tpu_custom_call.1} parent=11 // pred_check
          %p665 = pneg %p204
        $region42: #{tpu_custom_call.1} parent=11 // pred_check_branch
          %667 = sbr.rel (%p665) target = $region44
        $region43: #{tpu_custom_call.1} parent=11 // pred_region
          _
        $region44: #{tpu_custom_call.1} parent=11 // pred_fallthru
          _
        // Predicated region
        $region45: #{tpu_custom_call.1} parent=11 // pred_check
          %p668 = pneg %p225
        $region46: #{tpu_custom_call.1} parent=11 // pred_check_branch
          %670 = sbr.rel (%p668) target = $region48
        $region47: #{tpu_custom_call.1} parent=11 // pred_region
          _
        $region48: #{tpu_custom_call.1} parent=11 // pred_fallthru
          _
        // Predicated region
        $region49: #{tpu_custom_call.1} parent=11 // pred_check
          %p671 = pneg %p246
        $region50: #{tpu_custom_call.1} parent=11 // pred_check_branch
          %673 = sbr.rel (%p671) target = $region52
        $region51: #{tpu_custom_call.1} parent=11 // pred_region
          _
        $region52: #{tpu_custom_call.1} parent=11 // pred_fallthru
          _
        // Predicated region
        $region53: #{tpu_custom_call.1} parent=11 // pred_check
          %p674 = pneg %p267
        $region54: #{tpu_custom_call.1} parent=11 // pred_check_branch
          %676 = sbr.rel (%p674) target = $region56
        $region55: #{tpu_custom_call.1} parent=11 // pred_region
          _
        $region56: #{tpu_custom_call.1} parent=11 // pred_fallthru
          _
        // Predicated region
        $region57: #{tpu_custom_call.1} parent=11 // pred_check
          %p677 = pneg %p288
        $region58: #{tpu_custom_call.1} parent=11 // pred_check_branch
          %679 = sbr.rel (%p677) target = $region60
        $region59: #{tpu_custom_call.1} parent=11 // pred_region
          _
        $region60: #{tpu_custom_call.1} parent=11 // pred_fallthru
          _
        // Predicated region
        $region61: #{tpu_custom_call.1} parent=11 // pred_check
          %p680 = pneg %p309
        $region62: #{tpu_custom_call.1} parent=11 // pred_check_branch
          %682 = sbr.rel (%p680) target = $region64
        $region63: #{tpu_custom_call.1} parent=11 // pred_region
          %s684 = ssub.s32 1024, 1024
          %685 = vsyncadd [#allocation12], %s684
          %s686 = sshll.u32 [#allocation13], 4
          %s687 = int_to_ptr.vmem [resolvable:$true] %s686
          %692 = dma.hbm_to_vmem [thread:$0]  %s12, 1024, %s687, [#allocation12], 64, 64, 4
        $region64: #{tpu_custom_call.1} parent=11 // pred_fallthru
          _
        // Predicated region
        $region65: #{tpu_custom_call.1} parent=11 // pred_check
          %p693 = pneg %p330
        $region66: #{tpu_custom_call.1} parent=11 // pred_check_branch
          %695 = sbr.rel (%p693) target = $region68
        $region67: #{tpu_custom_call.1} parent=11 // pred_region
          _
        $region68: #{tpu_custom_call.1} parent=11 // pred_fallthru
          _
      $region12: #{tpu_custom_call.1} parent=5 // pred_fallthru
        _
      %p696 = scmp.lt.s32.totalorder %s36, 3
      // Predicated region
      $region69: #{tpu_custom_call.1} parent=5 // pred_check
        %p697 = pneg %p696
      $region70: #{tpu_custom_call.1} parent=5 // pred_check_branch
        %699 = sbr.rel (%p697) target = $region72
      $region71: #{tpu_custom_call.1} parent=5 // pred_region
        // Predicated region
        $region73: #{tpu_custom_call.1} parent=71 // pred_check
          %p700 = pneg %p350
        $region74: #{tpu_custom_call.1} parent=71 // pred_check_branch
          %702 = sbr.rel (%p700) target = $region76
        $region75: #{tpu_custom_call.1} parent=71 // pred_region
          %p703 = scmp.lt.s32.totalorder %s36, 2
          %s704 = scalar_select %p703, %s36, 2
          %s705 = smul.addr %s704, 16
          %s706 = smul.addr %s705, 4
          %s707 = scalar_lea.vmem %s14, %s706
        $region76: #{tpu_custom_call.1} parent=71 // pred_fallthru
          _
        // Predicated region
        $region77: #{tpu_custom_call.1} parent=71 // pred_check
          %p708 = pneg %p376
        $region78: #{tpu_custom_call.1} parent=71 // pred_check_branch
          %710 = sbr.rel (%p708) target = $region80
        $region79: #{tpu_custom_call.1} parent=71 // pred_region
          %p711 = scmp.lt.s32.totalorder %s36, 2
          %s712 = scalar_select %p711, %s36, 2
          %s713 = scalar_lea.vmem %s15, %s712
        $region80: #{tpu_custom_call.1} parent=71 // pred_fallthru
          _
        // Predicated region
        $region81: #{tpu_custom_call.1} parent=71 // pred_check
          %p714 = pneg %p402
        $region82: #{tpu_custom_call.1} parent=71 // pred_check_branch
          %716 = sbr.rel (%p714) target = $region84
        $region83: #{tpu_custom_call.1} parent=71 // pred_region
          %p717 = scmp.lt.s32.totalorder %s36, 2
          %s718 = scalar_select %p717, %s36, 2
          %s719 = smul.addr %s718, 16
          %s720 = smul.addr %s719, 4
          %s721 = scalar_lea.vmem %s16, %s720
        $region84: #{tpu_custom_call.1} parent=71 // pred_fallthru
          _
        // Predicated region
        $region85: #{tpu_custom_call.1} parent=71 // pred_check
          %p722 = pneg %p428
        $region86: #{tpu_custom_call.1} parent=71 // pred_check_branch
          %724 = sbr.rel (%p722) target = $region88
        $region87: #{tpu_custom_call.1} parent=71 // pred_region
          %p725 = scmp.lt.s32.totalorder %s36, 2
          %s726 = scalar_select %p725, %s36, 2
          %s727 = scalar_lea.vmem %s17, %s726
        $region88: #{tpu_custom_call.1} parent=71 // pred_fallthru
          _
        // Predicated region
        $region89: #{tpu_custom_call.1} parent=71 // pred_check
          %p728 = pneg %p454
        $region90: #{tpu_custom_call.1} parent=71 // pred_check_branch
          %730 = sbr.rel (%p728) target = $region92
        $region91: #{tpu_custom_call.1} parent=71 // pred_region
          %p731 = scmp.lt.s32.totalorder %s36, 2
          %s732 = scalar_select %p731, %s36, 2
          %s733 = smul.addr %s732, 16
          %s734 = smul.addr %s733, 4
          %s735 = scalar_lea.vmem %s18, %s734
        $region92: #{tpu_custom_call.1} parent=71 // pred_fallthru
          _
        // Predicated region
        $region93: #{tpu_custom_call.1} parent=71 // pred_check
          %p736 = pneg %p480
        $region94: #{tpu_custom_call.1} parent=71 // pred_check_branch
          %738 = sbr.rel (%p736) target = $region96
        $region95: #{tpu_custom_call.1} parent=71 // pred_region
          %p739 = scmp.lt.s32.totalorder %s36, 2
          %s740 = scalar_select %p739, %s36, 2
          %s741 = scalar_lea.vmem %s19, %s740
        $region96: #{tpu_custom_call.1} parent=71 // pred_fallthru
          _
        // Predicated region
        $region97: #{tpu_custom_call.1} parent=71 // pred_check
          %p742 = pneg %p506
        $region98: #{tpu_custom_call.1} parent=71 // pred_check_branch
          %744 = sbr.rel (%p742) target = $region100
        $region99: #{tpu_custom_call.1} parent=71 // pred_region
          %s745 = sand.u32 %s36, 1
          %s746 = scalar_lea.sflag [#allocation15], %s745
          %s747 = sand.u32 %s496, 1
          %s748 = smul.addr %s747, 64
          %s749 = scalar_lea.vmem [#allocation14], %s748
          %s751 = ssub.s32 1024, 1024
          %752 = vsyncadd %s746, %s751
          %s753 = smul.addr %s36, 16
          %s754 = smul.addr %s753, 64
          %s755 = scalar_lea.hbm %s20, %s754
          %s756 = sshll.u32 %s749, 4
          %s757 = int_to_ptr.vmem [resolvable:$true] %s756
          %762 = dma.hbm_to_vmem [thread:$0]  %s755, 1024, %s757, %s746, 64, 64, 4
        $region100: #{tpu_custom_call.1} parent=71 // pred_fallthru
          _
        // Predicated region
        $region101: #{tpu_custom_call.1} parent=71 // pred_check
          %p763 = pneg %p532
        $region102: #{tpu_custom_call.1} parent=71 // pred_check_branch
          %765 = sbr.rel (%p763) target = $region104
        $region103: #{tpu_custom_call.1} parent=71 // pred_region
          %p766 = scmp.lt.s32.totalorder %s36, 2
          %s767 = scalar_select %p766, %s36, 2
          %s768 = scalar_lea.vmem %s21, %s767
        $region104: #{tpu_custom_call.1} parent=71 // pred_fallthru
          _
        // Predicated region
        $region105: #{tpu_custom_call.1} parent=71 // pred_check
          %p769 = pneg %p558
        $region106: #{tpu_custom_call.1} parent=71 // pred_check_branch
          %771 = sbr.rel (%p769) target = $region108
        $region107: #{tpu_custom_call.1} parent=71 // pred_region
          %s772 = sand.u32 %s36, 1
          %s773 = scalar_lea.sflag [#allocation15], %s772
          %s774 = sand.u32 %s548, 1
          %s775 = smul.addr %s774, 64
          %s776 = scalar_lea.vmem [#allocation16], %s775
          %s778 = ssub.s32 1024, 1024
          %779 = vsyncadd %s773, %s778
          %s780 = smul.addr %s36, 16
          %s781 = smul.addr %s780, 64
          %s782 = scalar_lea.hbm %s22, %s781
          %s783 = sshll.u32 %s776, 4
          %s784 = int_to_ptr.vmem [resolvable:$true] %s783
          %789 = dma.hbm_to_vmem [thread:$0]  %s782, 1024, %s784, %s773, 64, 64, 4
        $region108: #{tpu_custom_call.1} parent=71 // pred_fallthru
          _
        // Predicated region
        $region109: #{tpu_custom_call.1} parent=71 // pred_check
          %p790 = pneg %p584
        $region110: #{tpu_custom_call.1} parent=71 // pred_check_branch
          %792 = sbr.rel (%p790) target = $region112
        $region111: #{tpu_custom_call.1} parent=71 // pred_region
          %p793 = scmp.lt.s32.totalorder %s36, 2
          %s794 = scalar_select %p793, %s36, 2
          %s795 = scalar_lea.vmem %s23, %s794
        $region112: #{tpu_custom_call.1} parent=71 // pred_fallthru
          _
      $region72: #{tpu_custom_call.1} parent=5 // pred_fallthru
        _
      %p796 = scmp.le.s32.totalorder 1, %s36
      %p797 = scmp.lt.s32.totalorder %s36, 4
      %p798 = pnand %p796, %p797
      %p799 = pneg %p798
      // Predicated region
      $region113: #{tpu_custom_call.1} parent=5 // pred_check
        _
      $region114: #{tpu_custom_call.1} parent=5 // pred_check_branch
        %801 = sbr.rel (%p798) target = $region116
      $region115: #{tpu_custom_call.1} parent=5 // pred_region
        %s802 = ssub.s32 %s36, 1
        // Predicated region
        $region117: #{tpu_custom_call.1} parent=115 // pred_check
          %p803 = pneg %p57
        $region118: #{tpu_custom_call.1} parent=115 // pred_check_branch
          %805 = sbr.rel (%p803) target = $region120
        $region119: #{tpu_custom_call.1} parent=115 // pred_region
          %806 = dma.done [#allocation9], 2048
        $region120: #{tpu_custom_call.1} parent=115 // pred_fallthru
          _
        // Predicated region
        $region121: #{tpu_custom_call.1} parent=115 // pred_check
          %p807 = pneg %p99
        $region122: #{tpu_custom_call.1} parent=115 // pred_check_branch
          %809 = sbr.rel (%p807) target = $region124
        $region123: #{tpu_custom_call.1} parent=115 // pred_region
          %810 = dma.done [#allocation12], 16
        $region124: #{tpu_custom_call.1} parent=115 // pred_fallthru
          _
        // Predicated region
        $region125: #{tpu_custom_call.1} parent=115 // pred_check
          %p811 = pneg %p309
        $region126: #{tpu_custom_call.1} parent=115 // pred_check_branch
          %813 = sbr.rel (%p811) target = $region128
        $region127: #{tpu_custom_call.1} parent=115 // pred_region
          %814 = dma.done [#allocation12], 1024
        $region128: #{tpu_custom_call.1} parent=115 // pred_fallthru
          _
        %s815 = sand.u32 %s41, 1
        %s816 = scalar_lea.sflag [#allocation15], %s815
        %s817 = sand.u32 %s499, 1
        %s818 = smul.addr %s817, 64
        %s819 = scalar_lea.vmem [#allocation14], %s818
        // Predicated region
        $region129: #{tpu_custom_call.1} parent=115 // pred_check
          %p820 = pneg %p512
        $region130: #{tpu_custom_call.1} parent=115 // pred_check_branch
          %822 = sbr.rel (%p820) target = $region132
        $region131: #{tpu_custom_call.1} parent=115 // pred_region
          %823 = dma.done %s816, 1024
        $region132: #{tpu_custom_call.1} parent=115 // pred_fallthru
          _
        %s824 = sand.u32 %s41, 1
        %s825 = scalar_lea.sflag [#allocation15], %s824
        %s826 = sand.u32 %s551, 1
        %s827 = smul.addr %s826, 64
        %s828 = scalar_lea.vmem [#allocation16], %s827
        // Predicated region
        $region133: #{tpu_custom_call.1} parent=115 // pred_check
          %p829 = pneg %p564
        $region134: #{tpu_custom_call.1} parent=115 // pred_check_branch
          %831 = sbr.rel (%p829) target = $region136
        $region135: #{tpu_custom_call.1} parent=115 // pred_region
          %832 = dma.done %s825, 1024
        $region136: #{tpu_custom_call.1} parent=115 // pred_fallthru
          _
        %p833 = pneg %p57
        %p834 = pneg %p54
        %p835 = pneg %p78
        %p836 = pneg %p75
        %p837 = pneg %p99
        %p838 = pneg %p96
        %p839 = pneg %p120
        %p840 = pneg %p117
        %p841 = pneg %p141
        %p842 = pneg %p138
        %p843 = pneg %p162
        %p844 = pneg %p159
        %p845 = pneg %p183
        %p846 = pneg %p180
        %p847 = pneg %p204
        %p848 = pneg %p201
        %p849 = pneg %p225
        %p850 = pneg %p222
        %p851 = pneg %p246
        %p852 = pneg %p243
        %p853 = pneg %p267
        %p854 = pneg %p264
        %p855 = pneg %p288
        %p856 = pneg %p285
        %p857 = pneg %p309
        %p858 = pneg %p306
        %p859 = pneg %p330
        %p860 = pneg %p327
        %p861 = scmp.lt.s32.totalorder %s41, 2
        %s862 = scalar_select %p861, %s41, 2
        %s863 = smul.addr %s862, 16
        %s864 = smul.addr %s863, 4
        %s865 = scalar_lea.vmem %s14, %s864
        %p866 = pneg %p356
        %p867 = pneg %p353
        %p868 = scmp.lt.s32.totalorder %s41, 2
        %s869 = scalar_select %p868, %s41, 2
        %s870 = scalar_lea.vmem %s15, %s869
        %p871 = pneg %p382
        %p872 = pneg %p379
        %p873 = scmp.lt.s32.totalorder %s41, 2
        %s874 = scalar_select %p873, %s41, 2
        %s875 = smul.addr %s874, 16
        %s876 = smul.addr %s875, 4
        %s877 = scalar_lea.vmem %s16, %s876
        %p878 = pneg %p408
        %p879 = pneg %p405
        %p880 = scmp.lt.s32.totalorder %s41, 2
        %s881 = scalar_select %p880, %s41, 2
        %s882 = scalar_lea.vmem %s17, %s881
        %p883 = pneg %p434
        %p884 = pneg %p431
        %p885 = scmp.lt.s32.totalorder %s41, 2
        %s886 = scalar_select %p885, %s41, 2
        %s887 = smul.addr %s886, 16
        %s888 = smul.addr %s887, 4
        %s889 = scalar_lea.vmem %s18, %s888
        %p890 = pneg %p460
        %p891 = pneg %p457
        %p892 = scmp.lt.s32.totalorder %s41, 2
        %s893 = scalar_select %p892, %s41, 2
        %s894 = scalar_lea.vmem %s19, %s893
        %p895 = pneg %p486
        %p896 = pneg %p483
        %s897 = sand.u32 %s41, 1
        %s898 = scalar_lea.sflag [#allocation15], %s897
        %s899 = sand.u32 %s499, 1
        %s900 = smul.addr %s899, 64
        %s901 = scalar_lea.vmem [#allocation14], %s900
        %p902 = pneg %p512
        %p903 = pneg %p509
        %p904 = scmp.lt.s32.totalorder %s41, 2
        %s905 = scalar_select %p904, %s41, 2
        %s906 = scalar_lea.vmem %s21, %s905
        %p907 = pneg %p538
        %p908 = pneg %p535
        %s909 = sand.u32 %s41, 1
        %s910 = scalar_lea.sflag [#allocation15], %s909
        %s911 = sand.u32 %s551, 1
        %s912 = smul.addr %s911, 64
        %s913 = scalar_lea.vmem [#allocation16], %s912
        %p914 = pneg %p564
        %p915 = pneg %p561
        %p916 = scmp.lt.s32.totalorder %s41, 2
        %s917 = scalar_select %p916, %s41, 2
        %s918 = scalar_lea.vmem %s23, %s917
        %p919 = pneg %p590
        %p920 = pneg %p587
        %p921 = pneg %p611
        %p922 = pneg %p608
        %p923 = scmp.lt.s32.totalorder %s41, 2
        %s924 = scalar_select %p923, %s41, 2
        %s925 = smul.addr %s924, 16
        %s926 = smul.addr %s925, 4
        %s927 = scalar_lea.vmem %s14, %s926
        %p928 = scmp.lt.s32.totalorder %s41, 2
        %s929 = scalar_select %p928, %s41, 2
        %s930 = scalar_lea.vmem %s15, %s929
        %p931 = scmp.lt.s32.totalorder %s41, 2
        %s932 = scalar_select %p931, %s41, 2
        %s933 = smul.addr %s932, 16
        %s934 = smul.addr %s933, 4
        %s935 = scalar_lea.vmem %s16, %s934
        %p936 = scmp.lt.s32.totalorder %s41, 2
        %s937 = scalar_select %p936, %s41, 2
        %s938 = scalar_lea.vmem %s17, %s937
        %p939 = scmp.lt.s32.totalorder %s41, 2
        %s940 = scalar_select %p939, %s41, 2
        %s941 = smul.addr %s940, 16
        %s942 = smul.addr %s941, 4
        %s943 = scalar_lea.vmem %s18, %s942
        %p944 = scmp.lt.s32.totalorder %s41, 2
        %s945 = scalar_select %p944, %s41, 2
        %s946 = scalar_lea.vmem %s19, %s945
        %p947 = scmp.lt.s32.totalorder %s41, 2
        %s948 = scalar_select %p947, %s41, 2
        %s949 = scalar_lea.vmem %s21, %s948
        %p950 = scmp.lt.s32.totalorder %s41, 2
        %s951 = scalar_select %p950, %s41, 2
        %s952 = scalar_lea.vmem %s23, %s951
        %p954 = scmp.eq.s32.totalorder %s41, 0
        // Predicated region
        $region137: #{tpu_custom_call.1} parent=115 // pred_check
          %p955 = pneg %p954
        $region138: #{tpu_custom_call.1} parent=115 // pred_check_branch
          %957 = sbr.rel (%p955) target = $region140
        $region139: #{tpu_custom_call.1} parent=115 // pred_region
          %v958 = vld [vmem:[#allocation8] sm:$0xff]
          %v959 = vld [vmem:[#allocation8 + $0x8] sm:$0xff]
          %v960 = vld [vmem:[#allocation8 + $0x10] sm:$0xff]
          %v961 = vld [vmem:[#allocation8 + $0x18] sm:$0xff]
          %v962 = vld [vmem:[#allocation8 + $0x20] sm:$0xff]
          %v963 = vld [vmem:[#allocation8 + $0x28] sm:$0xff]
          %v964 = vld [vmem:[#allocation8 + $0x30] sm:$0xff]
          %v965 = vld [vmem:[#allocation8 + $0x38] sm:$0xff]
          %v966 = vld [vmem:[#allocation8 + $0x40] sm:$0xff]
          %v967 = vld [vmem:[#allocation8 + $0x48] sm:$0xff]
          %v968 = vld [vmem:[#allocation8 + $0x50] sm:$0xff]
          %v969 = vld [vmem:[#allocation8 + $0x58] sm:$0xff]
          %v970 = vld [vmem:[#allocation8 + $0x60] sm:$0xff]
          %v971 = vld [vmem:[#allocation8 + $0x68] sm:$0xff]
          %v972 = vld [vmem:[#allocation8 + $0x70] sm:$0xff]
          %v973 = vld [vmem:[#allocation8 + $0x78] sm:$0xff]
          %974 = vst [vmem:[#allocation2] sm:$0xff] %v958
          %975 = vst [vmem:[#allocation2 + $0x8] sm:$0xff] %v959
          %976 = vst [vmem:[#allocation2 + $0x10] sm:$0xff] %v960
          %977 = vst [vmem:[#allocation2 + $0x18] sm:$0xff] %v961
          %978 = vst [vmem:[#allocation2 + $0x20] sm:$0xff] %v962
          %979 = vst [vmem:[#allocation2 + $0x28] sm:$0xff] %v963
          %980 = vst [vmem:[#allocation2 + $0x30] sm:$0xff] %v964
          %981 = vst [vmem:[#allocation2 + $0x38] sm:$0xff] %v965
          %982 = vst [vmem:[#allocation2 + $0x40] sm:$0xff] %v966
          %983 = vst [vmem:[#allocation2 + $0x48] sm:$0xff] %v967
          %984 = vst [vmem:[#allocation2 + $0x50] sm:$0xff] %v968
          %985 = vst [vmem:[#allocation2 + $0x58] sm:$0xff] %v969
          %986 = vst [vmem:[#allocation2 + $0x60] sm:$0xff] %v970
          %987 = vst [vmem:[#allocation2 + $0x68] sm:$0xff] %v971
          %988 = vst [vmem:[#allocation2 + $0x70] sm:$0xff] %v972
          %989 = vst [vmem:[#allocation2 + $0x78] sm:$0xff] %v973
          %990 = vst [vmem:[#allocation3] sm:$0xff] 0.0
          %v991 = vld [vmem:[%s1] sm:$0xff]
          %v992 = vld [vmem:[%s1 + $0x8] sm:$0xff]
          %v993 = vld [vmem:[%s1 + $0x10] sm:$0xff]
          %v994 = vld [vmem:[%s1 + $0x18] sm:$0xff]
          %v995 = vld [vmem:[%s1 + $0x20] sm:$0xff]
          %v996 = vld [vmem:[%s1 + $0x28] sm:$0xff]
          %v997 = vld [vmem:[%s1 + $0x30] sm:$0xff]
          %v998 = vld [vmem:[%s1 + $0x38] sm:$0xff]
          %v999 = vld [vmem:[%s1 + $0x40] sm:$0xff]
          %v1000 = vld [vmem:[%s1 + $0x48] sm:$0xff]
          %v1001 = vld [vmem:[%s1 + $0x50] sm:$0xff]
          %v1002 = vld [vmem:[%s1 + $0x58] sm:$0xff]
          %v1003 = vld [vmem:[%s1 + $0x60] sm:$0xff]
          %v1004 = vld [vmem:[%s1 + $0x68] sm:$0xff]
          %v1005 = vld [vmem:[%s1 + $0x70] sm:$0xff]
          %v1006 = vld [vmem:[%s1 + $0x78] sm:$0xff]
          %v1007 = vlaneseq
          %v1008 = vand.u32 %v1007, 127
          %1009 = vset.pattern.permute.xlu0 0
          %1010 = vperm.xlu0 %1009, %v991
          %v1011 = vpop.permute.xlu0 %1010
          %1012 = vset.pattern.permute.xlu0 0
          %1013 = vperm.xlu0 %1012, %v992
          %v1014 = vpop.permute.xlu0 %1013
          %1015 = vset.pattern.permute.xlu0 0
          %1016 = vperm.xlu0 %1015, %v993
          %v1017 = vpop.permute.xlu0 %1016
          %1018 = vset.pattern.permute.xlu0 0
          %1019 = vperm.xlu0 %1018, %v994
          %v1020 = vpop.permute.xlu0 %1019
          %1021 = vset.pattern.permute.xlu0 0
          %1022 = vperm.xlu0 %1021, %v995
          %v1023 = vpop.permute.xlu0 %1022
          %1024 = vset.pattern.permute.xlu0 0
          %1025 = vperm.xlu0 %1024, %v996
          %v1026 = vpop.permute.xlu0 %1025
          %1027 = vset.pattern.permute.xlu0 0
          %1028 = vperm.xlu0 %1027, %v997
          %v1029 = vpop.permute.xlu0 %1028
          %1030 = vset.pattern.permute.xlu0 0
          %1031 = vperm.xlu0 %1030, %v998
          %v1032 = vpop.permute.xlu0 %1031
          %1033 = vset.pattern.permute.xlu0 0
          %1034 = vperm.xlu0 %1033, %v999
          %v1035 = vpop.permute.xlu0 %1034
          %1036 = vset.pattern.permute.xlu0 0
          %1037 = vperm.xlu0 %1036, %v1000
          %v1038 = vpop.permute.xlu0 %1037
          %1039 = vset.pattern.permute.xlu0 0
          %1040 = vperm.xlu0 %1039, %v1001
          %v1041 = vpop.permute.xlu0 %1040
          %1042 = vset.pattern.permute.xlu0 0
          %1043 = vperm.xlu0 %1042, %v1002
          %v1044 = vpop.permute.xlu0 %1043
          %1045 = vset.pattern.permute.xlu0 0
          %1046 = vperm.xlu0 %1045, %v1003
          %v1047 = vpop.permute.xlu0 %1046
          %1048 = vset.pattern.permute.xlu0 0
          %1049 = vperm.xlu0 %1048, %v1004
          %v1050 = vpop.permute.xlu0 %1049
          %1051 = vset.pattern.permute.xlu0 0
          %1052 = vperm.xlu0 %1051, %v1005
          %v1053 = vpop.permute.xlu0 %1052
          %1054 = vset.pattern.permute.xlu0 0
          %1055 = vperm.xlu0 %1054, %v1006
          %v1056 = vpop.permute.xlu0 %1055
          %vm1057 = vcmp.eq.s32.totalorder %v1011, %v1008
          %vm1058 = vcmp.eq.s32.totalorder %v1014, %v1008
          %vm1059 = vcmp.eq.s32.totalorder %v1017, %v1008
          %vm1060 = vcmp.eq.s32.totalorder %v1020, %v1008
          %vm1061 = vcmp.eq.s32.totalorder %v1023, %v1008
          %vm1062 = vcmp.eq.s32.totalorder %v1026, %v1008
          %vm1063 = vcmp.eq.s32.totalorder %v1029, %v1008
          %vm1064 = vcmp.eq.s32.totalorder %v1032, %v1008
          %vm1065 = vcmp.eq.s32.totalorder %v1035, %v1008
          %vm1066 = vcmp.eq.s32.totalorder %v1038, %v1008
          %vm1067 = vcmp.eq.s32.totalorder %v1041, %v1008
          %vm1068 = vcmp.eq.s32.totalorder %v1044, %v1008
          %vm1069 = vcmp.eq.s32.totalorder %v1047, %v1008
          %vm1070 = vcmp.eq.s32.totalorder %v1050, %v1008
          %vm1071 = vcmp.eq.s32.totalorder %v1053, %v1008
          %vm1072 = vcmp.eq.s32.totalorder %v1056, %v1008
          %v1073 = vsel %vm1057, 1.0, 0.0
          %v1074 = vsel %vm1058, 1.0, 0.0
          %v1075 = vsel %vm1059, 1.0, 0.0
          %v1076 = vsel %vm1060, 1.0, 0.0
          %v1077 = vsel %vm1061, 1.0, 0.0
          %v1078 = vsel %vm1062, 1.0, 0.0
          %v1079 = vsel %vm1063, 1.0, 0.0
          %v1080 = vsel %vm1064, 1.0, 0.0
          %v1081 = vsel %vm1065, 1.0, 0.0
          %v1082 = vsel %vm1066, 1.0, 0.0
          %v1083 = vsel %vm1067, 1.0, 0.0
          %v1084 = vsel %vm1068, 1.0, 0.0
          %v1085 = vsel %vm1069, 1.0, 0.0
          %v1086 = vsel %vm1070, 1.0, 0.0
          %v1087 = vsel %vm1071, 1.0, 0.0
          %v1088 = vsel %vm1072, 1.0, 0.0
          %v1089 = vpack.c.bf16 %v1074, %v1073
          %v1090 = vpack.c.bf16 %v1076, %v1075
          %v1091 = vpack.c.bf16 %v1078, %v1077
          %v1092 = vpack.c.bf16 %v1080, %v1079
          %v1093 = vpack.c.bf16 %v1082, %v1081
          %v1094 = vpack.c.bf16 %v1084, %v1083
          %v1095 = vpack.c.bf16 %v1086, %v1085
          %v1096 = vpack.c.bf16 %v1088, %v1087
          %1097 = vst [vmem:[#allocation4] sm:$0xff] %v1089
          %1098 = vst [vmem:[#allocation4 + $0x8] sm:$0xff] %v1090
          %1099 = vst [vmem:[#allocation4 + $0x10] sm:$0xff] %v1091
          %1100 = vst [vmem:[#allocation4 + $0x18] sm:$0xff] %v1092
          %1101 = vst [vmem:[#allocation4 + $0x20] sm:$0xff] %v1093
          %1102 = vst [vmem:[#allocation4 + $0x28] sm:$0xff] %v1094
          %1103 = vst [vmem:[#allocation4 + $0x30] sm:$0xff] %v1095
          %1104 = vst [vmem:[#allocation4 + $0x38] sm:$0xff] %v1096
          %v1105 = vlaneseq
          %v1106 = vshrl.u32 %v1105, 7
          %v1107 = vadd.s32 %v1106, 8
          %v1108 = vadd.s32 %v1106, 16
          %v1109 = vadd.s32 %v1106, 24
          %v1110 = vadd.s32 %v1106, 32
          %v1111 = vadd.s32 %v1106, 40
          %v1112 = vadd.s32 %v1106, 48
          %v1113 = vadd.s32 %v1106, 56
          %v1114 = vadd.s32 %v1106, 64
          %v1115 = vadd.s32 %v1106, 72
          %v1116 = vadd.s32 %v1106, 80
          %v1117 = vadd.s32 %v1106, 88
          %v1118 = vadd.s32 %v1106, 96
          %v1119 = vadd.s32 %v1106, 104
          %v1120 = vadd.s32 %v1106, 112
          %v1121 = vadd.s32 %v1106, 120
          %v1122 = vld [vmem:[#allocation11] sm:$0x1]
          %v1123 = vlaneseq
          %v1124 = vshrl.u32 %v1123, 7
          %v1125 = vsub.s32 0, %v1124
          %v1126 = vrot.slane %v1122, %v1125
          %vm1127 = vcmp.eq.s32.totalorder %v1106, %v1126
          %vm1128 = vcmp.eq.s32.totalorder %v1107, %v1126
          %vm1129 = vcmp.eq.s32.totalorder %v1108, %v1126
          %vm1130 = vcmp.eq.s32.totalorder %v1109, %v1126
          %vm1131 = vcmp.eq.s32.totalorder %v1110, %v1126
          %vm1132 = vcmp.eq.s32.totalorder %v1111, %v1126
          %vm1133 = vcmp.eq.s32.totalorder %v1112, %v1126
          %vm1134 = vcmp.eq.s32.totalorder %v1113, %v1126
          %vm1135 = vcmp.eq.s32.totalorder %v1114, %v1126
          %vm1136 = vcmp.eq.s32.totalorder %v1115, %v1126
          %vm1137 = vcmp.eq.s32.totalorder %v1116, %v1126
          %vm1138 = vcmp.eq.s32.totalorder %v1117, %v1126
          %vm1139 = vcmp.eq.s32.totalorder %v1118, %v1126
          %vm1140 = vcmp.eq.s32.totalorder %v1119, %v1126
          %vm1141 = vcmp.eq.s32.totalorder %v1120, %v1126
          %vm1142 = vcmp.eq.s32.totalorder %v1121, %v1126
          %v1143 = vsel %vm1127, 1.0, 0.0
          %v1144 = vsel %vm1128, 1.0, 0.0
          %v1145 = vsel %vm1129, 1.0, 0.0
          %v1146 = vsel %vm1130, 1.0, 0.0
          %v1147 = vsel %vm1131, 1.0, 0.0
          %v1148 = vsel %vm1132, 1.0, 0.0
          %v1149 = vsel %vm1133, 1.0, 0.0
          %v1150 = vsel %vm1134, 1.0, 0.0
          %v1151 = vsel %vm1135, 1.0, 0.0
          %v1152 = vsel %vm1136, 1.0, 0.0
          %v1153 = vsel %vm1137, 1.0, 0.0
          %v1154 = vsel %vm1138, 1.0, 0.0
          %v1155 = vsel %vm1139, 1.0, 0.0
          %v1156 = vsel %vm1140, 1.0, 0.0
          %v1157 = vsel %vm1141, 1.0, 0.0
          %v1158 = vsel %vm1142, 1.0, 0.0
          %v1159 = vpack.c.bf16 %v1144, %v1143
          %v1160 = vpack.c.bf16 %v1146, %v1145
          %v1161 = vpack.c.bf16 %v1148, %v1147
          %v1162 = vpack.c.bf16 %v1150, %v1149
          %v1163 = vpack.c.bf16 %v1152, %v1151
          %v1164 = vpack.c.bf16 %v1154, %v1153
          %v1165 = vpack.c.bf16 %v1156, %v1155
          %v1166 = vpack.c.bf16 %v1158, %v1157
          %1167 = vst [vmem:[#allocation5] sm:$0xff] %v1159
          %1168 = vst [vmem:[#allocation5 + $0x8] sm:$0xff] %v1160
          %1169 = vst [vmem:[#allocation5 + $0x10] sm:$0xff] %v1161
          %1170 = vst [vmem:[#allocation5 + $0x18] sm:$0xff] %v1162
          %1171 = vst [vmem:[#allocation5 + $0x20] sm:$0xff] %v1163
          %1172 = vst [vmem:[#allocation5 + $0x28] sm:$0xff] %v1164
          %1173 = vst [vmem:[#allocation5 + $0x30] sm:$0xff] %v1165
          %1174 = vst [vmem:[#allocation5 + $0x38] sm:$0xff] %v1166
          %v1175 = vld [vmem:[%s3] sm:$0xff]
          %v1176 = vld [vmem:[%s3 + $0x8] sm:$0xff]
          %v1177 = vld [vmem:[%s3 + $0x10] sm:$0xff]
          %v1178 = vld [vmem:[%s3 + $0x18] sm:$0xff]
          %v1179 = vld [vmem:[%s3 + $0x20] sm:$0xff]
          %v1180 = vld [vmem:[%s3 + $0x28] sm:$0xff]
          %v1181 = vld [vmem:[%s3 + $0x30] sm:$0xff]
          %v1182 = vld [vmem:[%s3 + $0x38] sm:$0xff]
          %v1183 = vld [vmem:[%s3 + $0x40] sm:$0xff]
          %v1184 = vld [vmem:[%s3 + $0x48] sm:$0xff]
          %v1185 = vld [vmem:[%s3 + $0x50] sm:$0xff]
          %v1186 = vld [vmem:[%s3 + $0x58] sm:$0xff]
          %v1187 = vld [vmem:[%s3 + $0x60] sm:$0xff]
          %v1188 = vld [vmem:[%s3 + $0x68] sm:$0xff]
          %v1189 = vld [vmem:[%s3 + $0x70] sm:$0xff]
          %v1190 = vld [vmem:[%s3 + $0x78] sm:$0xff]
          %1191 = vset.pattern.permute.xlu0 0
          %1192 = vperm.xlu0 %1191, %v1175
          %v1193 = vpop.permute.xlu0 %1192
          %1194 = vset.pattern.permute.xlu0 0
          %1195 = vperm.xlu0 %1194, %v1176
          %v1196 = vpop.permute.xlu0 %1195
          %1197 = vset.pattern.permute.xlu0 0
          %1198 = vperm.xlu0 %1197, %v1177
          %v1199 = vpop.permute.xlu0 %1198
          %1200 = vset.pattern.permute.xlu0 0
          %1201 = vperm.xlu0 %1200, %v1178
          %v1202 = vpop.permute.xlu0 %1201
          %1203 = vset.pattern.permute.xlu0 0
          %1204 = vperm.xlu0 %1203, %v1179
          %v1205 = vpop.permute.xlu0 %1204
          %1206 = vset.pattern.permute.xlu0 0
          %1207 = vperm.xlu0 %1206, %v1180
          %v1208 = vpop.permute.xlu0 %1207
          %1209 = vset.pattern.permute.xlu0 0
          %1210 = vperm.xlu0 %1209, %v1181
          %v1211 = vpop.permute.xlu0 %1210
          %1212 = vset.pattern.permute.xlu0 0
          %1213 = vperm.xlu0 %1212, %v1182
          %v1214 = vpop.permute.xlu0 %1213
          %1215 = vset.pattern.permute.xlu0 0
          %1216 = vperm.xlu0 %1215, %v1183
          %v1217 = vpop.permute.xlu0 %1216
          %1218 = vset.pattern.permute.xlu0 0
          %1219 = vperm.xlu0 %1218, %v1184
          %v1220 = vpop.permute.xlu0 %1219
          %1221 = vset.pattern.permute.xlu0 0
          %1222 = vperm.xlu0 %1221, %v1185
          %v1223 = vpop.permute.xlu0 %1222
          %1224 = vset.pattern.permute.xlu0 0
          %1225 = vperm.xlu0 %1224, %v1186
          %v1226 = vpop.permute.xlu0 %1225
          %1227 = vset.pattern.permute.xlu0 0
          %1228 = vperm.xlu0 %1227, %v1187
          %v1229 = vpop.permute.xlu0 %1228
          %1230 = vset.pattern.permute.xlu0 0
          %1231 = vperm.xlu0 %1230, %v1188
          %v1232 = vpop.permute.xlu0 %1231
          %1233 = vset.pattern.permute.xlu0 0
          %1234 = vperm.xlu0 %1233, %v1189
          %v1235 = vpop.permute.xlu0 %1234
          %1236 = vset.pattern.permute.xlu0 0
          %1237 = vperm.xlu0 %1236, %v1190
          %v1238 = vpop.permute.xlu0 %1237
          %vm1239 = vcmp.eq.s32.totalorder %v1193, %v1008
          %vm1240 = vcmp.eq.s32.totalorder %v1196, %v1008
          %vm1241 = vcmp.eq.s32.totalorder %v1199, %v1008
          %vm1242 = vcmp.eq.s32.totalorder %v1202, %v1008
          %vm1243 = vcmp.eq.s32.totalorder %v1205, %v1008
          %vm1244 = vcmp.eq.s32.totalorder %v1208, %v1008
          %vm1245 = vcmp.eq.s32.totalorder %v1211, %v1008
          %vm1246 = vcmp.eq.s32.totalorder %v1214, %v1008
          %vm1247 = vcmp.eq.s32.totalorder %v1217, %v1008
          %vm1248 = vcmp.eq.s32.totalorder %v1220, %v1008
          %vm1249 = vcmp.eq.s32.totalorder %v1223, %v1008
          %vm1250 = vcmp.eq.s32.totalorder %v1226, %v1008
          %vm1251 = vcmp.eq.s32.totalorder %v1229, %v1008
          %vm1252 = vcmp.eq.s32.totalorder %v1232, %v1008
          %vm1253 = vcmp.eq.s32.totalorder %v1235, %v1008
          %vm1254 = vcmp.eq.s32.totalorder %v1238, %v1008
          %v1255 = vsel %vm1239, 1.0, 0.0
          %v1256 = vsel %vm1240, 1.0, 0.0
          %v1257 = vsel %vm1241, 1.0, 0.0
          %v1258 = vsel %vm1242, 1.0, 0.0
          %v1259 = vsel %vm1243, 1.0, 0.0
          %v1260 = vsel %vm1244, 1.0, 0.0
          %v1261 = vsel %vm1245, 1.0, 0.0
          %v1262 = vsel %vm1246, 1.0, 0.0
          %v1263 = vsel %vm1247, 1.0, 0.0
          %v1264 = vsel %vm1248, 1.0, 0.0
          %v1265 = vsel %vm1249, 1.0, 0.0
          %v1266 = vsel %vm1250, 1.0, 0.0
          %v1267 = vsel %vm1251, 1.0, 0.0
          %v1268 = vsel %vm1252, 1.0, 0.0
          %v1269 = vsel %vm1253, 1.0, 0.0
          %v1270 = vsel %vm1254, 1.0, 0.0
          %v1271 = vpack.c.bf16 %v1256, %v1255
          %v1272 = vpack.c.bf16 %v1258, %v1257
          %v1273 = vpack.c.bf16 %v1260, %v1259
          %v1274 = vpack.c.bf16 %v1262, %v1261
          %v1275 = vpack.c.bf16 %v1264, %v1263
          %v1276 = vpack.c.bf16 %v1266, %v1265
          %v1277 = vpack.c.bf16 %v1268, %v1267
          %v1278 = vpack.c.bf16 %v1270, %v1269
          %vm1279 = vcmask 64512
          %1280 = vst.msk [vmem:[#allocation6] sm:$0xff] %vm1279, %v1271
          %1281 = vst.msk [vmem:[#allocation6 + $0x8] sm:$0xff] %vm1279, %v1272
          %1282 = vst.msk [vmem:[#allocation6 + $0x10] sm:$0xff] %vm1279, %v1273
          %1283 = vst.msk [vmem:[#allocation6 + $0x18] sm:$0xff] %vm1279, %v1274
          %1284 = vst.msk [vmem:[#allocation6 + $0x20] sm:$0xff] %vm1279, %v1275
          %1285 = vst.msk [vmem:[#allocation6 + $0x28] sm:$0xff] %vm1279, %v1276
          %1286 = vst.msk [vmem:[#allocation6 + $0x30] sm:$0xff] %vm1279, %v1277
          %1287 = vst.msk [vmem:[#allocation6 + $0x38] sm:$0xff] %vm1279, %v1278
          %v1288 = vld [vmem:[%s4] sm:$0x1]
          %v1289 = vlaneseq
          %v1290 = vshrl.u32 %v1289, 7
          %v1291 = vsub.s32 0, %v1290
          %v1292 = vrot.slane %v1288, %v1291
          %vm1293 = vcmp.eq.s32.totalorder %v1106, %v1292
          %v1294 = vsel %vm1293, 1.0, 0.0
          %v1295 = vpack.c.bf16 %v1294, %v1294
          %1296 = vst [vmem:[#allocation7] sm:$0xf] %v1295
        $region140: #{tpu_custom_call.1} parent=115 // pred_fallthru
          _
        %v1297 = vld [vmem:[#allocation2] sm:$0xff]
        %v1298 = vld [vmem:[#allocation2 + $0x8] sm:$0xff]
        %v1299 = vld [vmem:[#allocation2 + $0x10] sm:$0xff]
        %v1300 = vld [vmem:[#allocation2 + $0x18] sm:$0xff]
        %v1301 = vld [vmem:[#allocation2 + $0x20] sm:$0xff]
        %v1302 = vld [vmem:[#allocation2 + $0x28] sm:$0xff]
        %v1303 = vld [vmem:[#allocation2 + $0x30] sm:$0xff]
        %v1304 = vld [vmem:[#allocation2 + $0x38] sm:$0xff]
        %v1305 = vld [vmem:[#allocation2 + $0x40] sm:$0xff]
        %v1306 = vld [vmem:[#allocation2 + $0x48] sm:$0xff]
        %v1307 = vld [vmem:[#allocation2 + $0x50] sm:$0xff]
        %v1308 = vld [vmem:[#allocation2 + $0x58] sm:$0xff]
        %v1309 = vld [vmem:[#allocation2 + $0x60] sm:$0xff]
        %v1310 = vld [vmem:[#allocation2 + $0x68] sm:$0xff]
        %v1311 = vld [vmem:[#allocation2 + $0x70] sm:$0xff]
        %v1312 = vld [vmem:[#allocation2 + $0x78] sm:$0xff]
        %v1313 = vld [vmem:[#allocation6] sm:$0xff]
        %v1314 = vld [vmem:[#allocation6 + $0x8] sm:$0xff]
        %v1315 = vld [vmem:[#allocation6 + $0x10] sm:$0xff]
        %v1316 = vld [vmem:[#allocation6 + $0x18] sm:$0xff]
        %v1317 = vld [vmem:[#allocation6 + $0x20] sm:$0xff]
        %v1318 = vld [vmem:[#allocation6 + $0x28] sm:$0xff]
        %v1319 = vld [vmem:[#allocation6 + $0x30] sm:$0xff]
        %v1320 = vld [vmem:[#allocation6 + $0x38] sm:$0xff]
        %v1321 = vld [vmem:[#allocation3] sm:$0xff]
        %v1322 = vpack.c.bf16 %v1321, %v1321
        %vm1323 = vcmask 64512
        %v1325 = vsel %vm1323, %v1313, 0
        %v1328 = vsel %vm1323, %v1314, 0
        %v1331 = vsel %vm1323, %v1315, 0
        %v1334 = vsel %vm1323, %v1316, 0
        %v1337 = vsel %vm1323, %v1317, 0
        %v1340 = vsel %vm1323, %v1318, 0
        %v1343 = vsel %vm1323, %v1319, 0
        %v1346 = vsel %vm1323, %v1320, 0
        %vm1348 = vcmask 1043456
        %v1350 = vsel %vm1348, %v1322, 0
        %1352 = vmatprep.subr.bf16.mxu0 0
        %1353 = vmatpush1.bf16.msra.mxu0 %v1350
        %1354 = vmatprep.subr.bf16.mxu0 0
        %1355 = vmatpush1.bf16.msra.mxu0 0
        %1356 = vmatprep.subr.bf16.mxu0 0
        %1357 = vmatpush1.bf16.msra.mxu0 0
        %1358 = vmatprep.subr.bf16.mxu0 0
        %1359 = vmatpush1.bf16.msra.mxu0 0
        %1360 = vmatprep.subr.bf16.mxu0 0
        %1361 = vmatpush1.bf16.msra.mxu0 0
        %1362 = vmatprep.subr.bf16.mxu0 0
        %1363 = vmatpush1.bf16.msra.mxu0 0
        %1364 = vmatprep.subr.bf16.mxu0 0
        %1365 = vmatpush1.bf16.msra.mxu0 0
        %1366 = vmatprep.subr.bf16.mxu0 0
        %1367 = vmatpush1.bf16.msra.mxu0 0
        %1368 = vmatprep.subr.bf16.mxu0 0
        %1369 = vmatpush1.bf16.msra.mxu0 0
        %1370 = vmatprep.subr.bf16.mxu0 0
        %1371 = vmatpush1.bf16.msra.mxu0 0
        %1372 = vmatprep.subr.bf16.mxu0 0
        %1373 = vmatpush1.bf16.msra.mxu0 0
        %1374 = vmatprep.subr.bf16.mxu0 0
        %1375 = vmatpush1.bf16.msra.mxu0 0
        %1376 = vmatprep.subr.bf16.mxu0 0
        %1377 = vmatpush1.bf16.msra.mxu0 0
        %1378 = vmatprep.subr.bf16.mxu0 0
        %1379 = vmatpush1.bf16.msra.mxu0 0
        %1380 = vmatprep.subr.bf16.mxu0 0
        %1381 = vmatpush1.bf16.msra.mxu0 0
        %1382 = vmatprep.subr.bf16.mxu0 0
        %1383 = vmatpush1.bf16.msra.mxu0 0
        %1384 = vmatprep.mubr.bf16.mxu0 0
        %1385 = vmatmul.mubr.bf16.gmra.mrb[0].mxu0 %v1325
        %v1386 = vpop.f32.mrb[0].mxu0
        %v1387 = vadd.f32 0.0, %v1386
        %v1388 = vpop.f32.mrb[0].mxu0
        %v1389 = vpop.f32.mrb[0].mxu0
        %v1390 = vadd.f32 0.0, %v1389
        %v1391 = vpop.f32.mrb[0].mxu0
        %1392 = vmatprep.mubr.bf16.mxu0 0
        %1393 = vmatmul.mubr.bf16.gmra.mrb[0].mxu0 %v1328
        %v1394 = vpop.f32.mrb[0].mxu0
        %v1395 = vadd.f32 0.0, %v1394
        %v1396 = vpop.f32.mrb[0].mxu0
        %v1397 = vpop.f32.mrb[0].mxu0
        %v1398 = vadd.f32 0.0, %v1397
        %v1399 = vpop.f32.mrb[0].mxu0
        %1400 = vmatprep.mubr.bf16.mxu0 0
        %1401 = vmatmul.mubr.bf16.gmra.mrb[0].mxu0 %v1331
        %v1402 = vpop.f32.mrb[0].mxu0
        %v1403 = vadd.f32 0.0, %v1402
        %v1404 = vpop.f32.mrb[0].mxu0
        %v1405 = vpop.f32.mrb[0].mxu0
        %v1406 = vadd.f32 0.0, %v1405
        %v1407 = vpop.f32.mrb[0].mxu0
        %1408 = vmatprep.mubr.bf16.mxu0 0
        %1409 = vmatmul.mubr.bf16.gmra.mrb[0].mxu0 %v1334
        %v1410 = vpop.f32.mrb[0].mxu0
        %v1411 = vadd.f32 0.0, %v1410
        %v1412 = vpop.f32.mrb[0].mxu0
        %v1413 = vpop.f32.mrb[0].mxu0
        %v1414 = vadd.f32 0.0, %v1413
        %v1415 = vpop.f32.mrb[0].mxu0
        %1416 = vmatprep.mubr.bf16.mxu0 0
        %1417 = vmatmul.mubr.bf16.gmra.mrb[0].mxu0 %v1337
        %v1418 = vpop.f32.mrb[0].mxu0
        %v1419 = vadd.f32 0.0, %v1418
        %v1420 = vpop.f32.mrb[0].mxu0
        %v1421 = vpop.f32.mrb[0].mxu0
        %v1422 = vadd.f32 0.0, %v1421
        %v1423 = vpop.f32.mrb[0].mxu0
        %1424 = vmatprep.mubr.bf16.mxu0 0
        %1425 = vmatmul.mubr.bf16.gmra.mrb[0].mxu0 %v1340
        %v1426 = vpop.f32.mrb[0].mxu0
        %v1427 = vadd.f32 0.0, %v1426
        %v1428 = vpop.f32.mrb[0].mxu0
        %v1429 = vpop.f32.mrb[0].mxu0
        %v1430 = vadd.f32 0.0, %v1429
        %v1431 = vpop.f32.mrb[0].mxu0
        %1432 = vmatprep.mubr.bf16.mxu0 0
        %1433 = vmatmul.mubr.bf16.gmra.mrb[0].mxu0 %v1343
        %v1434 = vpop.f32.mrb[0].mxu0
        %v1435 = vadd.f32 0.0, %v1434
        %v1436 = vpop.f32.mrb[0].mxu0
        %v1437 = vpop.f32.mrb[0].mxu0
        %v1438 = vadd.f32 0.0, %v1437
        %v1439 = vpop.f32.mrb[0].mxu0
        %1440 = vmatprep.mubr.bf16.mxu0 0
        %1441 = vmatmul.mubr.bf16.gmra.mrb[0].mxu0 %v1346
        %v1442 = vpop.f32.mrb[0].mxu0
        %v1443 = vadd.f32 0.0, %v1442
        %v1444 = vpop.f32.mrb[0].mxu0
        %v1445 = vpop.f32.mrb[0].mxu0
        %v1446 = vadd.f32 0.0, %v1445
        %v1447 = vpop.f32.mrb[0].mxu0
        %1448 = vdwg.mxu0
        %v1449 = vadd.f32 %v1297, %v1387
        %v1450 = vadd.f32 %v1298, %v1390
        %v1451 = vadd.f32 %v1299, %v1395
        %v1452 = vadd.f32 %v1300, %v1398
        %v1453 = vadd.f32 %v1301, %v1403
        %v1454 = vadd.f32 %v1302, %v1406
        %v1455 = vadd.f32 %v1303, %v1411
        %v1456 = vadd.f32 %v1304, %v1414
        %v1457 = vadd.f32 %v1305, %v1419
        %v1458 = vadd.f32 %v1306, %v1422
        %v1459 = vadd.f32 %v1307, %v1427
        %v1460 = vadd.f32 %v1308, %v1430
        %v1461 = vadd.f32 %v1309, %v1435
        %v1462 = vadd.f32 %v1310, %v1438
        %v1463 = vadd.f32 %v1311, %v1443
        %v1464 = vadd.f32 %v1312, %v1446
        %v1465 = vpack.c.bf16 %v1450, %v1449
        %v1466 = vpack.c.bf16 %v1452, %v1451
        %v1467 = vpack.c.bf16 %v1454, %v1453
        %v1468 = vpack.c.bf16 %v1456, %v1455
        %v1469 = vpack.c.bf16 %v1458, %v1457
        %v1470 = vpack.c.bf16 %v1460, %v1459
        %v1471 = vpack.c.bf16 %v1462, %v1461
        %v1472 = vpack.c.bf16 %v1464, %v1463
        %v1473 = vld [vmem:[#allocation4] sm:$0xff]
        %v1474 = vld [vmem:[#allocation4 + $0x8] sm:$0xff]
        %v1475 = vld [vmem:[#allocation4 + $0x10] sm:$0xff]
        %v1476 = vld [vmem:[#allocation4 + $0x18] sm:$0xff]
        %v1477 = vld [vmem:[#allocation4 + $0x20] sm:$0xff]
        %v1478 = vld [vmem:[#allocation4 + $0x28] sm:$0xff]
        %v1479 = vld [vmem:[#allocation4 + $0x30] sm:$0xff]
        %v1480 = vld [vmem:[#allocation4 + $0x38] sm:$0xff]
        %v1481 = vld [vmem:[%s927] sm:$0xf]
        %v1482 = vld [vmem:[%s927 + $0x4] sm:$0xf]
        %v1483 = vld [vmem:[%s927 + $0x8] sm:$0xf]
        %v1484 = vld [vmem:[%s927 + $0xc] sm:$0xf]
        %v1485 = vld [vmem:[%s927 + $0x10] sm:$0xf]
        %v1486 = vld [vmem:[%s927 + $0x14] sm:$0xf]
        %v1487 = vld [vmem:[%s927 + $0x18] sm:$0xf]
        %v1488 = vld [vmem:[%s927 + $0x1c] sm:$0xf]
        %v1489 = vld [vmem:[%s927 + $0x20] sm:$0xf]
        %v1490 = vld [vmem:[%s927 + $0x24] sm:$0xf]
        %v1491 = vld [vmem:[%s927 + $0x28] sm:$0xf]
        %v1492 = vld [vmem:[%s927 + $0x2c] sm:$0xf]
        %v1493 = vld [vmem:[%s927 + $0x30] sm:$0xf]
        %v1494 = vld [vmem:[%s927 + $0x34] sm:$0xf]
        %v1495 = vld [vmem:[%s927 + $0x38] sm:$0xf]
        %v1496 = vld [vmem:[%s927 + $0x3c] sm:$0xf]
        %v1497 = vunpack.c.l.bf16 %v1481
        %v1498 = vunpack.c.l.bf16 %v1482
        %v1499 = vunpack.c.l.bf16 %v1483
        %v1500 = vunpack.c.l.bf16 %v1484
        %v1501 = vunpack.c.l.bf16 %v1485
        %v1502 = vunpack.c.l.bf16 %v1486
        %v1503 = vunpack.c.l.bf16 %v1487
        %v1504 = vunpack.c.l.bf16 %v1488
        %v1505 = vunpack.c.l.bf16 %v1489
        %v1506 = vunpack.c.l.bf16 %v1490
        %v1507 = vunpack.c.l.bf16 %v1491
        %v1508 = vunpack.c.l.bf16 %v1492
        %v1509 = vunpack.c.l.bf16 %v1493
        %v1510 = vunpack.c.l.bf16 %v1494
        %v1511 = vunpack.c.l.bf16 %v1495
        %v1512 = vunpack.c.l.bf16 %v1496
        %1513 = vmatprep.subr.bf16.mxu0 0
        %1514 = vmatpush1.bf16.msra.mxu0 %v1465
        %1515 = vmatprep.subr.bf16.mxu0 0
        %1516 = vmatpush1.bf16.msra.mxu0 %v1466
        %1517 = vmatprep.subr.bf16.mxu0 0
        %1518 = vmatpush1.bf16.msra.mxu0 %v1467
        %1519 = vmatprep.subr.bf16.mxu0 0
        %1520 = vmatpush1.bf16.msra.mxu0 %v1468
        %1521 = vmatprep.subr.bf16.mxu0 0
        %1522 = vmatpush1.bf16.msra.mxu0 %v1469
        %1523 = vmatprep.subr.bf16.mxu0 0
        %1524 = vmatpush1.bf16.msra.mxu0 %v1470
        %1525 = vmatprep.subr.bf16.mxu0 0
        %1526 = vmatpush1.bf16.msra.mxu0 %v1471
        %1527 = vmatprep.subr.bf16.mxu0 0
        %1528 = vmatpush1.bf16.msra.mxu0 %v1472
        %1529 = vmatprep.subr.bf16.mxu0 0
        %1530 = vmatpush1.bf16.msra.mxu0 0
        %1531 = vmatprep.subr.bf16.mxu0 0
        %1532 = vmatpush1.bf16.msra.mxu0 0
        %1533 = vmatprep.subr.bf16.mxu0 0
        %1534 = vmatpush1.bf16.msra.mxu0 0
        %1535 = vmatprep.subr.bf16.mxu0 0
        %1536 = vmatpush1.bf16.msra.mxu0 0
        %1537 = vmatprep.subr.bf16.mxu0 0
        %1538 = vmatpush1.bf16.msra.mxu0 0
        %1539 = vmatprep.subr.bf16.mxu0 0
        %1540 = vmatpush1.bf16.msra.mxu0 0
        %1541 = vmatprep.subr.bf16.mxu0 0
        %1542 = vmatpush1.bf16.msra.mxu0 0
        %1543 = vmatprep.subr.bf16.mxu0 0
        %1544 = vmatpush1.bf16.msra.mxu0 0
        %1545 = vmatprep.mubr.bf16.mxu0 0
        %1546 = vmatmul.mubr.bf16.gmra.mrb[0].mxu0 %v1473
        %v1547 = vpop.f32.mrb[0].mxu0
        %v1548 = vadd.f32 %v1497, %v1547
        %v1549 = vpop.f32.mrb[0].mxu0
        %v1550 = vpop.f32.mrb[0].mxu0
        %v1551 = vadd.f32 %v1498, %v1550
        %v1552 = vpop.f32.mrb[0].mxu0
        %1553 = vmatprep.mubr.bf16.mxu0 0
        %1554 = vmatmul.mubr.bf16.gmra.mrb[0].mxu0 %v1474
        %v1555 = vpop.f32.mrb[0].mxu0
        %v1556 = vadd.f32 %v1499, %v1555
        %v1557 = vpop.f32.mrb[0].mxu0
        %v1558 = vpop.f32.mrb[0].mxu0
        %v1559 = vadd.f32 %v1500, %v1558
        %v1560 = vpop.f32.mrb[0].mxu0
        %1561 = vmatprep.mubr.bf16.mxu0 0
        %1562 = vmatmul.mubr.bf16.gmra.mrb[0].mxu0 %v1475
        %v1563 = vpop.f32.mrb[0].mxu0
        %v1564 = vadd.f32 %v1501, %v1563
        %v1565 = vpop.f32.mrb[0].mxu0
        %v1566 = vpop.f32.mrb[0].mxu0
        %v1567 = vadd.f32 %v1502, %v1566
        %v1568 = vpop.f32.mrb[0].mxu0
        %1569 = vmatprep.mubr.bf16.mxu0 0
        %1570 = vmatmul.mubr.bf16.gmra.mrb[0].mxu0 %v1476
        %v1571 = vpop.f32.mrb[0].mxu0
        %v1572 = vadd.f32 %v1503, %v1571
        %v1573 = vpop.f32.mrb[0].mxu0
        %v1574 = vpop.f32.mrb[0].mxu0
        %v1575 = vadd.f32 %v1504, %v1574
        %v1576 = vpop.f32.mrb[0].mxu0
        %1577 = vmatprep.mubr.bf16.mxu0 0
        %1578 = vmatmul.mubr.bf16.gmra.mrb[0].mxu0 %v1477
        %v1579 = vpop.f32.mrb[0].mxu0
        %v1580 = vadd.f32 %v1505, %v1579
        %v1581 = vpop.f32.mrb[0].mxu0
        %v1582 = vpop.f32.mrb[0].mxu0
        %v1583 = vadd.f32 %v1506, %v1582
        %v1584 = vpop.f32.mrb[0].mxu0
        %1585 = vmatprep.mubr.bf16.mxu0 0
        %1586 = vmatmul.mubr.bf16.gmra.mrb[0].mxu0 %v1478
        %v1587 = vpop.f32.mrb[0].mxu0
        %v1588 = vadd.f32 %v1507, %v1587
        %v1589 = vpop.f32.mrb[0].mxu0
        %v1590 = vpop.f32.mrb[0].mxu0
        %v1591 = vadd.f32 %v1508, %v1590
        %v1592 = vpop.f32.mrb[0].mxu0
        %1593 = vmatprep.mubr.bf16.mxu0 0
        %1594 = vmatmul.mubr.bf16.gmra.mrb[0].mxu0 %v1479
        %v1595 = vpop.f32.mrb[0].mxu0
        %v1596 = vadd.f32 %v1509, %v1595
        %v1597 = vpop.f32.mrb[0].mxu0
        %v1598 = vpop.f32.mrb[0].mxu0
        %v1599 = vadd.f32 %v1510, %v1598
        %v1600 = vpop.f32.mrb[0].mxu0
        %1601 = vmatprep.mubr.bf16.mxu0 0
        %1602 = vmatmul.mubr.bf16.gmra.mrb[0].mxu0 %v1480
        %v1603 = vpop.f32.mrb[0].mxu0
        %v1604 = vadd.f32 %v1511, %v1603
        %v1605 = vpop.f32.mrb[0].mxu0
        %v1606 = vpop.f32.mrb[0].mxu0
        %v1607 = vadd.f32 %v1512, %v1606
        %v1608 = vpop.f32.mrb[0].mxu0
        %1609 = vdwg.mxu0
        %v1610 = vmax.f32 %v1548, 0.0
        %v1611 = vmax.f32 %v1551, 0.0
        %v1612 = vmax.f32 %v1556, 0.0
        %v1613 = vmax.f32 %v1559, 0.0
        %v1614 = vmax.f32 %v1564, 0.0
        %v1615 = vmax.f32 %v1567, 0.0
        %v1616 = vmax.f32 %v1572, 0.0
        %v1617 = vmax.f32 %v1575, 0.0
        %v1618 = vmax.f32 %v1580, 0.0
        %v1619 = vmax.f32 %v1583, 0.0
        %v1620 = vmax.f32 %v1588, 0.0
        %v1621 = vmax.f32 %v1591, 0.0
        %v1622 = vmax.f32 %v1596, 0.0
        %v1623 = vmax.f32 %v1599, 0.0
        %v1624 = vmax.f32 %v1604, 0.0
        %v1625 = vmax.f32 %v1607, 0.0
        %v1626 = vld [vmem:[#allocation5] sm:$0xff]
        %v1627 = vld [vmem:[#allocation5 + $0x8] sm:$0xff]
        %v1628 = vld [vmem:[#allocation5 + $0x10] sm:$0xff]
        %v1629 = vld [vmem:[#allocation5 + $0x18] sm:$0xff]
        %v1630 = vld [vmem:[#allocation5 + $0x20] sm:$0xff]
        %v1631 = vld [vmem:[#allocation5 + $0x28] sm:$0xff]
        %v1632 = vld [vmem:[#allocation5 + $0x30] sm:$0xff]
        %v1633 = vld [vmem:[#allocation5 + $0x38] sm:$0xff]
        %v1634 = vpack.c.bf16 %v1611, %v1610
        %v1635 = vpack.c.bf16 %v1613, %v1612
        %v1636 = vpack.c.bf16 %v1615, %v1614
        %v1637 = vpack.c.bf16 %v1617, %v1616
        %v1638 = vpack.c.bf16 %v1619, %v1618
        %v1639 = vpack.c.bf16 %v1621, %v1620
        %v1640 = vpack.c.bf16 %v1623, %v1622
        %v1641 = vpack.c.bf16 %v1625, %v1624
        %1642 = vmatprep.subr.bf16.mxu0 0
        %1643 = vmatpush1.bf16.msra.mxu0 %v1634
        %1644 = vmatprep.subr.bf16.mxu0 0
        %1645 = vmatpush1.bf16.msra.mxu0 %v1635
        %1646 = vmatprep.subr.bf16.mxu0 0
        %1647 = vmatpush1.bf16.msra.mxu0 %v1636
        %1648 = vmatprep.subr.bf16.mxu0 0
        %1649 = vmatpush1.bf16.msra.mxu0 %v1637
        %1650 = vmatprep.subr.bf16.mxu0 0
        %1651 = vmatpush1.bf16.msra.mxu0 %v1638
        %1652 = vmatprep.subr.bf16.mxu0 0
        %1653 = vmatpush1.bf16.msra.mxu0 %v1639
        %1654 = vmatprep.subr.bf16.mxu0 0
        %1655 = vmatpush1.bf16.msra.mxu0 %v1640
        %1656 = vmatprep.subr.bf16.mxu0 0
        %1657 = vmatpush1.bf16.msra.mxu0 %v1641
        %1658 = vmatprep.subr.bf16.mxu0 0
        %1659 = vmatpush1.bf16.msra.mxu0 0
        %1660 = vmatprep.subr.bf16.mxu0 0
        %1661 = vmatpush1.bf16.msra.mxu0 0
        %1662 = vmatprep.subr.bf16.mxu0 0
        %1663 = vmatpush1.bf16.msra.mxu0 0
        %1664 = vmatprep.subr.bf16.mxu0 0
        %1665 = vmatpush1.bf16.msra.mxu0 0
        %1666 = vmatprep.subr.bf16.mxu0 0
        %1667 = vmatpush1.bf16.msra.mxu0 0
        %1668 = vmatprep.subr.bf16.mxu0 0
        %1669 = vmatpush1.bf16.msra.mxu0 0
        %1670 = vmatprep.subr.bf16.mxu0 0
        %1671 = vmatpush1.bf16.msra.mxu0 0
        %1672 = vmatprep.subr.bf16.mxu0 0
        %1673 = vmatpush1.bf16.msra.mxu0 0
        %1674 = vmatprep.mubr.bf16.mxu0 0
        %1675 = vmatmul.mubr.bf16.gmra.mrb[0].mxu0 %v1626
        %v1676 = vpop.f32.mrb[0].mxu0
        %v1677 = vadd.f32 0.0, %v1676
        %v1678 = vpop.f32.mrb[0].mxu0
        %v1679 = vpop.f32.mrb[0].mxu0
        %v1680 = vadd.f32 0.0, %v1679
        %v1681 = vpop.f32.mrb[0].mxu0
        %1682 = vmatprep.mubr.bf16.mxu0 0
        %1683 = vmatmul.mubr.bf16.gmra.mrb[0].mxu0 %v1627
        %v1684 = vpop.f32.mrb[0].mxu0
        %v1685 = vadd.f32 0.0, %v1684
        %v1686 = vpop.f32.mrb[0].mxu0
        %v1687 = vpop.f32.mrb[0].mxu0
        %v1688 = vadd.f32 0.0, %v1687
        %v1689 = vpop.f32.mrb[0].mxu0
        %1690 = vmatprep.mubr.bf16.mxu0 0
        %1691 = vmatmul.mubr.bf16.gmra.mrb[0].mxu0 %v1628
        %v1692 = vpop.f32.mrb[0].mxu0
        %v1693 = vadd.f32 0.0, %v1692
        %v1694 = vpop.f32.mrb[0].mxu0
        %v1695 = vpop.f32.mrb[0].mxu0
        %v1696 = vadd.f32 0.0, %v1695
        %v1697 = vpop.f32.mrb[0].mxu0
        %1698 = vmatprep.mubr.bf16.mxu0 0
        %1699 = vmatmul.mubr.bf16.gmra.mrb[0].mxu0 %v1629
        %v1700 = vpop.f32.mrb[0].mxu0
        %v1701 = vadd.f32 0.0, %v1700
        %v1702 = vpop.f32.mrb[0].mxu0
        %v1703 = vpop.f32.mrb[0].mxu0
        %v1704 = vadd.f32 0.0, %v1703
        %v1705 = vpop.f32.mrb[0].mxu0
        %1706 = vmatprep.mubr.bf16.mxu0 0
        %1707 = vmatmul.mubr.bf16.gmra.mrb[0].mxu0 %v1630
        %v1708 = vpop.f32.mrb[0].mxu0
        %v1709 = vadd.f32 0.0, %v1708
        %v1710 = vpop.f32.mrb[0].mxu0
        %v1711 = vpop.f32.mrb[0].mxu0
        %v1712 = vadd.f32 0.0, %v1711
        %v1713 = vpop.f32.mrb[0].mxu0
        %1714 = vmatprep.mubr.bf16.mxu0 0
        %1715 = vmatmul.mubr.bf16.gmra.mrb[0].mxu0 %v1631
        %v1716 = vpop.f32.mrb[0].mxu0
        %v1717 = vadd.f32 0.0, %v1716
        %v1718 = vpop.f32.mrb[0].mxu0
        %v1719 = vpop.f32.mrb[0].mxu0
        %v1720 = vadd.f32 0.0, %v1719
        %v1721 = vpop.f32.mrb[0].mxu0
        %1722 = vmatprep.mubr.bf16.mxu0 0
        %1723 = vmatmul.mubr.bf16.gmra.mrb[0].mxu0 %v1632
        %v1724 = vpop.f32.mrb[0].mxu0
        %v1725 = vadd.f32 0.0, %v1724
        %v1726 = vpop.f32.mrb[0].mxu0
        %v1727 = vpop.f32.mrb[0].mxu0
        %v1728 = vadd.f32 0.0, %v1727
        %v1729 = vpop.f32.mrb[0].mxu0
        %1730 = vmatprep.mubr.bf16.mxu0 0
        %1731 = vmatmul.mubr.bf16.gmra.mrb[0].mxu0 %v1633
        %v1732 = vpop.f32.mrb[0].mxu0
        %v1733 = vadd.f32 0.0, %v1732
        %v1734 = vpop.f32.mrb[0].mxu0
        %v1735 = vpop.f32.mrb[0].mxu0
        %v1736 = vadd.f32 0.0, %v1735
        %v1737 = vpop.f32.mrb[0].mxu0
        %1738 = vdwg.mxu0
        %v1739 = vld [vmem:[%s930] sm:$0x1]
        %v1740 = vadd.f32 %v1739, 1.0
        %v1742 = vlaneseq
        %v1743 = vshrl.u32 %v1742, 7
        %v1744 = vsub.s32 0, %v1743
        %v1745 = vrot.slane %v1740, %v1744
        %v1747 = vmul.f32 %v1745, %v1449
        %v1748 = vmul.f32 %v1745, %v1450
        %v1749 = vmul.f32 %v1745, %v1451
        %v1750 = vmul.f32 %v1745, %v1452
        %v1751 = vmul.f32 %v1745, %v1453
        %v1752 = vmul.f32 %v1745, %v1454
        %v1753 = vmul.f32 %v1745, %v1455
        %v1754 = vmul.f32 %v1745, %v1456
        %v1755 = vmul.f32 %v1745, %v1457
        %v1756 = vmul.f32 %v1745, %v1458
        %v1757 = vmul.f32 %v1745, %v1459
        %v1758 = vmul.f32 %v1745, %v1460
        %v1759 = vmul.f32 %v1745, %v1461
        %v1760 = vmul.f32 %v1745, %v1462
        %v1761 = vmul.f32 %v1745, %v1463
        %v1762 = vmul.f32 %v1745, %v1464
        %v1763 = vadd.f32 %v1747, %v1677
        %v1764 = vadd.f32 %v1748, %v1680
        %v1765 = vadd.f32 %v1749, %v1685
        %v1766 = vadd.f32 %v1750, %v1688
        %v1767 = vadd.f32 %v1751, %v1693
        %v1768 = vadd.f32 %v1752, %v1696
        %v1769 = vadd.f32 %v1753, %v1701
        %v1770 = vadd.f32 %v1754, %v1704
        %v1771 = vadd.f32 %v1755, %v1709
        %v1772 = vadd.f32 %v1756, %v1712
        %v1773 = vadd.f32 %v1757, %v1717
        %v1774 = vadd.f32 %v1758, %v1720
        %v1775 = vadd.f32 %v1759, %v1725
        %v1776 = vadd.f32 %v1760, %v1728
        %v1777 = vadd.f32 %v1761, %v1733
        %v1778 = vadd.f32 %v1762, %v1736
        %v1779 = vpack.c.bf16 %v1764, %v1763
        %v1780 = vpack.c.bf16 %v1766, %v1765
        %v1781 = vpack.c.bf16 %v1768, %v1767
        %v1782 = vpack.c.bf16 %v1770, %v1769
        %v1783 = vpack.c.bf16 %v1772, %v1771
        %v1784 = vpack.c.bf16 %v1774, %v1773
        %v1785 = vpack.c.bf16 %v1776, %v1775
        %v1786 = vpack.c.bf16 %v1778, %v1777
        %v1787 = vld [vmem:[%s935] sm:$0xf]
        %v1788 = vld [vmem:[%s935 + $0x4] sm:$0xf]
        %v1789 = vld [vmem:[%s935 + $0x8] sm:$0xf]
        %v1790 = vld [vmem:[%s935 + $0xc] sm:$0xf]
        %v1791 = vld [vmem:[%s935 + $0x10] sm:$0xf]
        %v1792 = vld [vmem:[%s935 + $0x14] sm:$0xf]
        %v1793 = vld [vmem:[%s935 + $0x18] sm:$0xf]
        %v1794 = vld [vmem:[%s935 + $0x1c] sm:$0xf]
        %v1795 = vld [vmem:[%s935 + $0x20] sm:$0xf]
        %v1796 = vld [vmem:[%s935 + $0x24] sm:$0xf]
        %v1797 = vld [vmem:[%s935 + $0x28] sm:$0xf]
        %v1798 = vld [vmem:[%s935 + $0x2c] sm:$0xf]
        %v1799 = vld [vmem:[%s935 + $0x30] sm:$0xf]
        %v1800 = vld [vmem:[%s935 + $0x34] sm:$0xf]
        %v1801 = vld [vmem:[%s935 + $0x38] sm:$0xf]
        %v1802 = vld [vmem:[%s935 + $0x3c] sm:$0xf]
        %v1803 = vld [vmem:[%s938] sm:$0x1]
        %v1805 = vlaneseq
        %v1806 = vshrl.u32 %v1805, 7
        %v1807 = vsub.s32 0, %v1806
        %v1808 = vrot.slane %v1803, %v1807
        %v1826 = vunpack.c.l.b16 %v1787
        %v1827 = vunpack.c.l.b16 %v1788
        %v1828 = vunpack.c.l.b16 %v1789
        %v1829 = vunpack.c.l.b16 %v1790
        %v1830 = vunpack.c.l.b16 %v1791
        %v1831 = vunpack.c.l.b16 %v1792
        %v1832 = vunpack.c.l.b16 %v1793
        %v1833 = vunpack.c.l.b16 %v1794
        %v1834 = vunpack.c.l.b16 %v1795
        %v1835 = vunpack.c.l.b16 %v1796
        %v1836 = vunpack.c.l.b16 %v1797
        %v1837 = vunpack.c.l.b16 %v1798
        %v1838 = vunpack.c.l.b16 %v1799
        %v1839 = vunpack.c.l.b16 %v1800
        %v1840 = vunpack.c.l.b16 %v1801
        %v1841 = vunpack.c.l.b16 %v1802
        %v1842 = vpack.c.b16 %v1827, %v1826
        %v1843 = vpack.c.b16 %v1829, %v1828
        %v1844 = vpack.c.b16 %v1831, %v1830
        %v1845 = vpack.c.b16 %v1833, %v1832
        %v1846 = vpack.c.b16 %v1835, %v1834
        %v1847 = vpack.c.b16 %v1837, %v1836
        %v1848 = vpack.c.b16 %v1839, %v1838
        %v1849 = vpack.c.b16 %v1841, %v1840
        %1858 = vmatprep.subr.bf16.mxu0 0
        %1859 = vmatpush1.bf16.msra.mxu0 %v1842
        %1860 = vmatprep.subr.bf16.mxu0 0
        %1861 = vmatpush1.bf16.msra.mxu0 %v1843
        %1862 = vmatprep.subr.bf16.mxu0 0
        %1863 = vmatpush1.bf16.msra.mxu0 %v1844
        %1864 = vmatprep.subr.bf16.mxu0 0
        %1865 = vmatpush1.bf16.msra.mxu0 %v1845
        %1866 = vmatprep.subr.bf16.mxu0 0
        %1867 = vmatpush1.bf16.msra.mxu0 %v1846
        %1868 = vmatprep.subr.bf16.mxu0 0
        %1869 = vmatpush1.bf16.msra.mxu0 %v1847
        %1870 = vmatprep.subr.bf16.mxu0 0
        %1871 = vmatpush1.bf16.msra.mxu0 %v1848
        %1872 = vmatprep.subr.bf16.mxu0 0
        %1873 = vmatpush1.bf16.msra.mxu0 %v1849
        %1874 = vmatprep.subr.bf16.mxu0 0
        %1875 = vmatpush1.bf16.msra.mxu0 0
        %1876 = vmatprep.subr.bf16.mxu0 0
        %1877 = vmatpush1.bf16.msra.mxu0 0
        %1878 = vmatprep.subr.bf16.mxu0 0
        %1879 = vmatpush1.bf16.msra.mxu0 0
        %1880 = vmatprep.subr.bf16.mxu0 0
        %1881 = vmatpush1.bf16.msra.mxu0 0
        %1882 = vmatprep.subr.bf16.mxu0 0
        %1883 = vmatpush1.bf16.msra.mxu0 0
        %1884 = vmatprep.subr.bf16.mxu0 0
        %1885 = vmatpush1.bf16.msra.mxu0 0
        %1886 = vmatprep.subr.bf16.mxu0 0
        %1887 = vmatpush1.bf16.msra.mxu0 0
        %1888 = vmatprep.subr.bf16.mxu0 0
        %1889 = vmatpush1.bf16.msra.mxu0 0
        %1890 = vmatprep.mubr.bf16.mxu0 0
        %1891 = vmatmul.mubr.bf16.gmra.mrb[0].mxu0 %v1779
        %v1892 = vpop.f32.mrb[0].mxu0
        %v1893 = vadd.f32 %v1808, %v1892
        %v1894 = vpop.f32.mrb[0].mxu0
        %v1895 = vpop.f32.mrb[0].mxu0
        %v1896 = vadd.f32 %v1808, %v1895
        %v1897 = vpop.f32.mrb[0].mxu0
        %1898 = vmatprep.mubr.bf16.mxu0 0
        %1899 = vmatmul.mubr.bf16.gmra.mrb[0].mxu0 %v1780
        %v1900 = vpop.f32.mrb[0].mxu0
        %v1901 = vadd.f32 %v1808, %v1900
        %v1902 = vpop.f32.mrb[0].mxu0
        %v1903 = vpop.f32.mrb[0].mxu0
        %v1904 = vadd.f32 %v1808, %v1903
        %v1905 = vpop.f32.mrb[0].mxu0
        %1906 = vmatprep.mubr.bf16.mxu0 0
        %1907 = vmatmul.mubr.bf16.gmra.mrb[0].mxu0 %v1781
        %v1908 = vpop.f32.mrb[0].mxu0
        %v1909 = vadd.f32 %v1808, %v1908
        %v1910 = vpop.f32.mrb[0].mxu0
        %v1911 = vpop.f32.mrb[0].mxu0
        %v1912 = vadd.f32 %v1808, %v1911
        %v1913 = vpop.f32.mrb[0].mxu0
        %1914 = vmatprep.mubr.bf16.mxu0 0
        %1915 = vmatmul.mubr.bf16.gmra.mrb[0].mxu0 %v1782
        %v1916 = vpop.f32.mrb[0].mxu0
        %v1917 = vadd.f32 %v1808, %v1916
        %v1918 = vpop.f32.mrb[0].mxu0
        %v1919 = vpop.f32.mrb[0].mxu0
        %v1920 = vadd.f32 %v1808, %v1919
        %v1921 = vpop.f32.mrb[0].mxu0
        %1922 = vmatprep.mubr.bf16.mxu0 0
        %1923 = vmatmul.mubr.bf16.gmra.mrb[0].mxu0 %v1783
        %v1924 = vpop.f32.mrb[0].mxu0
        %v1925 = vadd.f32 %v1808, %v1924
        %v1926 = vpop.f32.mrb[0].mxu0
        %v1927 = vpop.f32.mrb[0].mxu0
        %v1928 = vadd.f32 %v1808, %v1927
        %v1929 = vpop.f32.mrb[0].mxu0
        %1930 = vmatprep.mubr.bf16.mxu0 0
        %1931 = vmatmul.mubr.bf16.gmra.mrb[0].mxu0 %v1784
        %v1932 = vpop.f32.mrb[0].mxu0
        %v1933 = vadd.f32 %v1808, %v1932
        %v1934 = vpop.f32.mrb[0].mxu0
        %v1935 = vpop.f32.mrb[0].mxu0
        %v1936 = vadd.f32 %v1808, %v1935
        %v1937 = vpop.f32.mrb[0].mxu0
        %1938 = vmatprep.mubr.bf16.mxu0 0
        %1939 = vmatmul.mubr.bf16.gmra.mrb[0].mxu0 %v1785
        %v1940 = vpop.f32.mrb[0].mxu0
        %v1941 = vadd.f32 %v1808, %v1940
        %v1942 = vpop.f32.mrb[0].mxu0
        %v1943 = vpop.f32.mrb[0].mxu0
        %v1944 = vadd.f32 %v1808, %v1943
        %v1945 = vpop.f32.mrb[0].mxu0
        %1946 = vmatprep.mubr.bf16.mxu0 0
        %1947 = vmatmul.mubr.bf16.gmra.mrb[0].mxu0 %v1786
        %v1948 = vpop.f32.mrb[0].mxu0
        %v1949 = vadd.f32 %v1808, %v1948
        %v1950 = vpop.f32.mrb[0].mxu0
        %v1951 = vpop.f32.mrb[0].mxu0
        %v1952 = vadd.f32 %v1808, %v1951
        %v1953 = vpop.f32.mrb[0].mxu0
        %1954 = vdwg.mxu0
        %v1955 = vmax.f32 %v1893, 0.0
        %v1956 = vmax.f32 %v1896, 0.0
        %v1957 = vmax.f32 %v1901, 0.0
        %v1958 = vmax.f32 %v1904, 0.0
        %v1959 = vmax.f32 %v1909, 0.0
        %v1960 = vmax.f32 %v1912, 0.0
        %v1961 = vmax.f32 %v1917, 0.0
        %v1962 = vmax.f32 %v1920, 0.0
        %v1963 = vmax.f32 %v1925, 0.0
        %v1964 = vmax.f32 %v1928, 0.0
        %v1965 = vmax.f32 %v1933, 0.0
        %v1966 = vmax.f32 %v1936, 0.0
        %v1967 = vmax.f32 %v1941, 0.0
        %v1968 = vmax.f32 %v1944, 0.0
        %v1969 = vmax.f32 %v1949, 0.0
        %v1970 = vmax.f32 %v1952, 0.0
        %v1971 = vpack.c.bf16 %v1956, %v1955
        %v1972 = vpack.c.bf16 %v1958, %v1957
        %v1973 = vpack.c.bf16 %v1960, %v1959
        %v1974 = vpack.c.bf16 %v1962, %v1961
        %v1975 = vpack.c.bf16 %v1964, %v1963
        %v1976 = vpack.c.bf16 %v1966, %v1965
        %v1977 = vpack.c.bf16 %v1968, %v1967
        %v1978 = vpack.c.bf16 %v1970, %v1969
        %v1979 = vld [vmem:[%s943] sm:$0xf]
        %v1980 = vld [vmem:[%s943 + $0x4] sm:$0xf]
        %v1981 = vld [vmem:[%s943 + $0x8] sm:$0xf]
        %v1982 = vld [vmem:[%s943 + $0xc] sm:$0xf]
        %v1983 = vld [vmem:[%s943 + $0x10] sm:$0xf]
        %v1984 = vld [vmem:[%s943 + $0x14] sm:$0xf]
        %v1985 = vld [vmem:[%s943 + $0x18] sm:$0xf]
        %v1986 = vld [vmem:[%s943 + $0x1c] sm:$0xf]
        %v1987 = vld [vmem:[%s943 + $0x20] sm:$0xf]
        %v1988 = vld [vmem:[%s943 + $0x24] sm:$0xf]
        %v1989 = vld [vmem:[%s943 + $0x28] sm:$0xf]
        %v1990 = vld [vmem:[%s943 + $0x2c] sm:$0xf]
        %v1991 = vld [vmem:[%s943 + $0x30] sm:$0xf]
        %v1992 = vld [vmem:[%s943 + $0x34] sm:$0xf]
        %v1993 = vld [vmem:[%s943 + $0x38] sm:$0xf]
        %v1994 = vld [vmem:[%s943 + $0x3c] sm:$0xf]
        %v1995 = vld [vmem:[%s946] sm:$0x1]
        %v1997 = vlaneseq
        %v1998 = vshrl.u32 %v1997, 7
        %v1999 = vsub.s32 0, %v1998
        %v2000 = vrot.slane %v1995, %v1999
        %v2018 = vunpack.c.l.b16 %v1979
        %v2019 = vunpack.c.l.b16 %v1980
        %v2020 = vunpack.c.l.b16 %v1981
        %v2021 = vunpack.c.l.b16 %v1982
        %v2022 = vunpack.c.l.b16 %v1983
        %v2023 = vunpack.c.l.b16 %v1984
        %v2024 = vunpack.c.l.b16 %v1985
        %v2025 = vunpack.c.l.b16 %v1986
        %v2026 = vunpack.c.l.b16 %v1987
        %v2027 = vunpack.c.l.b16 %v1988
        %v2028 = vunpack.c.l.b16 %v1989
        %v2029 = vunpack.c.l.b16 %v1990
        %v2030 = vunpack.c.l.b16 %v1991
        %v2031 = vunpack.c.l.b16 %v1992
        %v2032 = vunpack.c.l.b16 %v1993
        %v2033 = vunpack.c.l.b16 %v1994
        %v2034 = vpack.c.b16 %v2019, %v2018
        %v2035 = vpack.c.b16 %v2021, %v2020
        %v2036 = vpack.c.b16 %v2023, %v2022
        %v2037 = vpack.c.b16 %v2025, %v2024
        %v2038 = vpack.c.b16 %v2027, %v2026
        %v2039 = vpack.c.b16 %v2029, %v2028
        %v2040 = vpack.c.b16 %v2031, %v2030
        %v2041 = vpack.c.b16 %v2033, %v2032
        %2050 = vmatprep.subr.bf16.mxu0 0
        %2051 = vmatpush1.bf16.msra.mxu0 %v2034
        %2052 = vmatprep.subr.bf16.mxu0 0
        %2053 = vmatpush1.bf16.msra.mxu0 %v2035
        %2054 = vmatprep.subr.bf16.mxu0 0
        %2055 = vmatpush1.bf16.msra.mxu0 %v2036
        %2056 = vmatprep.subr.bf16.mxu0 0
        %2057 = vmatpush1.bf16.msra.mxu0 %v2037
        %2058 = vmatprep.subr.bf16.mxu0 0
        %2059 = vmatpush1.bf16.msra.mxu0 %v2038
        %2060 = vmatprep.subr.bf16.mxu0 0
        %2061 = vmatpush1.bf16.msra.mxu0 %v2039
        %2062 = vmatprep.subr.bf16.mxu0 0
        %2063 = vmatpush1.bf16.msra.mxu0 %v2040
        %2064 = vmatprep.subr.bf16.mxu0 0
        %2065 = vmatpush1.bf16.msra.mxu0 %v2041
        %2066 = vmatprep.subr.bf16.mxu0 0
        %2067 = vmatpush1.bf16.msra.mxu0 0
        %2068 = vmatprep.subr.bf16.mxu0 0
        %2069 = vmatpush1.bf16.msra.mxu0 0
        %2070 = vmatprep.subr.bf16.mxu0 0
        %2071 = vmatpush1.bf16.msra.mxu0 0
        %2072 = vmatprep.subr.bf16.mxu0 0
        %2073 = vmatpush1.bf16.msra.mxu0 0
        %2074 = vmatprep.subr.bf16.mxu0 0
        %2075 = vmatpush1.bf16.msra.mxu0 0
        %2076 = vmatprep.subr.bf16.mxu0 0
        %2077 = vmatpush1.bf16.msra.mxu0 0
        %2078 = vmatprep.subr.bf16.mxu0 0
        %2079 = vmatpush1.bf16.msra.mxu0 0
        %2080 = vmatprep.subr.bf16.mxu0 0
        %2081 = vmatpush1.bf16.msra.mxu0 0
        %2082 = vmatprep.mubr.bf16.mxu0 0
        %2083 = vmatmul.mubr.bf16.gmra.mrb[0].mxu0 %v1971
        %v2084 = vpop.f32.mrb[0].mxu0
        %v2085 = vadd.f32 %v2000, %v2084
        %v2086 = vpop.f32.mrb[0].mxu0
        %v2087 = vpop.f32.mrb[0].mxu0
        %v2088 = vadd.f32 %v2000, %v2087
        %v2089 = vpop.f32.mrb[0].mxu0
        %2090 = vmatprep.mubr.bf16.mxu0 0
        %2091 = vmatmul.mubr.bf16.gmra.mrb[0].mxu0 %v1972
        %v2092 = vpop.f32.mrb[0].mxu0
        %v2093 = vadd.f32 %v2000, %v2092
        %v2094 = vpop.f32.mrb[0].mxu0
        %v2095 = vpop.f32.mrb[0].mxu0
        %v2096 = vadd.f32 %v2000, %v2095
        %v2097 = vpop.f32.mrb[0].mxu0
        %2098 = vmatprep.mubr.bf16.mxu0 0
        %2099 = vmatmul.mubr.bf16.gmra.mrb[0].mxu0 %v1973
        %v2100 = vpop.f32.mrb[0].mxu0
        %v2101 = vadd.f32 %v2000, %v2100
        %v2102 = vpop.f32.mrb[0].mxu0
        %v2103 = vpop.f32.mrb[0].mxu0
        %v2104 = vadd.f32 %v2000, %v2103
        %v2105 = vpop.f32.mrb[0].mxu0
        %2106 = vmatprep.mubr.bf16.mxu0 0
        %2107 = vmatmul.mubr.bf16.gmra.mrb[0].mxu0 %v1974
        %v2108 = vpop.f32.mrb[0].mxu0
        %v2109 = vadd.f32 %v2000, %v2108
        %v2110 = vpop.f32.mrb[0].mxu0
        %v2111 = vpop.f32.mrb[0].mxu0
        %v2112 = vadd.f32 %v2000, %v2111
        %v2113 = vpop.f32.mrb[0].mxu0
        %2114 = vmatprep.mubr.bf16.mxu0 0
        %2115 = vmatmul.mubr.bf16.gmra.mrb[0].mxu0 %v1975
        %v2116 = vpop.f32.mrb[0].mxu0
        %v2117 = vadd.f32 %v2000, %v2116
        %v2118 = vpop.f32.mrb[0].mxu0
        %v2119 = vpop.f32.mrb[0].mxu0
        %v2120 = vadd.f32 %v2000, %v2119
        %v2121 = vpop.f32.mrb[0].mxu0
        %2122 = vmatprep.mubr.bf16.mxu0 0
        %2123 = vmatmul.mubr.bf16.gmra.mrb[0].mxu0 %v1976
        %v2124 = vpop.f32.mrb[0].mxu0
        %v2125 = vadd.f32 %v2000, %v2124
        %v2126 = vpop.f32.mrb[0].mxu0
        %v2127 = vpop.f32.mrb[0].mxu0
        %v2128 = vadd.f32 %v2000, %v2127
        %v2129 = vpop.f32.mrb[0].mxu0
        %2130 = vmatprep.mubr.bf16.mxu0 0
        %2131 = vmatmul.mubr.bf16.gmra.mrb[0].mxu0 %v1977
        %v2132 = vpop.f32.mrb[0].mxu0
        %v2133 = vadd.f32 %v2000, %v2132
        %v2134 = vpop.f32.mrb[0].mxu0
        %v2135 = vpop.f32.mrb[0].mxu0
        %v2136 = vadd.f32 %v2000, %v2135
        %v2137 = vpop.f32.mrb[0].mxu0
        %2138 = vmatprep.mubr.bf16.mxu0 0
        %2139 = vmatmul.mubr.bf16.gmra.mrb[0].mxu0 %v1978
        %v2140 = vpop.f32.mrb[0].mxu0
        %v2141 = vadd.f32 %v2000, %v2140
        %v2142 = vpop.f32.mrb[0].mxu0
        %v2143 = vpop.f32.mrb[0].mxu0
        %v2144 = vadd.f32 %v2000, %v2143
        %v2145 = vpop.f32.mrb[0].mxu0
        %2146 = vdwg.mxu0
        %p2147 = scmp.lt.s32.totalorder %s41, 2
        // Predicated region
        $region141: #{tpu_custom_call.1} parent=115 // pred_check
          %p2148 = pneg %p2147
        $region142: #{tpu_custom_call.1} parent=115 // pred_check_branch
          %2150 = sbr.rel (%p2148) target = $region144
        $region143: #{tpu_custom_call.1} parent=115 // pred_region
          %v2151 = vld [vmem:[#allocation7] sm:$0xf]
          %v2152 = vld [vmem:[#allocation3] sm:$0xff]
          %2153 = vmatprep.subr.bf16.mxu0 0
          %2154 = vmatpush1.bf16.msra.mxu0 %v1465
          %2155 = vmatprep.subr.bf16.mxu0 0
          %2156 = vmatpush1.bf16.msra.mxu0 %v1466
          %2157 = vmatprep.subr.bf16.mxu0 0
          %2158 = vmatpush1.bf16.msra.mxu0 %v1467
          %2159 = vmatprep.subr.bf16.mxu0 0
          %2160 = vmatpush1.bf16.msra.mxu0 %v1468
          %2161 = vmatprep.subr.bf16.mxu0 0
          %2162 = vmatpush1.bf16.msra.mxu0 %v1469
          %2163 = vmatprep.subr.bf16.mxu0 0
          %2164 = vmatpush1.bf16.msra.mxu0 %v1470
          %2165 = vmatprep.subr.bf16.mxu0 0
          %2166 = vmatpush1.bf16.msra.mxu0 %v1471
          %2167 = vmatprep.subr.bf16.mxu0 0
          %2168 = vmatpush1.bf16.msra.mxu0 %v1472
          %2169 = vmatprep.subr.bf16.mxu0 0
          %2170 = vmatpush1.bf16.msra.mxu0 0
          %2171 = vmatprep.subr.bf16.mxu0 0
          %2172 = vmatpush1.bf16.msra.mxu0 0
          %2173 = vmatprep.subr.bf16.mxu0 0
          %2174 = vmatpush1.bf16.msra.mxu0 0
          %2175 = vmatprep.subr.bf16.mxu0 0
          %2176 = vmatpush1.bf16.msra.mxu0 0
          %2177 = vmatprep.subr.bf16.mxu0 0
          %2178 = vmatpush1.bf16.msra.mxu0 0
          %2179 = vmatprep.subr.bf16.mxu0 0
          %2180 = vmatpush1.bf16.msra.mxu0 0
          %2181 = vmatprep.subr.bf16.mxu0 0
          %2182 = vmatpush1.bf16.msra.mxu0 0
          %2183 = vmatprep.subr.bf16.mxu0 0
          %2184 = vmatpush1.bf16.msra.mxu0 0
          %2185 = vmatprep.mubr.bf16.mxu0 0
          %2186 = vmatmul.mubr.bf16.gmra.mrb[0].mxu0 %v2151
          %v2187 = vpop.f32.mrb[0].mxu0
          %v2188 = vadd.f32 %v2152, %v2187
          %v2189 = vpop.f32.mrb[0].mxu0
          %v2190 = vpop.f32.mrb[0].mxu0
          %v2191 = vpop.f32.mrb[0].mxu0
          %2192 = vdwg.mxu0
          %v2193 = vpack.c.bf16 %v2188, %v2188
          %v2194 = vld [vmem:[%s819] sm:$0xf]
          %v2195 = vld [vmem:[%s819 + $0x4] sm:$0xf]
          %v2196 = vld [vmem:[%s819 + $0x8] sm:$0xf]
          %v2197 = vld [vmem:[%s819 + $0xc] sm:$0xf]
          %v2198 = vld [vmem:[%s819 + $0x10] sm:$0xf]
          %v2199 = vld [vmem:[%s819 + $0x14] sm:$0xf]
          %v2200 = vld [vmem:[%s819 + $0x18] sm:$0xf]
          %v2201 = vld [vmem:[%s819 + $0x1c] sm:$0xf]
          %v2202 = vld [vmem:[%s819 + $0x20] sm:$0xf]
          %v2203 = vld [vmem:[%s819 + $0x24] sm:$0xf]
          %v2204 = vld [vmem:[%s819 + $0x28] sm:$0xf]
          %v2205 = vld [vmem:[%s819 + $0x2c] sm:$0xf]
          %v2206 = vld [vmem:[%s819 + $0x30] sm:$0xf]
          %v2207 = vld [vmem:[%s819 + $0x34] sm:$0xf]
          %v2208 = vld [vmem:[%s819 + $0x38] sm:$0xf]
          %v2209 = vld [vmem:[%s819 + $0x3c] sm:$0xf]
          %v2210 = vld [vmem:[%s949] sm:$0x1]
          %v2212 = vlaneseq
          %v2213 = vshrl.u32 %v2212, 7
          %v2214 = vsub.s32 0, %v2213
          %v2215 = vrot.slane %v2210, %v2214
          %v2233 = vunpack.c.l.b16 %v2194
          %v2234 = vunpack.c.l.b16 %v2195
          %v2235 = vunpack.c.l.b16 %v2196
          %v2236 = vunpack.c.l.b16 %v2197
          %v2237 = vunpack.c.l.b16 %v2198
          %v2238 = vunpack.c.l.b16 %v2199
          %v2239 = vunpack.c.l.b16 %v2200
          %v2240 = vunpack.c.l.b16 %v2201
          %v2241 = vunpack.c.l.b16 %v2202
          %v2242 = vunpack.c.l.b16 %v2203
          %v2243 = vunpack.c.l.b16 %v2204
          %v2244 = vunpack.c.l.b16 %v2205
          %v2245 = vunpack.c.l.b16 %v2206
          %v2246 = vunpack.c.l.b16 %v2207
          %v2247 = vunpack.c.l.b16 %v2208
          %v2248 = vunpack.c.l.b16 %v2209
          %v2249 = vpack.c.b16 %v2234, %v2233
          %v2250 = vpack.c.b16 %v2236, %v2235
          %v2251 = vpack.c.b16 %v2238, %v2237
          %v2252 = vpack.c.b16 %v2240, %v2239
          %v2253 = vpack.c.b16 %v2242, %v2241
          %v2254 = vpack.c.b16 %v2244, %v2243
          %v2255 = vpack.c.b16 %v2246, %v2245
          %v2256 = vpack.c.b16 %v2248, %v2247
          %2265 = vmatprep.subr.bf16.mxu0 0
          %2266 = vmatpush1.bf16.msra.mxu0 %v2249
          %2267 = vmatprep.subr.bf16.mxu0 0
          %2268 = vmatpush1.bf16.msra.mxu0 %v2250
          %2269 = vmatprep.subr.bf16.mxu0 0
          %2270 = vmatpush1.bf16.msra.mxu0 %v2251
          %2271 = vmatprep.subr.bf16.mxu0 0
          %2272 = vmatpush1.bf16.msra.mxu0 %v2252
          %2273 = vmatprep.subr.bf16.mxu0 0
          %2274 = vmatpush1.bf16.msra.mxu0 %v2253
          %2275 = vmatprep.subr.bf16.mxu0 0
          %2276 = vmatpush1.bf16.msra.mxu0 %v2254
          %2277 = vmatprep.subr.bf16.mxu0 0
          %2278 = vmatpush1.bf16.msra.mxu0 %v2255
          %2279 = vmatprep.subr.bf16.mxu0 0
          %2280 = vmatpush1.bf16.msra.mxu0 %v2256
          %2281 = vmatprep.subr.bf16.mxu0 0
          %2282 = vmatpush1.bf16.msra.mxu0 0
          %2283 = vmatprep.subr.bf16.mxu0 0
          %2284 = vmatpush1.bf16.msra.mxu0 0
          %2285 = vmatprep.subr.bf16.mxu0 0
          %2286 = vmatpush1.bf16.msra.mxu0 0
          %2287 = vmatprep.subr.bf16.mxu0 0
          %2288 = vmatpush1.bf16.msra.mxu0 0
          %2289 = vmatprep.subr.bf16.mxu0 0
          %2290 = vmatpush1.bf16.msra.mxu0 0
          %2291 = vmatprep.subr.bf16.mxu0 0
          %2292 = vmatpush1.bf16.msra.mxu0 0
          %2293 = vmatprep.subr.bf16.mxu0 0
          %2294 = vmatpush1.bf16.msra.mxu0 0
          %2295 = vmatprep.subr.bf16.mxu0 0
          %2296 = vmatpush1.bf16.msra.mxu0 0
          %2297 = vmatprep.mubr.bf16.mxu0 0
          %2298 = vmatmul.mubr.bf16.gmra.mrb[0].mxu0 %v2193
          %v2299 = vpop.f32.mrb[0].mxu0
          %v2300 = vadd.f32 %v2215, %v2299
          %v2301 = vpop.f32.mrb[0].mxu0
          %v2302 = vpop.f32.mrb[0].mxu0
          %v2303 = vpop.f32.mrb[0].mxu0
          %2304 = vdwg.mxu0
          %v2305 = vmax.f32 %v2300, 0.0
          %v2306 = vpack.c.bf16 %v2305, %v2305
          %v2307 = vld [vmem:[%s828] sm:$0xf]
          %v2308 = vld [vmem:[%s828 + $0x4] sm:$0xf]
          %v2309 = vld [vmem:[%s828 + $0x8] sm:$0xf]
          %v2310 = vld [vmem:[%s828 + $0xc] sm:$0xf]
          %v2311 = vld [vmem:[%s828 + $0x10] sm:$0xf]
          %v2312 = vld [vmem:[%s828 + $0x14] sm:$0xf]
          %v2313 = vld [vmem:[%s828 + $0x18] sm:$0xf]
          %v2314 = vld [vmem:[%s828 + $0x1c] sm:$0xf]
          %v2315 = vld [vmem:[%s828 + $0x20] sm:$0xf]
          %v2316 = vld [vmem:[%s828 + $0x24] sm:$0xf]
          %v2317 = vld [vmem:[%s828 + $0x28] sm:$0xf]
          %v2318 = vld [vmem:[%s828 + $0x2c] sm:$0xf]
          %v2319 = vld [vmem:[%s828 + $0x30] sm:$0xf]
          %v2320 = vld [vmem:[%s828 + $0x34] sm:$0xf]
          %v2321 = vld [vmem:[%s828 + $0x38] sm:$0xf]
          %v2322 = vld [vmem:[%s828 + $0x3c] sm:$0xf]
          %v2323 = vld [vmem:[%s952] sm:$0x1]
          %v2325 = vlaneseq
          %v2326 = vshrl.u32 %v2325, 7
          %v2327 = vsub.s32 0, %v2326
          %v2328 = vrot.slane %v2323, %v2327
          %v2346 = vunpack.c.l.b16 %v2307
          %v2347 = vunpack.c.l.b16 %v2308
          %v2348 = vunpack.c.l.b16 %v2309
          %v2349 = vunpack.c.l.b16 %v2310
          %v2350 = vunpack.c.l.b16 %v2311
          %v2351 = vunpack.c.l.b16 %v2312
          %v2352 = vunpack.c.l.b16 %v2313
          %v2353 = vunpack.c.l.b16 %v2314
          %v2354 = vunpack.c.l.b16 %v2315
          %v2355 = vunpack.c.l.b16 %v2316
          %v2356 = vunpack.c.l.b16 %v2317
          %v2357 = vunpack.c.l.b16 %v2318
          %v2358 = vunpack.c.l.b16 %v2319
          %v2359 = vunpack.c.l.b16 %v2320
          %v2360 = vunpack.c.l.b16 %v2321
          %v2361 = vunpack.c.l.b16 %v2322
          %v2362 = vpack.c.b16 %v2347, %v2346
          %v2363 = vpack.c.b16 %v2349, %v2348
          %v2364 = vpack.c.b16 %v2351, %v2350
          %v2365 = vpack.c.b16 %v2353, %v2352
          %v2366 = vpack.c.b16 %v2355, %v2354
          %v2367 = vpack.c.b16 %v2357, %v2356
          %v2368 = vpack.c.b16 %v2359, %v2358
          %v2369 = vpack.c.b16 %v2361, %v2360
          %2378 = vmatprep.subr.bf16.mxu0 0
          %2379 = vmatpush1.bf16.msra.mxu0 %v2362
          %2380 = vmatprep.subr.bf16.mxu0 0
          %2381 = vmatpush1.bf16.msra.mxu0 %v2363
          %2382 = vmatprep.subr.bf16.mxu0 0
          %2383 = vmatpush1.bf16.msra.mxu0 %v2364
          %2384 = vmatprep.subr.bf16.mxu0 0
          %2385 = vmatpush1.bf16.msra.mxu0 %v2365
          %2386 = vmatprep.subr.bf16.mxu0 0
          %2387 = vmatpush1.bf16.msra.mxu0 %v2366
          %2388 = vmatprep.subr.bf16.mxu0 0
          %2389 = vmatpush1.bf16.msra.mxu0 %v2367
          %2390 = vmatprep.subr.bf16.mxu0 0
          %2391 = vmatpush1.bf16.msra.mxu0 %v2368
          %2392 = vmatprep.subr.bf16.mxu0 0
          %2393 = vmatpush1.bf16.msra.mxu0 %v2369
          %2394 = vmatprep.subr.bf16.mxu0 0
          %2395 = vmatpush1.bf16.msra.mxu0 0
          %2396 = vmatprep.subr.bf16.mxu0 0
          %2397 = vmatpush1.bf16.msra.mxu0 0
          %2398 = vmatprep.subr.bf16.mxu0 0
          %2399 = vmatpush1.bf16.msra.mxu0 0
          %2400 = vmatprep.subr.bf16.mxu0 0
          %2401 = vmatpush1.bf16.msra.mxu0 0
          %2402 = vmatprep.subr.bf16.mxu0 0
          %2403 = vmatpush1.bf16.msra.mxu0 0
          %2404 = vmatprep.subr.bf16.mxu0 0
          %2405 = vmatpush1.bf16.msra.mxu0 0
          %2406 = vmatprep.subr.bf16.mxu0 0
          %2407 = vmatpush1.bf16.msra.mxu0 0
          %2408 = vmatprep.subr.bf16.mxu0 0
          %2409 = vmatpush1.bf16.msra.mxu0 0
          %2410 = vmatprep.mubr.bf16.mxu0 0
          %2411 = vmatmul.mubr.bf16.gmra.mrb[0].mxu0 %v2306
          %v2412 = vpop.f32.mrb[0].mxu0
          %v2413 = vadd.f32 %v2328, %v2412
          %v2414 = vpop.f32.mrb[0].mxu0
          %v2415 = vpop.f32.mrb[0].mxu0
          %v2416 = vpop.f32.mrb[0].mxu0
          %2417 = vdwg.mxu0
          %v2418 = vmax.f32 %v2413, 0.0
          %2419 = vst [vmem:[#allocation3] sm:$0xff] %v2418
          %v2420 = vmax.f32 %v2085, 0.0
          %v2421 = vmax.f32 %v2088, 0.0
          %v2422 = vmax.f32 %v2093, 0.0
          %v2423 = vmax.f32 %v2096, 0.0
          %v2424 = vmax.f32 %v2101, 0.0
          %v2425 = vmax.f32 %v2104, 0.0
          %v2426 = vmax.f32 %v2109, 0.0
          %v2427 = vmax.f32 %v2112, 0.0
          %v2428 = vmax.f32 %v2117, 0.0
          %v2429 = vmax.f32 %v2120, 0.0
          %v2430 = vmax.f32 %v2125, 0.0
          %v2431 = vmax.f32 %v2128, 0.0
          %v2432 = vmax.f32 %v2133, 0.0
          %v2433 = vmax.f32 %v2136, 0.0
          %v2434 = vmax.f32 %v2141, 0.0
          %v2435 = vmax.f32 %v2144, 0.0
          %2436 = vst [vmem:[#allocation2] sm:$0xff] %v2420
          %2437 = vst [vmem:[#allocation2 + $0x8] sm:$0xff] %v2421
          %2438 = vst [vmem:[#allocation2 + $0x10] sm:$0xff] %v2422
          %2439 = vst [vmem:[#allocation2 + $0x18] sm:$0xff] %v2423
          %2440 = vst [vmem:[#allocation2 + $0x20] sm:$0xff] %v2424
          %2441 = vst [vmem:[#allocation2 + $0x28] sm:$0xff] %v2425
          %2442 = vst [vmem:[#allocation2 + $0x30] sm:$0xff] %v2426
          %2443 = vst [vmem:[#allocation2 + $0x38] sm:$0xff] %v2427
          %2444 = vst [vmem:[#allocation2 + $0x40] sm:$0xff] %v2428
          %2445 = vst [vmem:[#allocation2 + $0x48] sm:$0xff] %v2429
          %2446 = vst [vmem:[#allocation2 + $0x50] sm:$0xff] %v2430
          %2447 = vst [vmem:[#allocation2 + $0x58] sm:$0xff] %v2431
          %2448 = vst [vmem:[#allocation2 + $0x60] sm:$0xff] %v2432
          %2449 = vst [vmem:[#allocation2 + $0x68] sm:$0xff] %v2433
          %2450 = vst [vmem:[#allocation2 + $0x70] sm:$0xff] %v2434
          %2451 = vst [vmem:[#allocation2 + $0x78] sm:$0xff] %v2435
        $region144: #{tpu_custom_call.1} parent=115 // pred_fallthru
          _
        %p2452 = scmp.eq.s32.totalorder %s41, 2
        // Predicated region
        $region145: #{tpu_custom_call.1} parent=115 // pred_check
          %p2453 = pneg %p2452
        $region146: #{tpu_custom_call.1} parent=115 // pred_check_branch
          %2455 = sbr.rel (%p2453) target = $region148
        $region147: #{tpu_custom_call.1} parent=115 // pred_region
          %v2456 = vld [vmem:[%s5] sm:$0xff]
          %v2457 = vld [vmem:[%s5 + $0x8] sm:$0xff]
          %v2458 = vld [vmem:[%s5 + $0x10] sm:$0xff]
          %v2459 = vld [vmem:[%s5 + $0x18] sm:$0xff]
          %v2460 = vld [vmem:[%s5 + $0x20] sm:$0xff]
          %v2461 = vld [vmem:[%s5 + $0x28] sm:$0xff]
          %v2462 = vld [vmem:[%s5 + $0x30] sm:$0xff]
          %v2463 = vld [vmem:[%s5 + $0x38] sm:$0xff]
          %v2464 = vld [vmem:[%s5 + $0x40] sm:$0xff]
          %v2465 = vld [vmem:[%s5 + $0x48] sm:$0xff]
          %v2466 = vld [vmem:[%s5 + $0x50] sm:$0xff]
          %v2467 = vld [vmem:[%s5 + $0x58] sm:$0xff]
          %v2468 = vld [vmem:[%s5 + $0x60] sm:$0xff]
          %v2469 = vld [vmem:[%s5 + $0x68] sm:$0xff]
          %v2470 = vld [vmem:[%s5 + $0x70] sm:$0xff]
          %v2471 = vld [vmem:[%s5 + $0x78] sm:$0xff]
          %2473 = vset.pattern.permute.xlu0 0
          %2474 = vperm.xlu0 %2473, %v2456
          %v2475 = vpop.permute.xlu0 %2474
          %2478 = vset.pattern.permute.xlu0 0
          %2479 = vperm.xlu0 %2478, %v2457
          %v2480 = vpop.permute.xlu0 %2479
          %2483 = vset.pattern.permute.xlu0 0
          %2484 = vperm.xlu0 %2483, %v2458
          %v2485 = vpop.permute.xlu0 %2484
          %2488 = vset.pattern.permute.xlu0 0
          %2489 = vperm.xlu0 %2488, %v2459
          %v2490 = vpop.permute.xlu0 %2489
          %2493 = vset.pattern.permute.xlu0 0
          %2494 = vperm.xlu0 %2493, %v2460
          %v2495 = vpop.permute.xlu0 %2494
          %2498 = vset.pattern.permute.xlu0 0
          %2499 = vperm.xlu0 %2498, %v2461
          %v2500 = vpop.permute.xlu0 %2499
          %2503 = vset.pattern.permute.xlu0 0
          %2504 = vperm.xlu0 %2503, %v2462
          %v2505 = vpop.permute.xlu0 %2504
          %2508 = vset.pattern.permute.xlu0 0
          %2509 = vperm.xlu0 %2508, %v2463
          %v2510 = vpop.permute.xlu0 %2509
          %2513 = vset.pattern.permute.xlu0 0
          %2514 = vperm.xlu0 %2513, %v2464
          %v2515 = vpop.permute.xlu0 %2514
          %2518 = vset.pattern.permute.xlu0 0
          %2519 = vperm.xlu0 %2518, %v2465
          %v2520 = vpop.permute.xlu0 %2519
          %2523 = vset.pattern.permute.xlu0 0
          %2524 = vperm.xlu0 %2523, %v2466
          %v2525 = vpop.permute.xlu0 %2524
          %2528 = vset.pattern.permute.xlu0 0
          %2529 = vperm.xlu0 %2528, %v2467
          %v2530 = vpop.permute.xlu0 %2529
          %2533 = vset.pattern.permute.xlu0 0
          %2534 = vperm.xlu0 %2533, %v2468
          %v2535 = vpop.permute.xlu0 %2534
          %2538 = vset.pattern.permute.xlu0 0
          %2539 = vperm.xlu0 %2538, %v2469
          %v2540 = vpop.permute.xlu0 %2539
          %2543 = vset.pattern.permute.xlu0 0
          %2544 = vperm.xlu0 %2543, %v2470
          %v2545 = vpop.permute.xlu0 %2544
          %2548 = vset.pattern.permute.xlu0 0
          %2549 = vperm.xlu0 %2548, %v2471
          %v2550 = vpop.permute.xlu0 %2549
          %v2552 = vmul.f32 %v2085, %v2475
          %v2553 = vmul.f32 %v2088, %v2480
          %v2554 = vmul.f32 %v2093, %v2485
          %v2555 = vmul.f32 %v2096, %v2490
          %v2556 = vmul.f32 %v2101, %v2495
          %v2557 = vmul.f32 %v2104, %v2500
          %v2558 = vmul.f32 %v2109, %v2505
          %v2559 = vmul.f32 %v2112, %v2510
          %v2560 = vmul.f32 %v2117, %v2515
          %v2561 = vmul.f32 %v2120, %v2520
          %v2562 = vmul.f32 %v2125, %v2525
          %v2563 = vmul.f32 %v2128, %v2530
          %v2564 = vmul.f32 %v2133, %v2535
          %v2565 = vmul.f32 %v2136, %v2540
          %v2566 = vmul.f32 %v2141, %v2545
          %v2567 = vmul.f32 %v2144, %v2550
          %v2568 = vld [vmem:[%s6] sm:$0x1]
          %v2570 = vlaneseq
          %v2571 = vshrl.u32 %v2570, 7
          %v2572 = vsub.s32 0, %v2571
          %v2573 = vrot.slane %v2568, %v2572
          %v2575 = vmul.f32 %v2552, %v2573
          %v2576 = vmul.f32 %v2553, %v2573
          %v2577 = vmul.f32 %v2554, %v2573
          %v2578 = vmul.f32 %v2555, %v2573
          %v2579 = vmul.f32 %v2556, %v2573
          %v2580 = vmul.f32 %v2557, %v2573
          %v2581 = vmul.f32 %v2558, %v2573
          %v2582 = vmul.f32 %v2559, %v2573
          %v2583 = vmul.f32 %v2560, %v2573
          %v2584 = vmul.f32 %v2561, %v2573
          %v2585 = vmul.f32 %v2562, %v2573
          %v2586 = vmul.f32 %v2563, %v2573
          %v2587 = vmul.f32 %v2564, %v2573
          %v2588 = vmul.f32 %v2565, %v2573
          %v2589 = vmul.f32 %v2566, %v2573
          %v2590 = vmul.f32 %v2567, %v2573
          %v2591 = vld [vmem:[%s7] sm:$0x1]
          %v2593 = vlaneseq
          %v2594 = vshrl.u32 %v2593, 7
          %v2595 = vsub.s32 0, %v2594
          %v2596 = vrot.slane %v2591, %v2595
          %v2598 = vadd.f32 %v2575, %v2596
          %v2599 = vadd.f32 %v2576, %v2596
          %v2600 = vadd.f32 %v2577, %v2596
          %v2601 = vadd.f32 %v2578, %v2596
          %v2602 = vadd.f32 %v2579, %v2596
          %v2603 = vadd.f32 %v2580, %v2596
          %v2604 = vadd.f32 %v2581, %v2596
          %v2605 = vadd.f32 %v2582, %v2596
          %v2606 = vadd.f32 %v2583, %v2596
          %v2607 = vadd.f32 %v2584, %v2596
          %v2608 = vadd.f32 %v2585, %v2596
          %v2609 = vadd.f32 %v2586, %v2596
          %v2610 = vadd.f32 %v2587, %v2596
          %v2611 = vadd.f32 %v2588, %v2596
          %v2612 = vadd.f32 %v2589, %v2596
          %v2613 = vadd.f32 %v2590, %v2596
          %v2614 = vpack.c.bf16 %v2599, %v2598
          %v2615 = vpack.c.bf16 %v2601, %v2600
          %v2616 = vpack.c.bf16 %v2603, %v2602
          %v2617 = vpack.c.bf16 %v2605, %v2604
          %v2618 = vpack.c.bf16 %v2607, %v2606
          %v2619 = vpack.c.bf16 %v2609, %v2608
          %v2620 = vpack.c.bf16 %v2611, %v2610
          %v2621 = vpack.c.bf16 %v2613, %v2612
          %v2622 = vld [vmem:[%s10] sm:$0xf]
          %v2623 = vld [vmem:[%s10 + $0x4] sm:$0xf]
          %v2624 = vld [vmem:[%s10 + $0x8] sm:$0xf]
          %v2625 = vld [vmem:[%s10 + $0xc] sm:$0xf]
          %v2626 = vld [vmem:[%s10 + $0x10] sm:$0xf]
          %v2627 = vld [vmem:[%s10 + $0x14] sm:$0xf]
          %v2628 = vld [vmem:[%s10 + $0x18] sm:$0xf]
          %v2629 = vld [vmem:[%s10 + $0x1c] sm:$0xf]
          %v2630 = vld [vmem:[%s10 + $0x20] sm:$0xf]
          %v2631 = vld [vmem:[%s10 + $0x24] sm:$0xf]
          %v2632 = vld [vmem:[%s10 + $0x28] sm:$0xf]
          %v2633 = vld [vmem:[%s10 + $0x2c] sm:$0xf]
          %v2634 = vld [vmem:[%s10 + $0x30] sm:$0xf]
          %v2635 = vld [vmem:[%s10 + $0x34] sm:$0xf]
          %v2636 = vld [vmem:[%s10 + $0x38] sm:$0xf]
          %v2637 = vld [vmem:[%s10 + $0x3c] sm:$0xf]
          %v2654 = vunpack.c.l.b16 %v2622
          %v2655 = vunpack.c.l.b16 %v2623
          %v2656 = vunpack.c.l.b16 %v2624
          %v2657 = vunpack.c.l.b16 %v2625
          %v2658 = vunpack.c.l.b16 %v2626
          %v2659 = vunpack.c.l.b16 %v2627
          %v2660 = vunpack.c.l.b16 %v2628
          %v2661 = vunpack.c.l.b16 %v2629
          %v2662 = vunpack.c.l.b16 %v2630
          %v2663 = vunpack.c.l.b16 %v2631
          %v2664 = vunpack.c.l.b16 %v2632
          %v2665 = vunpack.c.l.b16 %v2633
          %v2666 = vunpack.c.l.b16 %v2634
          %v2667 = vunpack.c.l.b16 %v2635
          %v2668 = vunpack.c.l.b16 %v2636
          %v2669 = vunpack.c.l.b16 %v2637
          %v2670 = vpack.c.b16 %v2655, %v2654
          %v2671 = vpack.c.b16 %v2657, %v2656
          %v2672 = vpack.c.b16 %v2659, %v2658
          %v2673 = vpack.c.b16 %v2661, %v2660
          %v2674 = vpack.c.b16 %v2663, %v2662
          %v2675 = vpack.c.b16 %v2665, %v2664
          %v2676 = vpack.c.b16 %v2667, %v2666
          %v2677 = vpack.c.b16 %v2669, %v2668
          %2686 = vmatprep.subr.bf16.mxu0 0
          %2687 = vmatpush1.bf16.msra.mxu0 %v2670
          %2688 = vmatprep.subr.bf16.mxu0 0
          %2689 = vmatpush1.bf16.msra.mxu0 %v2671
          %2690 = vmatprep.subr.bf16.mxu0 0
          %2691 = vmatpush1.bf16.msra.mxu0 %v2672
          %2692 = vmatprep.subr.bf16.mxu0 0
          %2693 = vmatpush1.bf16.msra.mxu0 %v2673
          %2694 = vmatprep.subr.bf16.mxu0 0
          %2695 = vmatpush1.bf16.msra.mxu0 %v2674
          %2696 = vmatprep.subr.bf16.mxu0 0
          %2697 = vmatpush1.bf16.msra.mxu0 %v2675
          %2698 = vmatprep.subr.bf16.mxu0 0
          %2699 = vmatpush1.bf16.msra.mxu0 %v2676
          %2700 = vmatprep.subr.bf16.mxu0 0
          %2701 = vmatpush1.bf16.msra.mxu0 %v2677
          %2702 = vmatprep.subr.bf16.mxu0 0
          %2703 = vmatpush1.bf16.msra.mxu0 0
          %2704 = vmatprep.subr.bf16.mxu0 0
          %2705 = vmatpush1.bf16.msra.mxu0 0
          %2706 = vmatprep.subr.bf16.mxu0 0
          %2707 = vmatpush1.bf16.msra.mxu0 0
          %2708 = vmatprep.subr.bf16.mxu0 0
          %2709 = vmatpush1.bf16.msra.mxu0 0
          %2710 = vmatprep.subr.bf16.mxu0 0
          %2711 = vmatpush1.bf16.msra.mxu0 0
          %2712 = vmatprep.subr.bf16.mxu0 0
          %2713 = vmatpush1.bf16.msra.mxu0 0
          %2714 = vmatprep.subr.bf16.mxu0 0
          %2715 = vmatpush1.bf16.msra.mxu0 0
          %2716 = vmatprep.subr.bf16.mxu0 0
          %2717 = vmatpush1.bf16.msra.mxu0 0
          %2718 = vmatprep.mubr.bf16.mxu0 0
          %2719 = vmatmul.mubr.bf16.gmra.mrb[0].mxu0 %v2614
          %v2720 = vpop.f32.mrb[0].mxu0
          %v2721 = vadd.f32 0.0, %v2720
          %v2722 = vpop.f32.mrb[0].mxu0
          %v2723 = vpop.f32.mrb[0].mxu0
          %v2724 = vadd.f32 0.0, %v2723
          %v2725 = vpop.f32.mrb[0].mxu0
          %2726 = vmatprep.mubr.bf16.mxu0 0
          %2727 = vmatmul.mubr.bf16.gmra.mrb[0].mxu0 %v2615
          %v2728 = vpop.f32.mrb[0].mxu0
          %v2729 = vadd.f32 0.0, %v2728
          %v2730 = vpop.f32.mrb[0].mxu0
          %v2731 = vpop.f32.mrb[0].mxu0
          %v2732 = vadd.f32 0.0, %v2731
          %v2733 = vpop.f32.mrb[0].mxu0
          %2734 = vmatprep.mubr.bf16.mxu0 0
          %2735 = vmatmul.mubr.bf16.gmra.mrb[0].mxu0 %v2616
          %v2736 = vpop.f32.mrb[0].mxu0
          %v2737 = vadd.f32 0.0, %v2736
          %v2738 = vpop.f32.mrb[0].mxu0
          %v2739 = vpop.f32.mrb[0].mxu0
          %v2740 = vadd.f32 0.0, %v2739
          %v2741 = vpop.f32.mrb[0].mxu0
          %2742 = vmatprep.mubr.bf16.mxu0 0
          %2743 = vmatmul.mubr.bf16.gmra.mrb[0].mxu0 %v2617
          %v2744 = vpop.f32.mrb[0].mxu0
          %v2745 = vadd.f32 0.0, %v2744
          %v2746 = vpop.f32.mrb[0].mxu0
          %v2747 = vpop.f32.mrb[0].mxu0
          %v2748 = vadd.f32 0.0, %v2747
          %v2749 = vpop.f32.mrb[0].mxu0
          %2750 = vmatprep.mubr.bf16.mxu0 0
          %2751 = vmatmul.mubr.bf16.gmra.mrb[0].mxu0 %v2618
          %v2752 = vpop.f32.mrb[0].mxu0
          %v2753 = vadd.f32 0.0, %v2752
          %v2754 = vpop.f32.mrb[0].mxu0
          %v2755 = vpop.f32.mrb[0].mxu0
          %v2756 = vadd.f32 0.0, %v2755
          %v2757 = vpop.f32.mrb[0].mxu0
          %2758 = vmatprep.mubr.bf16.mxu0 0
          %2759 = vmatmul.mubr.bf16.gmra.mrb[0].mxu0 %v2619
          %v2760 = vpop.f32.mrb[0].mxu0
          %v2761 = vadd.f32 0.0, %v2760
          %v2762 = vpop.f32.mrb[0].mxu0
          %v2763 = vpop.f32.mrb[0].mxu0
          %v2764 = vadd.f32 0.0, %v2763
          %v2765 = vpop.f32.mrb[0].mxu0
          %2766 = vmatprep.mubr.bf16.mxu0 0
          %2767 = vmatmul.mubr.bf16.gmra.mrb[0].mxu0 %v2620
          %v2768 = vpop.f32.mrb[0].mxu0
          %v2769 = vadd.f32 0.0, %v2768
          %v2770 = vpop.f32.mrb[0].mxu0
          %v2771 = vpop.f32.mrb[0].mxu0
          %v2772 = vadd.f32 0.0, %v2771
          %v2773 = vpop.f32.mrb[0].mxu0
          %2774 = vmatprep.mubr.bf16.mxu0 0
          %2775 = vmatmul.mubr.bf16.gmra.mrb[0].mxu0 %v2621
          %v2776 = vpop.f32.mrb[0].mxu0
          %v2777 = vadd.f32 0.0, %v2776
          %v2778 = vpop.f32.mrb[0].mxu0
          %v2779 = vpop.f32.mrb[0].mxu0
          %v2780 = vadd.f32 0.0, %v2779
          %v2781 = vpop.f32.mrb[0].mxu0
          %2782 = vdwg.mxu0
          %v2783 = vld [vmem:[#allocation4] sm:$0xff]
          %v2784 = vld [vmem:[#allocation4 + $0x8] sm:$0xff]
          %v2785 = vld [vmem:[#allocation4 + $0x10] sm:$0xff]
          %v2786 = vld [vmem:[#allocation4 + $0x18] sm:$0xff]
          %v2787 = vld [vmem:[#allocation4 + $0x20] sm:$0xff]
          %v2788 = vld [vmem:[#allocation4 + $0x28] sm:$0xff]
          %v2789 = vld [vmem:[#allocation4 + $0x30] sm:$0xff]
          %v2790 = vld [vmem:[#allocation4 + $0x38] sm:$0xff]
          %v2791 = vpack.c.bf16 %v2724, %v2721
          %v2792 = vpack.c.bf16 %v2732, %v2729
          %v2793 = vpack.c.bf16 %v2740, %v2737
          %v2794 = vpack.c.bf16 %v2748, %v2745
          %v2795 = vpack.c.bf16 %v2756, %v2753
          %v2796 = vpack.c.bf16 %v2764, %v2761
          %v2797 = vpack.c.bf16 %v2772, %v2769
          %v2798 = vpack.c.bf16 %v2780, %v2777
          %2799 = vmatprep.subr.bf16.mxu0 0
          %2800 = vmatpush1.bf16.msra.mxu0 %v2791
          %2801 = vmatprep.subr.bf16.mxu0 0
          %2802 = vmatpush1.bf16.msra.mxu0 %v2792
          %2803 = vmatprep.subr.bf16.mxu0 0
          %2804 = vmatpush1.bf16.msra.mxu0 %v2793
          %2805 = vmatprep.subr.bf16.mxu0 0
          %2806 = vmatpush1.bf16.msra.mxu0 %v2794
          %2807 = vmatprep.subr.bf16.mxu0 0
          %2808 = vmatpush1.bf16.msra.mxu0 %v2795
          %2809 = vmatprep.subr.bf16.mxu0 0
          %2810 = vmatpush1.bf16.msra.mxu0 %v2796
          %2811 = vmatprep.subr.bf16.mxu0 0
          %2812 = vmatpush1.bf16.msra.mxu0 %v2797
          %2813 = vmatprep.subr.bf16.mxu0 0
          %2814 = vmatpush1.bf16.msra.mxu0 %v2798
          %2815 = vmatprep.subr.bf16.mxu0 0
          %2816 = vmatpush1.bf16.msra.mxu0 0
          %2817 = vmatprep.subr.bf16.mxu0 0
          %2818 = vmatpush1.bf16.msra.mxu0 0
          %2819 = vmatprep.subr.bf16.mxu0 0
          %2820 = vmatpush1.bf16.msra.mxu0 0
          %2821 = vmatprep.subr.bf16.mxu0 0
          %2822 = vmatpush1.bf16.msra.mxu0 0
          %2823 = vmatprep.subr.bf16.mxu0 0
          %2824 = vmatpush1.bf16.msra.mxu0 0
          %2825 = vmatprep.subr.bf16.mxu0 0
          %2826 = vmatpush1.bf16.msra.mxu0 0
          %2827 = vmatprep.subr.bf16.mxu0 0
          %2828 = vmatpush1.bf16.msra.mxu0 0
          %2829 = vmatprep.subr.bf16.mxu0 0
          %2830 = vmatpush1.bf16.msra.mxu0 0
          %2831 = vmatprep.mubr.bf16.mxu0 0
          %2832 = vmatmul.mubr.bf16.gmra.mrb[0].mxu0 %v2783
          %v2833 = vpop.f32.mrb[0].mxu0
          %v2834 = vadd.f32 0.0, %v2833
          %v2835 = vpop.f32.mrb[0].mxu0
          %v2836 = vpop.f32.mrb[0].mxu0
          %v2837 = vadd.f32 0.0, %v2836
          %v2838 = vpop.f32.mrb[0].mxu0
          %2839 = vmatprep.mubr.bf16.mxu0 0
          %2840 = vmatmul.mubr.bf16.gmra.mrb[0].mxu0 %v2784
          %v2841 = vpop.f32.mrb[0].mxu0
          %v2842 = vadd.f32 0.0, %v2841
          %v2843 = vpop.f32.mrb[0].mxu0
          %v2844 = vpop.f32.mrb[0].mxu0
          %v2845 = vadd.f32 0.0, %v2844
          %v2846 = vpop.f32.mrb[0].mxu0
          %2847 = vmatprep.mubr.bf16.mxu0 0
          %2848 = vmatmul.mubr.bf16.gmra.mrb[0].mxu0 %v2785
          %v2849 = vpop.f32.mrb[0].mxu0
          %v2850 = vadd.f32 0.0, %v2849
          %v2851 = vpop.f32.mrb[0].mxu0
          %v2852 = vpop.f32.mrb[0].mxu0
          %v2853 = vadd.f32 0.0, %v2852
          %v2854 = vpop.f32.mrb[0].mxu0
          %2855 = vmatprep.mubr.bf16.mxu0 0
          %2856 = vmatmul.mubr.bf16.gmra.mrb[0].mxu0 %v2786
          %v2857 = vpop.f32.mrb[0].mxu0
          %v2858 = vadd.f32 0.0, %v2857
          %v2859 = vpop.f32.mrb[0].mxu0
          %v2860 = vpop.f32.mrb[0].mxu0
          %v2861 = vadd.f32 0.0, %v2860
          %v2862 = vpop.f32.mrb[0].mxu0
          %2863 = vmatprep.mubr.bf16.mxu0 0
          %2864 = vmatmul.mubr.bf16.gmra.mrb[0].mxu0 %v2787
          %v2865 = vpop.f32.mrb[0].mxu0
          %v2866 = vadd.f32 0.0, %v2865
          %v2867 = vpop.f32.mrb[0].mxu0
          %v2868 = vpop.f32.mrb[0].mxu0
          %v2869 = vadd.f32 0.0, %v2868
          %v2870 = vpop.f32.mrb[0].mxu0
          %2871 = vmatprep.mubr.bf16.mxu0 0
          %2872 = vmatmul.mubr.bf16.gmra.mrb[0].mxu0 %v2788
          %v2873 = vpop.f32.mrb[0].mxu0
          %v2874 = vadd.f32 0.0, %v2873
          %v2875 = vpop.f32.mrb[0].mxu0
          %v2876 = vpop.f32.mrb[0].mxu0
          %v2877 = vadd.f32 0.0, %v2876
          %v2878 = vpop.f32.mrb[0].mxu0
          %2879 = vmatprep.mubr.bf16.mxu0 0
          %2880 = vmatmul.mubr.bf16.gmra.mrb[0].mxu0 %v2789
          %v2881 = vpop.f32.mrb[0].mxu0
          %v2882 = vadd.f32 0.0, %v2881
          %v2883 = vpop.f32.mrb[0].mxu0
          %v2884 = vpop.f32.mrb[0].mxu0
          %v2885 = vadd.f32 0.0, %v2884
          %v2886 = vpop.f32.mrb[0].mxu0
          %2887 = vmatprep.mubr.bf16.mxu0 0
          %2888 = vmatmul.mubr.bf16.gmra.mrb[0].mxu0 %v2790
          %v2889 = vpop.f32.mrb[0].mxu0
          %v2890 = vadd.f32 0.0, %v2889
          %v2891 = vpop.f32.mrb[0].mxu0
          %v2892 = vpop.f32.mrb[0].mxu0
          %v2893 = vadd.f32 0.0, %v2892
          %v2894 = vpop.f32.mrb[0].mxu0
          %2895 = vdwg.mxu0
          %v2896 = vld [vmem:[%s8] sm:$0xff]
          %v2897 = vld [vmem:[%s8 + $0x8] sm:$0xff]
          %v2898 = vld [vmem:[%s8 + $0x10] sm:$0xff]
          %v2899 = vld [vmem:[%s8 + $0x18] sm:$0xff]
          %v2900 = vld [vmem:[%s8 + $0x20] sm:$0xff]
          %v2901 = vld [vmem:[%s8 + $0x28] sm:$0xff]
          %v2902 = vld [vmem:[%s8 + $0x30] sm:$0xff]
          %v2903 = vld [vmem:[%s8 + $0x38] sm:$0xff]
          %v2904 = vld [vmem:[%s8 + $0x40] sm:$0xff]
          %v2905 = vld [vmem:[%s8 + $0x48] sm:$0xff]
          %v2906 = vld [vmem:[%s8 + $0x50] sm:$0xff]
          %v2907 = vld [vmem:[%s8 + $0x58] sm:$0xff]
          %v2908 = vld [vmem:[%s8 + $0x60] sm:$0xff]
          %v2909 = vld [vmem:[%s8 + $0x68] sm:$0xff]
          %v2910 = vld [vmem:[%s8 + $0x70] sm:$0xff]
          %v2911 = vld [vmem:[%s8 + $0x78] sm:$0xff]
          %2913 = vset.pattern.permute.xlu0 0
          %2914 = vperm.xlu0 %2913, %v2896
          %v2915 = vpop.permute.xlu0 %2914
          %2918 = vset.pattern.permute.xlu0 0
          %2919 = vperm.xlu0 %2918, %v2897
          %v2920 = vpop.permute.xlu0 %2919
          %2923 = vset.pattern.permute.xlu0 0
          %2924 = vperm.xlu0 %2923, %v2898
          %v2925 = vpop.permute.xlu0 %2924
          %2928 = vset.pattern.permute.xlu0 0
          %2929 = vperm.xlu0 %2928, %v2899
          %v2930 = vpop.permute.xlu0 %2929
          %2933 = vset.pattern.permute.xlu0 0
          %2934 = vperm.xlu0 %2933, %v2900
          %v2935 = vpop.permute.xlu0 %2934
          %2938 = vset.pattern.permute.xlu0 0
          %2939 = vperm.xlu0 %2938, %v2901
          %v2940 = vpop.permute.xlu0 %2939
          %2943 = vset.pattern.permute.xlu0 0
          %2944 = vperm.xlu0 %2943, %v2902
          %v2945 = vpop.permute.xlu0 %2944
          %2948 = vset.pattern.permute.xlu0 0
          %2949 = vperm.xlu0 %2948, %v2903
          %v2950 = vpop.permute.xlu0 %2949
          %2953 = vset.pattern.permute.xlu0 0
          %2954 = vperm.xlu0 %2953, %v2904
          %v2955 = vpop.permute.xlu0 %2954
          %2958 = vset.pattern.permute.xlu0 0
          %2959 = vperm.xlu0 %2958, %v2905
          %v2960 = vpop.permute.xlu0 %2959
          %2963 = vset.pattern.permute.xlu0 0
          %2964 = vperm.xlu0 %2963, %v2906
          %v2965 = vpop.permute.xlu0 %2964
          %2968 = vset.pattern.permute.xlu0 0
          %2969 = vperm.xlu0 %2968, %v2907
          %v2970 = vpop.permute.xlu0 %2969
          %2973 = vset.pattern.permute.xlu0 0
          %2974 = vperm.xlu0 %2973, %v2908
          %v2975 = vpop.permute.xlu0 %2974
          %2978 = vset.pattern.permute.xlu0 0
          %2979 = vperm.xlu0 %2978, %v2909
          %v2980 = vpop.permute.xlu0 %2979
          %2983 = vset.pattern.permute.xlu0 0
          %2984 = vperm.xlu0 %2983, %v2910
          %v2985 = vpop.permute.xlu0 %2984
          %2988 = vset.pattern.permute.xlu0 0
          %2989 = vperm.xlu0 %2988, %v2911
          %v2990 = vpop.permute.xlu0 %2989
          %v2992 = vmul.f32 %v2834, %v2915
          %v2993 = vmul.f32 %v2837, %v2920
          %v2994 = vmul.f32 %v2842, %v2925
          %v2995 = vmul.f32 %v2845, %v2930
          %v2996 = vmul.f32 %v2850, %v2935
          %v2997 = vmul.f32 %v2853, %v2940
          %v2998 = vmul.f32 %v2858, %v2945
          %v2999 = vmul.f32 %v2861, %v2950
          %v3000 = vmul.f32 %v2866, %v2955
          %v3001 = vmul.f32 %v2869, %v2960
          %v3002 = vmul.f32 %v2874, %v2965
          %v3003 = vmul.f32 %v2877, %v2970
          %v3004 = vmul.f32 %v2882, %v2975
          %v3005 = vmul.f32 %v2885, %v2980
          %v3006 = vmul.f32 %v2890, %v2985
          %v3007 = vmul.f32 %v2893, %v2990
          %v3008 = vld [vmem:[#allocation5] sm:$0xff]
          %v3009 = vld [vmem:[#allocation5 + $0x8] sm:$0xff]
          %v3010 = vld [vmem:[#allocation5 + $0x10] sm:$0xff]
          %v3011 = vld [vmem:[#allocation5 + $0x18] sm:$0xff]
          %v3012 = vld [vmem:[#allocation5 + $0x20] sm:$0xff]
          %v3013 = vld [vmem:[#allocation5 + $0x28] sm:$0xff]
          %v3014 = vld [vmem:[#allocation5 + $0x30] sm:$0xff]
          %v3015 = vld [vmem:[#allocation5 + $0x38] sm:$0xff]
          %v3016 = vpack.c.bf16 %v2993, %v2992
          %v3017 = vpack.c.bf16 %v2995, %v2994
          %v3018 = vpack.c.bf16 %v2997, %v2996
          %v3019 = vpack.c.bf16 %v2999, %v2998
          %v3020 = vpack.c.bf16 %v3001, %v3000
          %v3021 = vpack.c.bf16 %v3003, %v3002
          %v3022 = vpack.c.bf16 %v3005, %v3004
          %v3023 = vpack.c.bf16 %v3007, %v3006
          %v3024 = vld [vmem:[%s9] sm:$0xff]
          %v3025 = vld [vmem:[%s9 + $0x8] sm:$0xff]
          %v3026 = vld [vmem:[%s9 + $0x10] sm:$0xff]
          %v3027 = vld [vmem:[%s9 + $0x18] sm:$0xff]
          %v3028 = vld [vmem:[%s9 + $0x20] sm:$0xff]
          %v3029 = vld [vmem:[%s9 + $0x28] sm:$0xff]
          %v3030 = vld [vmem:[%s9 + $0x30] sm:$0xff]
          %v3031 = vld [vmem:[%s9 + $0x38] sm:$0xff]
          %v3032 = vld [vmem:[%s9 + $0x40] sm:$0xff]
          %v3033 = vld [vmem:[%s9 + $0x48] sm:$0xff]
          %v3034 = vld [vmem:[%s9 + $0x50] sm:$0xff]
          %v3035 = vld [vmem:[%s9 + $0x58] sm:$0xff]
          %v3036 = vld [vmem:[%s9 + $0x60] sm:$0xff]
          %v3037 = vld [vmem:[%s9 + $0x68] sm:$0xff]
          %v3038 = vld [vmem:[%s9 + $0x70] sm:$0xff]
          %v3039 = vld [vmem:[%s9 + $0x78] sm:$0xff]
          %3041 = vset.pattern.permute.xlu0 0
          %3042 = vperm.xlu0 %3041, %v3024
          %v3043 = vpop.permute.xlu0 %3042
          %3046 = vset.pattern.permute.xlu0 0
          %3047 = vperm.xlu0 %3046, %v3025
          %v3048 = vpop.permute.xlu0 %3047
          %3051 = vset.pattern.permute.xlu0 0
          %3052 = vperm.xlu0 %3051, %v3026
          %v3053 = vpop.permute.xlu0 %3052
          %3056 = vset.pattern.permute.xlu0 0
          %3057 = vperm.xlu0 %3056, %v3027
          %v3058 = vpop.permute.xlu0 %3057
          %3061 = vset.pattern.permute.xlu0 0
          %3062 = vperm.xlu0 %3061, %v3028
          %v3063 = vpop.permute.xlu0 %3062
          %3066 = vset.pattern.permute.xlu0 0
          %3067 = vperm.xlu0 %3066, %v3029
          %v3068 = vpop.permute.xlu0 %3067
          %3071 = vset.pattern.permute.xlu0 0
          %3072 = vperm.xlu0 %3071, %v3030
          %v3073 = vpop.permute.xlu0 %3072
          %3076 = vset.pattern.permute.xlu0 0
          %3077 = vperm.xlu0 %3076, %v3031
          %v3078 = vpop.permute.xlu0 %3077
          %3081 = vset.pattern.permute.xlu0 0
          %3082 = vperm.xlu0 %3081, %v3032
          %v3083 = vpop.permute.xlu0 %3082
          %3086 = vset.pattern.permute.xlu0 0
          %3087 = vperm.xlu0 %3086, %v3033
          %v3088 = vpop.permute.xlu0 %3087
          %3091 = vset.pattern.permute.xlu0 0
          %3092 = vperm.xlu0 %3091, %v3034
          %v3093 = vpop.permute.xlu0 %3092
          %3096 = vset.pattern.permute.xlu0 0
          %3097 = vperm.xlu0 %3096, %v3035
          %v3098 = vpop.permute.xlu0 %3097
          %3101 = vset.pattern.permute.xlu0 0
          %3102 = vperm.xlu0 %3101, %v3036
          %v3103 = vpop.permute.xlu0 %3102
          %3106 = vset.pattern.permute.xlu0 0
          %3107 = vperm.xlu0 %3106, %v3037
          %v3108 = vpop.permute.xlu0 %3107
          %3111 = vset.pattern.permute.xlu0 0
          %3112 = vperm.xlu0 %3111, %v3038
          %v3113 = vpop.permute.xlu0 %3112
          %3116 = vset.pattern.permute.xlu0 0
          %3117 = vperm.xlu0 %3116, %v3039
          %v3118 = vpop.permute.xlu0 %3117
          %v3120 = vmul.f32 %v3043, %v2721
          %v3121 = vmul.f32 %v3048, %v2724
          %v3122 = vmul.f32 %v3053, %v2729
          %v3123 = vmul.f32 %v3058, %v2732
          %v3124 = vmul.f32 %v3063, %v2737
          %v3125 = vmul.f32 %v3068, %v2740
          %v3126 = vmul.f32 %v3073, %v2745
          %v3127 = vmul.f32 %v3078, %v2748
          %v3128 = vmul.f32 %v3083, %v2753
          %v3129 = vmul.f32 %v3088, %v2756
          %v3130 = vmul.f32 %v3093, %v2761
          %v3131 = vmul.f32 %v3098, %v2764
          %v3132 = vmul.f32 %v3103, %v2769
          %v3133 = vmul.f32 %v3108, %v2772
          %v3134 = vmul.f32 %v3113, %v2777
          %v3135 = vmul.f32 %v3118, %v2780
          %3136 = vmatprep.subr.bf16.mxu0 0
          %3137 = vmatpush1.bf16.msra.mxu0 %v3016
          %3138 = vmatprep.subr.bf16.mxu0 0
          %3139 = vmatpush1.bf16.msra.mxu0 %v3017
          %3140 = vmatprep.subr.bf16.mxu0 0
          %3141 = vmatpush1.bf16.msra.mxu0 %v3018
          %3142 = vmatprep.subr.bf16.mxu0 0
          %3143 = vmatpush1.bf16.msra.mxu0 %v3019
          %3144 = vmatprep.subr.bf16.mxu0 0
          %3145 = vmatpush1.bf16.msra.mxu0 %v3020
          %3146 = vmatprep.subr.bf16.mxu0 0
          %3147 = vmatpush1.bf16.msra.mxu0 %v3021
          %3148 = vmatprep.subr.bf16.mxu0 0
          %3149 = vmatpush1.bf16.msra.mxu0 %v3022
          %3150 = vmatprep.subr.bf16.mxu0 0
          %3151 = vmatpush1.bf16.msra.mxu0 %v3023
          %3152 = vmatprep.subr.bf16.mxu0 0
          %3153 = vmatpush1.bf16.msra.mxu0 0
          %3154 = vmatprep.subr.bf16.mxu0 0
          %3155 = vmatpush1.bf16.msra.mxu0 0
          %3156 = vmatprep.subr.bf16.mxu0 0
          %3157 = vmatpush1.bf16.msra.mxu0 0
          %3158 = vmatprep.subr.bf16.mxu0 0
          %3159 = vmatpush1.bf16.msra.mxu0 0
          %3160 = vmatprep.subr.bf16.mxu0 0
          %3161 = vmatpush1.bf16.msra.mxu0 0
          %3162 = vmatprep.subr.bf16.mxu0 0
          %3163 = vmatpush1.bf16.msra.mxu0 0
          %3164 = vmatprep.subr.bf16.mxu0 0
          %3165 = vmatpush1.bf16.msra.mxu0 0
          %3166 = vmatprep.subr.bf16.mxu0 0
          %3167 = vmatpush1.bf16.msra.mxu0 0
          %3168 = vmatprep.mubr.bf16.mxu0 0
          %3169 = vmatmul.mubr.bf16.gmra.mrb[0].mxu0 %v3008
          %v3170 = vpop.f32.mrb[0].mxu0
          %v3171 = vadd.f32 %v3120, %v3170
          %v3172 = vpop.f32.mrb[0].mxu0
          %v3173 = vpop.f32.mrb[0].mxu0
          %v3174 = vadd.f32 %v3121, %v3173
          %v3175 = vpop.f32.mrb[0].mxu0
          %3176 = vmatprep.mubr.bf16.mxu0 0
          %3177 = vmatmul.mubr.bf16.gmra.mrb[0].mxu0 %v3009
          %v3178 = vpop.f32.mrb[0].mxu0
          %v3179 = vadd.f32 %v3122, %v3178
          %v3180 = vpop.f32.mrb[0].mxu0
          %v3181 = vpop.f32.mrb[0].mxu0
          %v3182 = vadd.f32 %v3123, %v3181
          %v3183 = vpop.f32.mrb[0].mxu0
          %3184 = vmatprep.mubr.bf16.mxu0 0
          %3185 = vmatmul.mubr.bf16.gmra.mrb[0].mxu0 %v3010
          %v3186 = vpop.f32.mrb[0].mxu0
          %v3187 = vadd.f32 %v3124, %v3186
          %v3188 = vpop.f32.mrb[0].mxu0
          %v3189 = vpop.f32.mrb[0].mxu0
          %v3190 = vadd.f32 %v3125, %v3189
          %v3191 = vpop.f32.mrb[0].mxu0
          %3192 = vmatprep.mubr.bf16.mxu0 0
          %3193 = vmatmul.mubr.bf16.gmra.mrb[0].mxu0 %v3011
          %v3194 = vpop.f32.mrb[0].mxu0
          %v3195 = vadd.f32 %v3126, %v3194
          %v3196 = vpop.f32.mrb[0].mxu0
          %v3197 = vpop.f32.mrb[0].mxu0
          %v3198 = vadd.f32 %v3127, %v3197
          %v3199 = vpop.f32.mrb[0].mxu0
          %3200 = vmatprep.mubr.bf16.mxu0 0
          %3201 = vmatmul.mubr.bf16.gmra.mrb[0].mxu0 %v3012
          %v3202 = vpop.f32.mrb[0].mxu0
          %v3203 = vadd.f32 %v3128, %v3202
          %v3204 = vpop.f32.mrb[0].mxu0
          %v3205 = vpop.f32.mrb[0].mxu0
          %v3206 = vadd.f32 %v3129, %v3205
          %v3207 = vpop.f32.mrb[0].mxu0
          %3208 = vmatprep.mubr.bf16.mxu0 0
          %3209 = vmatmul.mubr.bf16.gmra.mrb[0].mxu0 %v3013
          %v3210 = vpop.f32.mrb[0].mxu0
          %v3211 = vadd.f32 %v3130, %v3210
          %v3212 = vpop.f32.mrb[0].mxu0
          %v3213 = vpop.f32.mrb[0].mxu0
          %v3214 = vadd.f32 %v3131, %v3213
          %v3215 = vpop.f32.mrb[0].mxu0
          %3216 = vmatprep.mubr.bf16.mxu0 0
          %3217 = vmatmul.mubr.bf16.gmra.mrb[0].mxu0 %v3014
          %v3218 = vpop.f32.mrb[0].mxu0
          %v3219 = vadd.f32 %v3132, %v3218
          %v3220 = vpop.f32.mrb[0].mxu0
          %v3221 = vpop.f32.mrb[0].mxu0
          %v3222 = vadd.f32 %v3133, %v3221
          %v3223 = vpop.f32.mrb[0].mxu0
          %3224 = vmatprep.mubr.bf16.mxu0 0
          %3225 = vmatmul.mubr.bf16.gmra.mrb[0].mxu0 %v3015
          %v3226 = vpop.f32.mrb[0].mxu0
          %v3227 = vadd.f32 %v3134, %v3226
          %v3228 = vpop.f32.mrb[0].mxu0
          %v3229 = vpop.f32.mrb[0].mxu0
          %v3230 = vadd.f32 %v3135, %v3229
          %v3231 = vpop.f32.mrb[0].mxu0
          %3232 = vdwg.mxu0
          %v3233 = vld [vmem:[%s11] sm:$0x1]
          %v3235 = vlaneseq
          %v3236 = vshrl.u32 %v3235, 7
          %v3237 = vsub.s32 0, %v3236
          %v3238 = vrot.slane %v3233, %v3237
          %v3240 = vadd.f32 %v3171, %v3238
          %v3241 = vadd.f32 %v3174, %v3238
          %v3242 = vadd.f32 %v3179, %v3238
          %v3243 = vadd.f32 %v3182, %v3238
          %v3244 = vadd.f32 %v3187, %v3238
          %v3245 = vadd.f32 %v3190, %v3238
          %v3246 = vadd.f32 %v3195, %v3238
          %v3247 = vadd.f32 %v3198, %v3238
          %v3248 = vadd.f32 %v3203, %v3238
          %v3249 = vadd.f32 %v3206, %v3238
          %v3250 = vadd.f32 %v3211, %v3238
          %v3251 = vadd.f32 %v3214, %v3238
          %v3252 = vadd.f32 %v3219, %v3238
          %v3253 = vadd.f32 %v3222, %v3238
          %v3254 = vadd.f32 %v3227, %v3238
          %v3255 = vadd.f32 %v3230, %v3238
          %v3256 = vmax.f32 %v3240, 0.0
          %v3257 = vmax.f32 %v3241, 0.0
          %v3258 = vmax.f32 %v3242, 0.0
          %v3259 = vmax.f32 %v3243, 0.0
          %v3260 = vmax.f32 %v3244, 0.0
          %v3261 = vmax.f32 %v3245, 0.0
          %v3262 = vmax.f32 %v3246, 0.0
          %v3263 = vmax.f32 %v3247, 0.0
          %v3264 = vmax.f32 %v3248, 0.0
          %v3265 = vmax.f32 %v3249, 0.0
          %v3266 = vmax.f32 %v3250, 0.0
          %v3267 = vmax.f32 %v3251, 0.0
          %v3268 = vmax.f32 %v3252, 0.0
          %v3269 = vmax.f32 %v3253, 0.0
          %v3270 = vmax.f32 %v3254, 0.0
          %v3271 = vmax.f32 %v3255, 0.0
          %v3272 = vld [vmem:[#allocation7] sm:$0xf]
          %v3273 = vpack.c.bf16 %v3257, %v3256
          %v3274 = vpack.c.bf16 %v3259, %v3258
          %v3275 = vpack.c.bf16 %v3261, %v3260
          %v3276 = vpack.c.bf16 %v3263, %v3262
          %v3277 = vpack.c.bf16 %v3265, %v3264
          %v3278 = vpack.c.bf16 %v3267, %v3266
          %v3279 = vpack.c.bf16 %v3269, %v3268
          %v3280 = vpack.c.bf16 %v3271, %v3270
          %3281 = vmatprep.subr.bf16.mxu0 0
          %3282 = vmatpush1.bf16.msra.mxu0 %v3273
          %3283 = vmatprep.subr.bf16.mxu0 0
          %3284 = vmatpush1.bf16.msra.mxu0 %v3274
          %3285 = vmatprep.subr.bf16.mxu0 0
          %3286 = vmatpush1.bf16.msra.mxu0 %v3275
          %3287 = vmatprep.subr.bf16.mxu0 0
          %3288 = vmatpush1.bf16.msra.mxu0 %v3276
          %3289 = vmatprep.subr.bf16.mxu0 0
          %3290 = vmatpush1.bf16.msra.mxu0 %v3277
          %3291 = vmatprep.subr.bf16.mxu0 0
          %3292 = vmatpush1.bf16.msra.mxu0 %v3278
          %3293 = vmatprep.subr.bf16.mxu0 0
          %3294 = vmatpush1.bf16.msra.mxu0 %v3279
          %3295 = vmatprep.subr.bf16.mxu0 0
          %3296 = vmatpush1.bf16.msra.mxu0 %v3280
          %3297 = vmatprep.subr.bf16.mxu0 0
          %3298 = vmatpush1.bf16.msra.mxu0 0
          %3299 = vmatprep.subr.bf16.mxu0 0
          %3300 = vmatpush1.bf16.msra.mxu0 0
          %3301 = vmatprep.subr.bf16.mxu0 0
          %3302 = vmatpush1.bf16.msra.mxu0 0
          %3303 = vmatprep.subr.bf16.mxu0 0
          %3304 = vmatpush1.bf16.msra.mxu0 0
          %3305 = vmatprep.subr.bf16.mxu0 0
          %3306 = vmatpush1.bf16.msra.mxu0 0
          %3307 = vmatprep.subr.bf16.mxu0 0
          %3308 = vmatpush1.bf16.msra.mxu0 0
          %3309 = vmatprep.subr.bf16.mxu0 0
          %3310 = vmatpush1.bf16.msra.mxu0 0
          %3311 = vmatprep.subr.bf16.mxu0 0
          %3312 = vmatpush1.bf16.msra.mxu0 0
          %3313 = vmatprep.mubr.bf16.mxu0 0
          %3314 = vmatmul.mubr.bf16.gmra.mrb[0].mxu0 %v3272
          %v3315 = vpop.f32.mrb[0].mxu0
          %v3316 = vadd.f32 0.0, %v3315
          %v3317 = vpop.f32.mrb[0].mxu0
          %v3318 = vpop.f32.mrb[0].mxu0
          %v3319 = vpop.f32.mrb[0].mxu0
          %3320 = vdwg.mxu0
          %v3321 = vpack.c.bf16 %v3316, %v3316
          %v3322 = vld [vmem:[#allocation13] sm:$0xf]
          %v3323 = vld [vmem:[#allocation13 + $0x4] sm:$0xf]
          %v3324 = vld [vmem:[#allocation13 + $0x8] sm:$0xf]
          %v3325 = vld [vmem:[#allocation13 + $0xc] sm:$0xf]
          %v3326 = vld [vmem:[#allocation13 + $0x10] sm:$0xf]
          %v3327 = vld [vmem:[#allocation13 + $0x14] sm:$0xf]
          %v3328 = vld [vmem:[#allocation13 + $0x18] sm:$0xf]
          %v3329 = vld [vmem:[#allocation13 + $0x1c] sm:$0xf]
          %v3330 = vld [vmem:[#allocation13 + $0x20] sm:$0xf]
          %v3331 = vld [vmem:[#allocation13 + $0x24] sm:$0xf]
          %v3332 = vld [vmem:[#allocation13 + $0x28] sm:$0xf]
          %v3333 = vld [vmem:[#allocation13 + $0x2c] sm:$0xf]
          %v3334 = vld [vmem:[#allocation13 + $0x30] sm:$0xf]
          %v3335 = vld [vmem:[#allocation13 + $0x34] sm:$0xf]
          %v3336 = vld [vmem:[#allocation13 + $0x38] sm:$0xf]
          %v3337 = vld [vmem:[#allocation13 + $0x3c] sm:$0xf]
          %v3338 = vld [vmem:[%s13] sm:$0x1]
          %v3340 = vlaneseq
          %v3341 = vshrl.u32 %v3340, 7
          %v3342 = vsub.s32 0, %v3341
          %v3343 = vrot.slane %v3338, %v3342
          %v3361 = vunpack.c.l.b16 %v3322
          %v3362 = vunpack.c.l.b16 %v3323
          %v3363 = vunpack.c.l.b16 %v3324
          %v3364 = vunpack.c.l.b16 %v3325
          %v3365 = vunpack.c.l.b16 %v3326
          %v3366 = vunpack.c.l.b16 %v3327
          %v3367 = vunpack.c.l.b16 %v3328
          %v3368 = vunpack.c.l.b16 %v3329
          %v3369 = vunpack.c.l.b16 %v3330
          %v3370 = vunpack.c.l.b16 %v3331
          %v3371 = vunpack.c.l.b16 %v3332
          %v3372 = vunpack.c.l.b16 %v3333
          %v3373 = vunpack.c.l.b16 %v3334
          %v3374 = vunpack.c.l.b16 %v3335
          %v3375 = vunpack.c.l.b16 %v3336
          %v3376 = vunpack.c.l.b16 %v3337
          %v3377 = vpack.c.b16 %v3362, %v3361
          %v3378 = vpack.c.b16 %v3364, %v3363
          %v3379 = vpack.c.b16 %v3366, %v3365
          %v3380 = vpack.c.b16 %v3368, %v3367
          %v3381 = vpack.c.b16 %v3370, %v3369
          %v3382 = vpack.c.b16 %v3372, %v3371
          %v3383 = vpack.c.b16 %v3374, %v3373
          %v3384 = vpack.c.b16 %v3376, %v3375
          %3393 = vmatprep.subr.bf16.mxu0 0
          %3394 = vmatpush1.bf16.msra.mxu0 %v3377
          %3395 = vmatprep.subr.bf16.mxu0 0
          %3396 = vmatpush1.bf16.msra.mxu0 %v3378
          %3397 = vmatprep.subr.bf16.mxu0 0
          %3398 = vmatpush1.bf16.msra.mxu0 %v3379
          %3399 = vmatprep.subr.bf16.mxu0 0
          %3400 = vmatpush1.bf16.msra.mxu0 %v3380
          %3401 = vmatprep.subr.bf16.mxu0 0
          %3402 = vmatpush1.bf16.msra.mxu0 %v3381
          %3403 = vmatprep.subr.bf16.mxu0 0
          %3404 = vmatpush1.bf16.msra.mxu0 %v3382
          %3405 = vmatprep.subr.bf16.mxu0 0
          %3406 = vmatpush1.bf16.msra.mxu0 %v3383
          %3407 = vmatprep.subr.bf16.mxu0 0
          %3408 = vmatpush1.bf16.msra.mxu0 %v3384
          %3409 = vmatprep.subr.bf16.mxu0 0
          %3410 = vmatpush1.bf16.msra.mxu0 0
          %3411 = vmatprep.subr.bf16.mxu0 0
          %3412 = vmatpush1.bf16.msra.mxu0 0
          %3413 = vmatprep.subr.bf16.mxu0 0
          %3414 = vmatpush1.bf16.msra.mxu0 0
          %3415 = vmatprep.subr.bf16.mxu0 0
          %3416 = vmatpush1.bf16.msra.mxu0 0
          %3417 = vmatprep.subr.bf16.mxu0 0
          %3418 = vmatpush1.bf16.msra.mxu0 0
          %3419 = vmatprep.subr.bf16.mxu0 0
          %3420 = vmatpush1.bf16.msra.mxu0 0
          %3421 = vmatprep.subr.bf16.mxu0 0
          %3422 = vmatpush1.bf16.msra.mxu0 0
          %3423 = vmatprep.subr.bf16.mxu0 0
          %3424 = vmatpush1.bf16.msra.mxu0 0
          %3425 = vmatprep.mubr.bf16.mxu0 0
          %3426 = vmatmul.mubr.bf16.gmra.mrb[0].mxu0 %v3321
          %v3427 = vpop.f32.mrb[0].mxu0
          %v3428 = vadd.f32 %v3343, %v3427
          %v3429 = vpop.f32.mrb[0].mxu0
          %v3430 = vpop.f32.mrb[0].mxu0
          %v3431 = vpop.f32.mrb[0].mxu0
          %3432 = vdwg.mxu0
          %v3433 = vmax.f32 %v3428, 0.0
          %3434 = vst [vmem:[#allocation17] sm:$0xff] %v3433
        $region148: #{tpu_custom_call.1} parent=115 // pred_fallthru
          _
        // Predicated region
        $region149: #{tpu_custom_call.1} parent=115 // pred_check
          %p3435 = pneg %p608
        $region150: #{tpu_custom_call.1} parent=115 // pred_check_branch
          %3437 = sbr.rel (%p3435) target = $region152
        $region151: #{tpu_custom_call.1} parent=115 // pred_region
          %s3439 = ssub.s32 128, 128
          %3440 = vsyncadd [#allocation10], %s3439
          %s3442 = sshll.u32 [#allocation17], 4
          %s3443 = int_to_ptr.vmem [resolvable:$true] %s3442
          %3445 = dma.vmem_to_hbm [thread:$0]  %s3443, 128, %s24, [#allocation10]
        $region152: #{tpu_custom_call.1} parent=115 // pred_fallthru
          _
        // Predicated region
        $region153: #{tpu_custom_call.1} parent=115 // pred_check
          %p3446 = pneg %p608
        $region154: #{tpu_custom_call.1} parent=115 // pred_check_branch
          %3448 = sbr.rel (%p3446) target = $region156
        $region155: #{tpu_custom_call.1} parent=115 // pred_region
          %3449 = dma.done [#allocation10], 128
        $region156: #{tpu_custom_call.1} parent=115 // pred_fallthru
          _
      $region116: #{tpu_custom_call.1} parent=5 // pred_fallthru
        _
      %p3450 = scmp.le.s32.totalorder 2, %s36
      // Predicated region
      $region157: #{tpu_custom_call.1} parent=5 // pred_check
        %p3451 = pneg %p3450
      $region158: #{tpu_custom_call.1} parent=5 // pred_check_branch
        %3453 = sbr.rel (%p3451) target = $region160
      $region159: #{tpu_custom_call.1} parent=5 // pred_region
        %s3454 = ssub.s32 %s36, 2
      $region160: #{tpu_custom_call.1} parent=5 // pred_fallthru
        _
    $region6: #{tpu_custom_call.1} parent=1 // loop_footer
      %s40 = sadd.s32 1, %s36
    $region7: #{tpu_custom_call.1} parent=1 // loop_footer_branch
      %35 = sbr.rel target = $region3
    $region8: #{tpu_custom_call.1} parent=1 // loop_exit
      _
    %3455 = vsyncpa [#allocation9], 1
    %s3456 = scalar_lea.sflag [#allocation9], 1
    %3457 = vsyncpa %s3456, 1
    %3458 = vsyncpa [#allocation12], 1
    %3459 = vsyncpa [#allocation15], 1
    %s3460 = scalar_lea.sflag [#allocation15], 1
    %3461 = vsyncpa %s3460, 1
    %3462 = vsyncpa [#allocation10], 1
    %s3463 = scalar_lea.sflag [#allocation10], 1
    %3464 = vsyncpa %s3463, 1

</llo_original>
